<compile_context>
chip_gen: v7x
topology: tpu7x:2x2x1
jax: 0.10.0
libtpu: 0.0.40
codegen_flags: <defaults>
</compile_context>

<pallas_src>
import functools

import jax
import jax.numpy as jnp
import numpy as np
from jax.experimental import pallas as pl
from jax.experimental.pallas import tpu as pltpu


@functools.lru_cache(maxsize=1)
def _vmem_limit_bytes():
    # ~3/4 of physical VMEM, capped at 100 MiB; safe fallback 48 MiB (v7x-safe).
    try:
        info = pltpu.get_tpu_info()
        cap = getattr(info, "vmem_capacity_bytes", None)
        if cap:
            return int(min(cap * 3 // 4, 100 * 1024 * 1024))
    except Exception:
        pass
    return 48 * 1024 * 1024


@functools.lru_cache(maxsize=1)
def _prefer_wide_tiles():
    # Single-TC chips (v5e/v6e): prefer 256-wide Cout tiles (fills the MXU N
    # dim). v7x has 2 TensorCores per chip -> prefer 128 so the "parallel"
    # Cout axis has >=2 blocks to shard.
    try:
        kind = jax.devices()[0].device_kind.lower()
        return not ("v7" in kind or "7x" in kind)
    except Exception:
        return False


# --------------------------- Kernel 1: atrous conv + stats ---------------------------
def _conv_stats_kernel(x_ref, w_ref, out_ref, stats_ref, *scratch, KH, KW, DIL,
                       PAD, H, W, Ho, Wo, CH):
    # Grid: (co, n, ci), ci (Cin-chunk reduction) innermost.
    # x_ref    : (1, H, W, cin_t)      unpadded input, one batch elem, one Cin chunk
    # w_ref    : (KH, KW, cin_t, tc)   (Cin chunk, Cout tile) of the weights
    # out_ref  : (1, Ho, Wo, tc)
    # stats_ref: (2, tc)               row 0: sum over (N,Ho,Wo); row 1: sum of squares
    # scratch  : [xp_ref (Hp, Wp, cin_t)]  (only if PAD > 0),  acc_ref (Ho*Wo, tc) f32
    n = pl.program_id(1)
    ci = pl.program_id(2)
    n_ci = pl.num_programs(2)

    if PAD > 0:
        xp_ref, acc_ref = scratch
    else:
        (acc_ref,) = scratch

    cin_t = x_ref.shape[-1]
    tc = out_ref.shape[-1]

    @pl.when((n == 0) & (ci == 0))
    def _():
        stats_ref[...] = jnp.zeros_like(stats_ref)

    if PAD > 0:
        # Zero the padded slab only on the first (n, ci) step of each Cout tile;
        # the interior is overwritten every step and the border stays zero.
        @pl.when((n == 0) & (ci == 0))
        def _():
            xp_ref[...] = jnp.zeros_like(xp_ref)

        xp_ref[PAD:PAD + H, PAD:PAD + W, :] = x_ref[0]

        def patch(kh, kw, r0, rows):
            return xp_ref[kh * DIL + r0:kh * DIL + r0 + rows,
                          kw * DIL:kw * DIL + Wo, :]
    else:
        # No padding (e.g. the 1x1 ASPP branch): no slab, no copy.
        x0 = x_ref[0]  # (H, W, cin_t)

        def patch(kh, kw, r0, rows):
            return x0[kh * DIL + r0:kh * DIL + r0 + rows,
                      kw * DIL:kw * DIL + Wo, :]

    # Dilated conv: per Ho-row chunk keep a register-resident f32 accumulator
    # across the KH*KW taps and store it once (no per-tap VMEM RMW).
    # TODO(synk): verify via pl.lower_as_mlir whether the kw*DIL window slice +
    # reshape triggers a relayout copy (offsets are not 8-multiples); if so keep
    # the accumulator (rows, Wo, tc) and contract with dot_general.
    for r0 in range(0, Ho, CH):
        rows = min(CH, Ho - r0)
        acc = jnp.zeros((rows * Wo, tc), jnp.float32)
        for kh in range(KH):
            for kw in range(KW):
                p = patch(kh, kw, r0, rows).reshape(rows * Wo, cin_t)
                acc = acc + jnp.dot(p, w_ref[kh, kw],
                                    preferred_element_type=jnp.float32)
        lo, hi = r0 * Wo, r0 * Wo + rows * Wo

        @pl.when(ci == 0)
        def _(acc=acc, lo=lo, hi=hi):
            acc_ref[lo:hi, :] = acc

        @pl.when(ci != 0)
        def _(acc=acc, lo=lo, hi=hi):
            acc_ref[lo:hi, :] += acc

    # Finalize this (co, n) tile and its per-channel stats on the last Cin chunk.
    @pl.when(ci == n_ci - 1)
    def _():
        accf = acc_ref[...]
        out_ref[...] = accf.reshape(1, Ho, Wo, tc).astype(out_ref.dtype)
        stats_ref[0:1, :] += jnp.sum(accf, axis=0, keepdims=True)
        stats_ref[1:2, :] += jnp.sum(accf * accf, axis=0, keepdims=True)


def atrous_conv_with_stats(x_nhwc, w_hwio, *, padding, dilation,
                           out_dtype=jnp.bfloat16):
    N, H, W, Cin = x_nhwc.shape
    KH, KW, _, Cout = w_hwio.shape
    P, D = padding, dilation
    Hp, Wp = H + 2 * P, W + 2 * P
    Ho = H + 2 * P - D * (KH - 1)
    Wo = W + 2 * P - D * (KW - 1)

    # Lane-dense Cout tile (see _prefer_wide_tiles for the per-gen choice).
    if Cout % 256 == 0 and _prefer_wide_tiles():
        tc = 256
    elif Cout % 128 == 0:
        tc = 128
    else:
        # TODO(synk): pad tiny Cout to a lane-dense 128 (or fuse the ASPP
        # branches' weights along Cout) if small channel counts matter.
        tc = Cout
    n_co = Cout // tc

    # Cin (contraction) tile keeps weight block + padded slab a few MiB each.
    if Cin % 256 == 0:
        cin_t = 256
    elif Cin % 128 == 0:
        cin_t = 128
    else:
        cin_t = Cin
    n_ci = Cin // cin_t

    # Ho rows per register-resident accumulator chunk (~256 output rows).
    CH = max(1, 256 // max(1, Wo))

    kernel = functools.partial(_conv_stats_kernel, KH=KH, KW=KW, DIL=D, PAD=P,
                               H=H, W=W, Ho=Ho, Wo=Wo, CH=CH)

    scratch = [pltpu.VMEM((Ho * Wo, tc), jnp.float32)]      # f32 accumulator
    if P > 0:
        scratch = [pltpu.VMEM((Hp, Wp, cin_t), x_nhwc.dtype)] + scratch

    # TODO(synk): with n_co > 1 the activations are re-streamed n_co times (and
    # the weights N times); for weight-heavy shapes a (n, ci, co) ordering with a
    # (Ho*Wo, Cout) accumulator would trade that the other way.
    # TODO(synk): very large spatial extents would additionally need Ho-row
    # tiling (halo'd slab); not required for ASPP-sized feature maps.
    conv_out, stats = pl.pallas_call(
        kernel,
        out_shape=(
            jax.ShapeDtypeStruct((N, Ho, Wo, Cout), out_dtype),
            jax.ShapeDtypeStruct((2, Cout), jnp.float32),
        ),
        grid_spec=pltpu.PrefetchScalarGridSpec(
            num_scalar_prefetch=0,
            grid=(n_co, N, n_ci),   # Cin reduction axis innermost
            in_specs=[
                pl.BlockSpec((1, H, W, cin_t), lambda co, n, ci: (n, 0, 0, ci)),
                pl.BlockSpec((KH, KW, cin_t, tc),
                             lambda co, n, ci: (0, 0, ci, co)),
            ],
            out_specs=[
                pl.BlockSpec((1, Ho, Wo, tc), lambda co, n, ci: (n, 0, 0, co)),
                pl.BlockSpec((2, tc), lambda co, n, ci: (0, co)),
            ],
            scratch_shapes=scratch,
        ),
        compiler_params=pltpu.CompilerParams(
            dimension_semantics=("parallel", "arbitrary", "arbitrary"),
            vmem_limit_bytes=_vmem_limit_bytes()),
    )(x_nhwc, w_hwio)
    return conv_out, stats


# --------------------------- Kernel 2: BN affine + ReLU ---------------------------
def _bn_relu_kernel(x_ref, scale_ref, bias_ref, o_ref):
    x = x_ref[...].astype(jnp.float32)        # (tR, C)
    y = x * scale_ref[...] + bias_ref[...]    # broadcast (1, C)
    o_ref[...] = jnp.maximum(y, 0.0).astype(o_ref.dtype)


def _pick_row_tile(r, c, itemsize, max_bytes=4 * 1024 * 1024):
    # Cap the row tile by bytes (so one block can never blow VMEM), keep it a
    # sublane multiple of 8, and let pl.cdiv handle a ragged tail.
    if r < 8:
        return r
    max_rows = max(8, (max_bytes // max(1, c * itemsize)) // 8 * 8)
    tr = min(r, max_rows)
    return tr - (tr % 8)


def bn_relu(conv_flat, scale, bias, out_dtype=jnp.float32):
    R, C = conv_flat.shape
    tR = _pick_row_tile(R, C, jnp.dtype(conv_flat.dtype).itemsize)
    return pl.pallas_call(
        _bn_relu_kernel,
        out_shape=jax.ShapeDtypeStruct((R, C), out_dtype),
        grid_spec=pltpu.PrefetchScalarGridSpec(
            num_scalar_prefetch=0,
            grid=(pl.cdiv(R, tR),),
            in_specs=[
                pl.BlockSpec((tR, C), lambda r: (r, 0)),
                pl.BlockSpec((1, C), lambda r: (0, 0)),
                pl.BlockSpec((1, C), lambda r: (0, 0)),
            ],
            out_specs=pl.BlockSpec((tR, C), lambda r: (r, 0)),
        ),
        compiler_params=pltpu.CompilerParams(
            dimension_semantics=("parallel",),
            vmem_limit_bytes=_vmem_limit_bytes()),
    )(conv_flat, scale.reshape(1, C), bias.reshape(1, C))


# --------------------------------- Module wrapper ---------------------------------
def aspp_module_forward(x_nchw, w_oihw, gamma, beta, *, padding, dilation,
                        eps=1e-5, compute_dtype=jnp.bfloat16,
                        interm_dtype=jnp.bfloat16, out_dtype=jnp.float32):
    # NCHW -> NHWC, OIHW -> HWIO.
    # TODO(synk): keep the surrounding model NHWC to drop these two full-tensor
    # HBM transpose passes; kept here to match the PyTorch NCHW contract.
    x_nhwc = jnp.transpose(x_nchw, (0, 2, 3, 1)).astype(compute_dtype)
    w_hwio = jnp.transpose(w_oihw, (2, 3, 1, 0)).astype(compute_dtype)

    conv_out, stats = atrous_conv_with_stats(
        x_nhwc, w_hwio, padding=padding, dilation=dilation,
        out_dtype=interm_dtype)

    # Fold training-mode BatchNorm2d (biased batch statistics) into scale/bias.
    # Stats come from the f32 accumulator; with interm_dtype=bf16 they are
    # applied to the bf16-rounded conv_out (documented approximation).
    # TODO(synk): E[x^2]-mean^2 in f32 can lose precision for very large
    # reductions; a Welford/two-pass variant would be more robust.
    N, Ho, Wo, Cout = conv_out.shape
    count = N * Ho * Wo
    mean = stats[0] / count
    var = stats[1] / count - mean * mean
    scale = gamma / jnp.sqrt(var + eps)
    bias = beta - mean * scale
    # TODO(synk): running_mean/running_var updates of nn.BatchNorm2d are a
    # training side effect and do not affect the forward output; not modeled.
    # TODO(synk): groups > 1 (grouped conv) not implemented; module default is 1.

    y_flat = bn_relu(conv_out.reshape(N * Ho * Wo, Cout), scale, bias,
                     out_dtype=out_dtype)
    y_nhwc = y_flat.reshape(N, Ho, Wo, Cout)
    return jnp.transpose(y_nhwc, (0, 3, 1, 2))  # back to NCHW


# ------------------------------ Reference (plain JAX) ------------------------------
def _ref_forward(x_nchw, w_oihw, gamma, beta, *, padding, dilation, eps=1e-5):
    y = jax.lax.conv_general_dilated(
        x_nchw, w_oihw, window_strides=(1, 1),
        padding=[(padding, padding), (padding, padding)],
        rhs_dilation=(dilation, dilation),
        dimension_numbers=("NCHW", "OIHW", "NCHW"))
    mean = y.mean(axis=(0, 2, 3), keepdims=True)
    var = y.var(axis=(0, 2, 3), keepdims=True)  # biased, matches BN training mode
    yn = (y - mean) / jnp.sqrt(var + eps)
    yn = yn * gamma.reshape(1, -1, 1, 1) + beta.reshape(1, -1, 1, 1)
    return jnp.maximum(yn, 0.0)


if __name__ == "__main__":
    key = jax.random.PRNGKey(0)

    configs = [
        # (Cout, K, dilation, padding) — 3x3 atrous branch and 1x1 branch of ASPP
        dict(Cout=8, K=3, dilation=2, padding=2),
        dict(Cout=8, K=1, dilation=1, padding=0),
    ]
    N, Cin, H, W = 2, 4, 16, 16

    for cfg in configs:
        Cout, K, dilation, padding = cfg["Cout"], cfg["K"], cfg["dilation"], cfg["padding"]
        key, kx, kw = jax.random.split(key, 3)
        x = jax.random.normal(kx, (N, Cin, H, W), dtype=jnp.float32)

        # kaiming_normal_ (fan_in mode, gain=sqrt(2)) for the conv weight, OIHW
        fan_in = Cin * K * K
        std = float(np.sqrt(2.0 / fan_in))
        w = jax.random.normal(kw, (Cout, Cin, K, K), dtype=jnp.float32) * std

        # BatchNorm2d init: weight=1, bias=0
        gamma = jnp.ones((Cout,), jnp.float32)
        beta = jnp.zeros((Cout,), jnp.float32)

        ref = _ref_forward(x, w, gamma, beta, padding=padding, dilation=dilation)

        # f32 path (strict check)
        out = aspp_module_forward(x, w, gamma, beta,
                                  padding=padding, dilation=dilation,
                                  compute_dtype=jnp.float32,
                                  interm_dtype=jnp.float32)
        out = jax.block_until_ready(out)
        np.testing.assert_allclose(np.asarray(out), np.asarray(ref),
                                   rtol=1e-3, atol=1e-3)

        # Default (perf) path: bf16 MXU inputs + bf16 intermediate, looser tolerance
        out_bf16 = aspp_module_forward(x, w, gamma, beta,
                                       padding=padding, dilation=dilation)
        out_bf16 = jax.block_until_ready(out_bf16)
        np.testing.assert_allclose(np.asarray(out_bf16), np.asarray(ref),
                                   rtol=6e-2, atol=8e-2)

    print("KERNEL_OK")
</pallas_src>

<mosaic_0001>
module attributes {stable_mosaic.version = 11 : i64} {
  func.func @_conv_stats_kernel(%arg0: i32, %arg1: i32, %arg2: i32, %arg3: memref<1x16x16x4xf32, #tpu.memory_space<vmem>>, %arg4: memref<3x3x4x8xf32, #tpu.memory_space<vmem>>, %arg5: memref<1x16x16x8xf32, #tpu.memory_space<vmem>>, %arg6: memref<2x8xf32, #tpu.memory_space<vmem>>, %arg7: memref<20x20x4xf32, #tpu.memory_space<vmem>>, %arg8: memref<256x8xf32, #tpu.memory_space<vmem>>) attributes {dimension_semantics = [#tpu.dimension_semantics<parallel>, #tpu.dimension_semantics<arbitrary>, #tpu.dimension_semantics<arbitrary>], iteration_bounds = array<i64: 1, 2, 1>, scalar_prefetch = 0 : i64, scratch_operands = 2 : i64, tpu.core_type = #tpu.core_type<tc>, window_params = [{transform_indices = @transform_0, window_bounds = array<i64: 1, 16, 16, 4>}, {transform_indices = @transform_1, window_bounds = array<i64: 3, 3, 4, 8>}, {transform_indices = @transform_2, window_bounds = array<i64: 1, 16, 16, 8>}, {transform_indices = @transform_3, window_bounds = array<i64: 2, 8>}]} {
    %c0_i32 = arith.constant 0 : i32
    %0 = arith.cmpi eq, %arg1, %c0_i32 : i32
    %c0_i32_0 = arith.constant 0 : i32
    %1 = arith.cmpi eq, %arg2, %c0_i32_0 : i32
    %2 = arith.andi %0, %1 : i1
    %3 = arith.extui %2 : i1 to i32
    %c0_i32_1 = arith.constant 0 : i32
    %4 = arith.cmpi ne, %3, %c0_i32_1 : i32
    scf.if %4 {
      %cst_86 = arith.constant 0.000000e+00 : f32
      %77 = vector.broadcast %cst_86 : f32 to vector<2x8xf32>
      %c0_87 = arith.constant 0 : index
      %c0_88 = arith.constant 0 : index
      %78 = vector.load %arg6[%c0_87, %c0_88] : memref<2x8xf32, #tpu.memory_space<vmem>>, vector<2x8xf32>
      tpu.vector_store %arg6[%c0_87, %c0_88], %77 {strides = array<i32>} : memref<2x8xf32, #tpu.memory_space<vmem>>, vector<2x8xf32>,
    } else {
    }
    %c0_i32_2 = arith.constant 0 : i32
    %5 = arith.cmpi eq, %arg1, %c0_i32_2 : i32
    %c0_i32_3 = arith.constant 0 : i32
    %6 = arith.cmpi eq, %arg2, %c0_i32_3 : i32
    %7 = arith.andi %5, %6 : i1
    %8 = arith.extui %7 : i1 to i32
    %c0_i32_4 = arith.constant 0 : i32
    %9 = arith.cmpi ne, %8, %c0_i32_4 : i32
    scf.if %9 {
      %cst_86 = arith.constant 0.000000e+00 : f32
      %77 = vector.broadcast %cst_86 : f32 to vector<20x20x4xf32>
      %c0_87 = arith.constant 0 : index
      %c0_88 = arith.constant 0 : index
      %c0_89 = arith.constant 0 : index
      %78 = vector.load %arg7[%c0_87, %c0_88, %c0_89] : memref<20x20x4xf32, #tpu.memory_space<vmem>>, vector<20x20x4xf32>
      tpu.vector_store %arg7[%c0_87, %c0_88, %c0_89], %77 {strides = array<i32>} : memref<20x20x4xf32, #tpu.memory_space<vmem>>, vector<20x20x4xf32>,
    } else {
    }
    %c0 = arith.constant 0 : index
    %c0_5 = arith.constant 0 : index
    %c0_6 = arith.constant 0 : index
    %c0_7 = arith.constant 0 : index
    %10 = vector.load %arg3[%c0, %c0_5, %c0_6, %c0_7] : memref<1x16x16x4xf32, #tpu.memory_space<vmem>>, vector<1x16x16x4xf32>
    %11 = vector.shape_cast %10 : vector<1x16x16x4xf32> to vector<16x16x4xf32>
    %c2 = arith.constant 2 : index
    %c2_8 = arith.constant 2 : index
    %c0_9 = arith.constant 0 : index
    %12 = vector.load %arg7[%c2, %c2_8, %c0_9] : memref<20x20x4xf32, #tpu.memory_space<vmem>>, vector<16x16x4xf32>
    tpu.vector_store %arg7[%c2, %c2_8, %c0_9], %11 {strides = array<i32>} : memref<20x20x4xf32, #tpu.memory_space<vmem>>, vector<16x16x4xf32>,
    %cst = arith.constant 0.000000e+00 : f32
    %13 = vector.broadcast %cst : f32 to vector<256x8xf32>
    %c0_10 = arith.constant 0 : index
    %c0_11 = arith.constant 0 : index
    %c0_12 = arith.constant 0 : index
    %14 = vector.load %arg7[%c0_10, %c0_11, %c0_12] : memref<20x20x4xf32, #tpu.memory_space<vmem>>, vector<16x16x4xf32>
    %15 = vector.shape_cast %14 : vector<16x16x4xf32> to vector<256x4xf32>
    %c0_13 = arith.constant 0 : index
    %c0_14 = arith.constant 0 : index
    %c0_15 = arith.constant 0 : index
    %c0_16 = arith.constant 0 : index
    %16 = vector.load %arg4[%c0_13, %c0_14, %c0_15, %c0_16] : memref<3x3x4x8xf32, #tpu.memory_space<vmem>>, vector<1x1x4x8xf32>
    %17 = vector.shape_cast %16 : vector<1x1x4x8xf32> to vector<4x8xf32>
    %cst_17 = arith.constant dense<0.000000e+00> : vector<256x8xf32>
    %18 = tpu.matmul %15, %17, %cst_17 {dimension_numbers = #tpu.dot_dimension_numbers<[1], [0], [0], [1], [0, 0, 1, 1], [], []>} : vector<256x4xf32>, vector<4x8xf32>, vector<256x8xf32> -> vector<256x8xf32>
    %19 = arith.addf %13, %18 : vector<256x8xf32>
    %c0_18 = arith.constant 0 : index
    %c2_19 = arith.constant 2 : index
    %c0_20 = arith.constant 0 : index
    %20 = vector.load %arg7[%c0_18, %c2_19, %c0_20] : memref<20x20x4xf32, #tpu.memory_space<vmem>>, vector<16x16x4xf32>
    %21 = vector.shape_cast %20 : vector<16x16x4xf32> to vector<256x4xf32>
    %c0_21 = arith.constant 0 : index
    %c1 = arith.constant 1 : index
    %c0_22 = arith.constant 0 : index
    %c0_23 = arith.constant 0 : index
    %22 = vector.load %arg4[%c0_21, %c1, %c0_22, %c0_23] : memref<3x3x4x8xf32, #tpu.memory_space<vmem>>, vector<1x1x4x8xf32>
    %23 = vector.shape_cast %22 : vector<1x1x4x8xf32> to vector<4x8xf32>
    %cst_24 = arith.constant dense<0.000000e+00> : vector<256x8xf32>
    %24 = tpu.matmul %21, %23, %cst_24 {dimension_numbers = #tpu.dot_dimension_numbers<[1], [0], [0], [1], [0, 0, 1, 1], [], []>} : vector<256x4xf32>, vector<4x8xf32>, vector<256x8xf32> -> vector<256x8xf32>
    %25 = arith.addf %19, %24 : vector<256x8xf32>
    %c0_25 = arith.constant 0 : index
    %c4 = arith.constant 4 : index
    %c0_26 = arith.constant 0 : index
    %26 = vector.load %arg7[%c0_25, %c4, %c0_26] : memref<20x20x4xf32, #tpu.memory_space<vmem>>, vector<16x16x4xf32>
    %27 = vector.shape_cast %26 : vector<16x16x4xf32> to vector<256x4xf32>
    %c0_27 = arith.constant 0 : index
    %c2_28 = arith.constant 2 : index
    %c0_29 = arith.constant 0 : index
    %c0_30 = arith.constant 0 : index
    %28 = vector.load %arg4[%c0_27, %c2_28, %c0_29, %c0_30] : memref<3x3x4x8xf32, #tpu.memory_space<vmem>>, vector<1x1x4x8xf32>
    %29 = vector.shape_cast %28 : vector<1x1x4x8xf32> to vector<4x8xf32>
    %cst_31 = arith.constant dense<0.000000e+00> : vector<256x8xf32>
    %30 = tpu.matmul %27, %29, %cst_31 {dimension_numbers = #tpu.dot_dimension_numbers<[1], [0], [0], [1], [0, 0, 1, 1], [], []>} : vector<256x4xf32>, vector<4x8xf32>, vector<256x8xf32> -> vector<256x8xf32>
    %31 = arith.addf %25, %30 : vector<256x8xf32>
    %c2_32 = arith.constant 2 : index
    %c0_33 = arith.constant 0 : index
    %c0_34 = arith.constant 0 : index
    %32 = vector.load %arg7[%c2_32, %c0_33, %c0_34] : memref<20x20x4xf32, #tpu.memory_space<vmem>>, vector<16x16x4xf32>
    %33 = vector.shape_cast %32 : vector<16x16x4xf32> to vector<256x4xf32>
    %c1_35 = arith.constant 1 : index
    %c0_36 = arith.constant 0 : index
    %c0_37 = arith.constant 0 : index
    %c0_38 = arith.constant 0 : index
    %34 = vector.load %arg4[%c1_35, %c0_36, %c0_37, %c0_38] : memref<3x3x4x8xf32, #tpu.memory_space<vmem>>, vector<1x1x4x8xf32>
    %35 = vector.shape_cast %34 : vector<1x1x4x8xf32> to vector<4x8xf32>
    %cst_39 = arith.constant dense<0.000000e+00> : vector<256x8xf32>
    %36 = tpu.matmul %33, %35, %cst_39 {dimension_numbers = #tpu.dot_dimension_numbers<[1], [0], [0], [1], [0, 0, 1, 1], [], []>} : vector<256x4xf32>, vector<4x8xf32>, vector<256x8xf32> -> vector<256x8xf32>
    %37 = arith.addf %31, %36 : vector<256x8xf32>
    %c2_40 = arith.constant 2 : index
    %c2_41 = arith.constant 2 : index
    %c0_42 = arith.constant 0 : index
    %38 = vector.load %arg7[%c2_40, %c2_41, %c0_42] : memref<20x20x4xf32, #tpu.memory_space<vmem>>, vector<16x16x4xf32>
    %39 = vector.shape_cast %38 : vector<16x16x4xf32> to vector<256x4xf32>
    %c1_43 = arith.constant 1 : index
    %c1_44 = arith.constant 1 : index
    %c0_45 = arith.constant 0 : index
    %c0_46 = arith.constant 0 : index
    %40 = vector.load %arg4[%c1_43, %c1_44, %c0_45, %c0_46] : memref<3x3x4x8xf32, #tpu.memory_space<vmem>>, vector<1x1x4x8xf32>
    %41 = vector.shape_cast %40 : vector<1x1x4x8xf32> to vector<4x8xf32>
    %cst_47 = arith.constant dense<0.000000e+00> : vector<256x8xf32>
    %42 = tpu.matmul %39, %41, %cst_47 {dimension_numbers = #tpu.dot_dimension_numbers<[1], [0], [0], [1], [0, 0, 1, 1], [], []>} : vector<256x4xf32>, vector<4x8xf32>, vector<256x8xf32> -> vector<256x8xf32>
    %43 = arith.addf %37, %42 : vector<256x8xf32>
    %c2_48 = arith.constant 2 : index
    %c4_49 = arith.constant 4 : index
    %c0_50 = arith.constant 0 : index
    %44 = vector.load %arg7[%c2_48, %c4_49, %c0_50] : memref<20x20x4xf32, #tpu.memory_space<vmem>>, vector<16x16x4xf32>
    %45 = vector.shape_cast %44 : vector<16x16x4xf32> to vector<256x4xf32>
    %c1_51 = arith.constant 1 : index
    %c2_52 = arith.constant 2 : index
    %c0_53 = arith.constant 0 : index
    %c0_54 = arith.constant 0 : index
    %46 = vector.load %arg4[%c1_51, %c2_52, %c0_53, %c0_54] : memref<3x3x4x8xf32, #tpu.memory_space<vmem>>, vector<1x1x4x8xf32>
    %47 = vector.shape_cast %46 : vector<1x1x4x8xf32> to vector<4x8xf32>
    %cst_55 = arith.constant dense<0.000000e+00> : vector<256x8xf32>
    %48 = tpu.matmul %45, %47, %cst_55 {dimension_numbers = #tpu.dot_dimension_numbers<[1], [0], [0], [1], [0, 0, 1, 1], [], []>} : vector<256x4xf32>, vector<4x8xf32>, vector<256x8xf32> -> vector<256x8xf32>
    %49 = arith.addf %43, %48 : vector<256x8xf32>
    %c4_56 = arith.constant 4 : index
    %c0_57 = arith.constant 0 : index
    %c0_58 = arith.constant 0 : index
    %50 = vector.load %arg7[%c4_56, %c0_57, %c0_58] : memref<20x20x4xf32, #tpu.memory_space<vmem>>, vector<16x16x4xf32>
    %51 = vector.shape_cast %50 : vector<16x16x4xf32> to vector<256x4xf32>
    %c2_59 = arith.constant 2 : index
    %c0_60 = arith.constant 0 : index
    %c0_61 = arith.constant 0 : index
    %c0_62 = arith.constant 0 : index
    %52 = vector.load %arg4[%c2_59, %c0_60, %c0_61, %c0_62] : memref<3x3x4x8xf32, #tpu.memory_space<vmem>>, vector<1x1x4x8xf32>
    %53 = vector.shape_cast %52 : vector<1x1x4x8xf32> to vector<4x8xf32>
    %cst_63 = arith.constant dense<0.000000e+00> : vector<256x8xf32>
    %54 = tpu.matmul %51, %53, %cst_63 {dimension_numbers = #tpu.dot_dimension_numbers<[1], [0], [0], [1], [0, 0, 1, 1], [], []>} : vector<256x4xf32>, vector<4x8xf32>, vector<256x8xf32> -> vector<256x8xf32>
    %55 = arith.addf %49, %54 : vector<256x8xf32>
    %c4_64 = arith.constant 4 : index
    %c2_65 = arith.constant 2 : index
    %c0_66 = arith.constant 0 : index
    %56 = vector.load %arg7[%c4_64, %c2_65, %c0_66] : memref<20x20x4xf32, #tpu.memory_space<vmem>>, vector<16x16x4xf32>
    %57 = vector.shape_cast %56 : vector<16x16x4xf32> to vector<256x4xf32>
    %c2_67 = arith.constant 2 : index
    %c1_68 = arith.constant 1 : index
    %c0_69 = arith.constant 0 : index
    %c0_70 = arith.constant 0 : index
    %58 = vector.load %arg4[%c2_67, %c1_68, %c0_69, %c0_70] : memref<3x3x4x8xf32, #tpu.memory_space<vmem>>, vector<1x1x4x8xf32>
    %59 = vector.shape_cast %58 : vector<1x1x4x8xf32> to vector<4x8xf32>
    %cst_71 = arith.constant dense<0.000000e+00> : vector<256x8xf32>
    %60 = tpu.matmul %57, %59, %cst_71 {dimension_numbers = #tpu.dot_dimension_numbers<[1], [0], [0], [1], [0, 0, 1, 1], [], []>} : vector<256x4xf32>, vector<4x8xf32>, vector<256x8xf32> -> vector<256x8xf32>
    %61 = arith.addf %55, %60 : vector<256x8xf32>
    %c4_72 = arith.constant 4 : index
    %c4_73 = arith.constant 4 : index
    %c0_74 = arith.constant 0 : index
    %62 = vector.load %arg7[%c4_72, %c4_73, %c0_74] : memref<20x20x4xf32, #tpu.memory_space<vmem>>, vector<16x16x4xf32>
    %63 = vector.shape_cast %62 : vector<16x16x4xf32> to vector<256x4xf32>
    %c2_75 = arith.constant 2 : index
    %c2_76 = arith.constant 2 : index
    %c0_77 = arith.constant 0 : index
    %c0_78 = arith.constant 0 : index
    %64 = vector.load %arg4[%c2_75, %c2_76, %c0_77, %c0_78] : memref<3x3x4x8xf32, #tpu.memory_space<vmem>>, vector<1x1x4x8xf32>
    %65 = vector.shape_cast %64 : vector<1x1x4x8xf32> to vector<4x8xf32>
    %cst_79 = arith.constant dense<0.000000e+00> : vector<256x8xf32>
    %66 = tpu.matmul %63, %65, %cst_79 {dimension_numbers = #tpu.dot_dimension_numbers<[1], [0], [0], [1], [0, 0, 1, 1], [], []>} : vector<256x4xf32>, vector<4x8xf32>, vector<256x8xf32> -> vector<256x8xf32>
    %67 = arith.addf %61, %66 : vector<256x8xf32>
    %c0_i32_80 = arith.constant 0 : i32
    %68 = arith.cmpi eq, %arg2, %c0_i32_80 : i32
    %69 = arith.extui %68 : i1 to i32
    %c0_i32_81 = arith.constant 0 : i32
    %70 = arith.cmpi ne, %69, %c0_i32_81 : i32
    scf.if %70 {
      %c0_86 = arith.constant 0 : index
      %c0_87 = arith.constant 0 : index
      %77 = vector.load %arg8[%c0_86, %c0_87] : memref<256x8xf32, #tpu.memory_space<vmem>>, vector<256x8xf32>
      tpu.vector_store %arg8[%c0_86, %c0_87], %67 {strides = array<i32>} : memref<256x8xf32, #tpu.memory_space<vmem>>, vector<256x8xf32>,
    } else {
    }
    %c0_i32_82 = arith.constant 0 : i32
    %71 = arith.cmpi ne, %arg2, %c0_i32_82 : i32
    %72 = arith.extui %71 : i1 to i32
    %c0_i32_83 = arith.constant 0 : i32
    %73 = arith.cmpi ne, %72, %c0_i32_83 : i32
    scf.if %73 {
      %c0_86 = arith.constant 0 : index
      %c0_87 = arith.constant 0 : index
      %77 = vector.load %arg8[%c0_86, %c0_87] : memref<256x8xf32, #tpu.memory_space<vmem>>, vector<256x8xf32>
      %78 = arith.addf %77, %67 : vector<256x8xf32>
      %c0_88 = arith.constant 0 : index
      %c0_89 = arith.constant 0 : index
      %79 = vector.load %arg8[%c0_88, %c0_89] : memref<256x8xf32, #tpu.memory_space<vmem>>, vector<256x8xf32>
      tpu.vector_store %arg8[%c0_88, %c0_89], %78 {strides = array<i32>} : memref<256x8xf32, #tpu.memory_space<vmem>>, vector<256x8xf32>,
    } else {
    }
    %c0_i32_84 = arith.constant 0 : i32
    %74 = arith.cmpi eq, %arg2, %c0_i32_84 : i32
    %75 = arith.extui %74 : i1 to i32
    %c0_i32_85 = arith.constant 0 : i32
    %76 = arith.cmpi ne, %75, %c0_i32_85 : i32
    scf.if %76 {
      %c0_86 = arith.constant 0 : index
      %c0_87 = arith.constant 0 : index
      %77 = vector.load %arg8[%c0_86, %c0_87] : memref<256x8xf32, #tpu.memory_space<vmem>>, vector<256x8xf32>
      %78 = vector.shape_cast %77 : vector<256x8xf32> to vector<1x16x16x8xf32>
      %c0_88 = arith.constant 0 : index
      %c0_89 = arith.constant 0 : index
      %c0_90 = arith.constant 0 : index
      %c0_91 = arith.constant 0 : index
      %79 = vector.load %arg5[%c0_88, %c0_89, %c0_90, %c0_91] : memref<1x16x16x8xf32, #tpu.memory_space<vmem>>, vector<1x16x16x8xf32>
      tpu.vector_store %arg5[%c0_88, %c0_89, %c0_90, %c0_91], %78 {strides = array<i32>} : memref<1x16x16x8xf32, #tpu.memory_space<vmem>>, vector<1x16x16x8xf32>,
      %c0_92 = arith.constant 0 : index
      %c0_93 = arith.constant 0 : index
      %80 = vector.load %arg6[%c0_92, %c0_93] : memref<2x8xf32, #tpu.memory_space<vmem>>, vector<1x8xf32>
      %cst_94 = arith.constant dense<0.000000e+00> : vector<8xf32>
      %81 = vector.multi_reduction <add>, %77, %cst_94 [0] : vector<256x8xf32> to vector<8xf32>
      %82 = vector.shape_cast %81 : vector<8xf32> to vector<1x8xf32>
      %83 = arith.addf %80, %82 : vector<1x8xf32>
      %c0_95 = arith.constant 0 : index
      %c0_96 = arith.constant 0 : index
      %84 = vector.load %arg6[%c0_95, %c0_96] : memref<2x8xf32, #tpu.memory_space<vmem>>, vector<1x8xf32>
      tpu.vector_store %arg6[%c0_95, %c0_96], %83 {strides = array<i32>} : memref<2x8xf32, #tpu.memory_space<vmem>>, vector<1x8xf32>,
      %c1_97 = arith.constant 1 : index
      %c0_98 = arith.constant 0 : index
      %85 = vector.load %arg6[%c1_97, %c0_98] : memref<2x8xf32, #tpu.memory_space<vmem>>, vector<1x8xf32>
      %86 = arith.mulf %77, %77 : vector<256x8xf32>
      %cst_99 = arith.constant dense<0.000000e+00> : vector<8xf32>
      %87 = vector.multi_reduction <add>, %86, %cst_99 [0] : vector<256x8xf32> to vector<8xf32>
      %88 = vector.shape_cast %87 : vector<8xf32> to vector<1x8xf32>
      %89 = arith.addf %85, %88 : vector<1x8xf32>
      %c1_100 = arith.constant 1 : index
      %c0_101 = arith.constant 0 : index
      %90 = vector.load %arg6[%c1_100, %c0_101] : memref<2x8xf32, #tpu.memory_space<vmem>>, vector<1x8xf32>
      tpu.vector_store %arg6[%c1_100, %c0_101], %89 {strides = array<i32>} : memref<2x8xf32, #tpu.memory_space<vmem>>, vector<1x8xf32>,
    } else {
    }
    return
  }
  func.func @transform_0(%arg0: i32, %arg1: i32, %arg2: i32) -> (i32, i32, i32, i32) {
    %c0_i32 = arith.constant 0 : i32
    %c0_i32_0 = arith.constant 0 : i32
    %c0_i32_1 = arith.constant 0 : i32
    return %arg1, %c0_i32, %c0_i32_0, %arg2 : i32, i32, i32, i32
  }
  func.func @transform_1(%arg0: i32, %arg1: i32, %arg2: i32) -> (i32, i32, i32, i32) {
    %c0_i32 = arith.constant 0 : i32
    %c0_i32_0 = arith.constant 0 : i32
    %c0_i32_1 = arith.constant 0 : i32
    return %c0_i32, %c0_i32_0, %arg2, %arg0 : i32, i32, i32, i32
  }
  func.func @transform_2(%arg0: i32, %arg1: i32, %arg2: i32) -> (i32, i32, i32, i32) {
    %c0_i32 = arith.constant 0 : i32
    %c0_i32_0 = arith.constant 0 : i32
    %c0_i32_1 = arith.constant 0 : i32
    return %arg1, %c0_i32, %c0_i32_0, %arg0 : i32, i32, i32, i32
  }
  func.func @transform_3(%arg0: i32, %arg1: i32, %arg2: i32) -> (i32, i32) {
    %c0_i32 = arith.constant 0 : i32
    %c0_i32_0 = arith.constant 0 : i32
    return %c0_i32, %arg0 : i32, i32
  }
}

</mosaic_0001>

<llo_original>
// kernel: tpu_custom_call.1
$region0: #{tpu_custom_call.1}
  #allocation0 [shape = 'u32[]', space=smem, size = 0x4, offset = 0x4, fixed_abs, tag = 'smem constant byte address 0x4 - core index']
  #allocation1 [shape = 'u32[144,128]{1,0:T(1,128)}', space=vmem, size = 0x12000, scoped, tag = 'internal scratch']
  #allocation2 [shape = 'f32[20,20,4]{2,1,0:T(8,128)}', space=vmem, size = 0x3c000, scoped, tag = 'scratch operand']
  #allocation3 [shape = 'f32[256,8]{1,0:T(8,128)}', space=vmem, size = 0x20000, scoped, tag = 'scratch operand']
  %s0 = inlined_call_operand.vmem [shape: f32[2,16,16,4], index: 0, kind: input, shape index: {}]
  %s1 = inlined_call_operand.vmem [shape: f32[3,3,4,8], index: 1, kind: input, shape index: {}]
  %s2 = inlined_call_operand.vmem [shape: f32[2,16,16,8], index: 2, kind: output, shape index: {0}]
  %s3 = inlined_call_operand.hbm [shape: f32[2,8], index: 3, kind: output, shape index: {1}]
  %4 = xla_tuple %s2, %s3
  %s5 = sld [smem:[#allocation0]]
  $region65: #{tpu_custom_call.1} parent=0
    _
  %s7 = ssub.s32 1, %s5
  %s8 = scalar_select 0, %s7, %s5
  $region1: #{tpu_custom_call.1} parent=0
    #allocation4 [shape = 'u8[1024]{0}', space=vmem, size = 0x400, scoped, tag = 'output window, operand 1, single buffered']
    #allocation5 [shape = 's32[2]{0}', space=sflag, size = 0x8, scoped, tag = 'scoped memory for tpu_custom_call.1']
    %9 = vsyncpa [#allocation5], 0
    loop: start=0, step=1, limit=4
    $region2: #{tpu_custom_call.1} parent=1 // loop_pre_header
      _
    $region3: #{tpu_custom_call.1} parent=1 // loop_header
      %s11 = sphi 0, %s15
      %p12 = scmp.ge.s32.totalorder %s11, 4
      %s18 = sphi 0, %s37
      %s19 = sphi 0, %s33
      %s20 = sphi 0, %s29
      %s21 = sphi 0, %s18
      %s22 = sphi 0, %s19
      %s23 = sphi 0, %s20
      %s24 = sphi 0, %s21
      %s25 = sphi 0, %s22
      %s26 = sphi 0, %s23
      %s42 = sphi 0, %s44
      %s45 = sphi 0, %s42
      %s46 = sphi 0, %s45
      %s62 = sphi 0, %s46
      %s70 = sphi 0, %s72
      %s73 = sphi 0, %s70
      %s74 = sphi 0, %s73
      %s90 = sphi 0, %s74
      %s98 = sphi 0, %s100
      %s101 = sphi 0, %s98
      %s102 = sphi 0, %s101
      %s118 = sphi 0, %s102
      %s124 = sphi 0, %s126
      %s127 = sphi 0, %s124
      %s128 = sphi 0, %s127
      %s144 = sphi 0, %s128
    $region4: #{tpu_custom_call.1} parent=1 // loop_header_branch
      %14 = sbr.rel (%p12) target = $region8
    $region5: #{tpu_custom_call.1} parent=1 // loop_body
      %s16 = ssub.s32 %s11, 1
      %s17 = ssub.s32 %s11, 2
      %s27 = sadd.s32 1, %s20
      %p28 = scmp.ge.s32.totalorder %s27, 1
      %s29 = scalar_select %p28, 0, %s27
      %s30 = sadd.s32 1, %s19
      %s31 = scalar_select %p28, %s30, %s19
      %p32 = scmp.ge.s32.totalorder %s31, 2
      %s33 = scalar_select %p32, 0, %s31
      %s34 = sadd.s32 1, %s18
      %s35 = scalar_select %p32, %s34, %s18
      %p36 = scmp.ge.s32.totalorder %s35, 1
      %s37 = scalar_select %p36, 0, %s35
      %s38 = ssub.s32 %s19, %s33
      %s39 = ssub.s32 %s20, %s29
      %s40 = sor.u32 %s38, %s39
      %p41 = scmp.eq.s32.totalorder %s40, 0
      %s43 = sadd.s32 %s42, 1
      %s44 = scalar_select %p41, %s42, %s43
      %p47 = pneg %p41
      %p48 = scmp.eq.s32.totalorder %s11, 1
      %p49 = por %p47, %p48
      %p50 = scmp.ne.s32.totalorder %s42, %s45
      %p51 = scmp.eq.s32.totalorder %s11, 0
      %p52 = por %p50, %p51
      %p53 = scmp.ne.s32.totalorder %s42, %s45
      %p54 = scmp.eq.s32.totalorder %s16, 1
      %p55 = por %p53, %p54
      %p56 = scmp.ne.s32.totalorder %s45, %s46
      %p57 = scmp.eq.s32.totalorder %s16, 0
      %p58 = por %p56, %p57
      %p59 = scmp.ne.s32.totalorder %s45, %s46
      %p60 = scmp.eq.s32.totalorder %s17, 1
      %p61 = por %p59, %p60
      %p63 = scmp.ne.s32.totalorder %s46, %s62
      %p64 = scmp.eq.s32.totalorder %s17, 0
      %p65 = por %p63, %p64
      %s66 = ssub.s32 %s20, %s29
      %s67 = ssub.s32 %s18, %s37
      %s68 = sor.u32 %s66, %s67
      %p69 = scmp.eq.s32.totalorder %s68, 0
      %s71 = sadd.s32 %s70, 1
      %s72 = scalar_select %p69, %s70, %s71
      %p75 = pneg %p69
      %p76 = scmp.eq.s32.totalorder %s11, 1
      %p77 = por %p75, %p76
      %p78 = scmp.ne.s32.totalorder %s70, %s73
      %p79 = scmp.eq.s32.totalorder %s11, 0
      %p80 = por %p78, %p79
      %p81 = scmp.ne.s32.totalorder %s70, %s73
      %p82 = scmp.eq.s32.totalorder %s16, 1
      %p83 = por %p81, %p82
      %p84 = scmp.ne.s32.totalorder %s73, %s74
      %p85 = scmp.eq.s32.totalorder %s16, 0
      %p86 = por %p84, %p85
      %p87 = scmp.ne.s32.totalorder %s73, %s74
      %p88 = scmp.eq.s32.totalorder %s17, 1
      %p89 = por %p87, %p88
      %p91 = scmp.ne.s32.totalorder %s74, %s90
      %p92 = scmp.eq.s32.totalorder %s17, 0
      %p93 = por %p91, %p92
      %s94 = ssub.s32 %s19, %s33
      %s95 = ssub.s32 %s18, %s37
      %s96 = sor.u32 %s94, %s95
      %p97 = scmp.eq.s32.totalorder %s96, 0
      %s99 = sadd.s32 %s98, 1
      %s100 = scalar_select %p97, %s98, %s99
      %p103 = pneg %p97
      %p104 = scmp.eq.s32.totalorder %s11, 1
      %p105 = por %p103, %p104
      %p106 = scmp.ne.s32.totalorder %s98, %s101
      %p107 = scmp.eq.s32.totalorder %s11, 0
      %p108 = por %p106, %p107
      %p109 = scmp.ne.s32.totalorder %s98, %s101
      %p110 = scmp.eq.s32.totalorder %s16, 1
      %p111 = por %p109, %p110
      %p112 = scmp.ne.s32.totalorder %s101, %s102
      %p113 = scmp.eq.s32.totalorder %s16, 0
      %p114 = por %p112, %p113
      %p115 = scmp.ne.s32.totalorder %s101, %s102
      %p116 = scmp.eq.s32.totalorder %s17, 1
      %p117 = por %p115, %p116
      %p119 = scmp.ne.s32.totalorder %s102, %s118
      %p120 = scmp.eq.s32.totalorder %s17, 0
      %p121 = por %p119, %p120
      %s122 = ssub.s32 %s18, %s37
      %p123 = scmp.eq.s32.totalorder %s122, 0
      %s125 = sadd.s32 %s124, 1
      %s126 = scalar_select %p123, %s124, %s125
      %p129 = pneg %p123
      %p130 = scmp.eq.s32.totalorder %s11, 1
      %p131 = por %p129, %p130
      %p132 = scmp.ne.s32.totalorder %s124, %s127
      %p133 = scmp.eq.s32.totalorder %s11, 0
      %p134 = por %p132, %p133
      %p135 = scmp.ne.s32.totalorder %s124, %s127
      %p136 = scmp.eq.s32.totalorder %s16, 1
      %p137 = por %p135, %p136
      %p138 = scmp.ne.s32.totalorder %s127, %s128
      %p139 = scmp.eq.s32.totalorder %s16, 0
      %p140 = por %p138, %p139
      %p141 = scmp.ne.s32.totalorder %s127, %s128
      %p142 = scmp.eq.s32.totalorder %s17, 1
      %p143 = por %p141, %p142
      %p145 = scmp.ne.s32.totalorder %s128, %s144
      %p146 = scmp.eq.s32.totalorder %s17, 0
      %p147 = por %p145, %p146
      %p148 = scmp.le.s32.totalorder 1, %s11
      %p149 = scmp.lt.s32.totalorder %s11, 3
      %p150 = pnand %p148, %p149
      %p151 = pneg %p150
      // Predicated region
      $region9: #{tpu_custom_call.1} parent=5 // pred_check
        _
      $region10: #{tpu_custom_call.1} parent=5 // pred_check_branch
        %153 = sbr.rel (%p150) target = $region12
      $region11: #{tpu_custom_call.1} parent=5 // pred_region
        %s154 = ssub.s32 %s11, 1
        // Predicated region
        $region13: #{tpu_custom_call.1} parent=11 // pred_check
          %p155 = pneg %p86
        $region14: #{tpu_custom_call.1} parent=11 // pred_check_branch
          %157 = sbr.rel (%p155) target = $region16
        $region15: #{tpu_custom_call.1} parent=11 // pred_region
          %p158 = scmp.lt.s32.totalorder %s23, 0
          %s159 = scalar_select %p158, %s23, 0
          %p160 = scmp.lt.s32.totalorder %s21, 0
          %s161 = scalar_select %p160, %s21, 0
          %s162 = sadd.s32 %s161, %s159
          %s163 = smul.addr %s162, 4
          %s164 = scalar_lea.vmem %s1, %s163
        $region16: #{tpu_custom_call.1} parent=11 // pred_fallthru
          _
      $region12: #{tpu_custom_call.1} parent=5 // pred_fallthru
        _
      %p165 = scmp.lt.s32.totalorder %s11, 2
      // Predicated region
      $region17: #{tpu_custom_call.1} parent=5 // pred_check
        %p166 = pneg %p165
      $region18: #{tpu_custom_call.1} parent=5 // pred_check_branch
        %168 = sbr.rel (%p166) target = $region20
      $region19: #{tpu_custom_call.1} parent=5 // pred_region
        // Predicated region
        $region21: #{tpu_custom_call.1} parent=19 // pred_check
          %p169 = pneg %p52
        $region22: #{tpu_custom_call.1} parent=19 // pred_check_branch
          %171 = sbr.rel (%p169) target = $region24
        $region23: #{tpu_custom_call.1} parent=19 // pred_region
          %p172 = scmp.lt.s32.totalorder %s19, 1
          %s173 = scalar_select %p172, %s19, 1
          %p174 = scmp.lt.s32.totalorder %s20, 0
          %s175 = scalar_select %p174, %s20, 0
          %s176 = smul.addr %s173, 32
          %s177 = sadd.s32 %s175, %s176
          %s178 = smul.addr %s177, 8
          %s179 = scalar_lea.vmem %s0, %s178
        $region24: #{tpu_custom_call.1} parent=19 // pred_fallthru
          _
      $region20: #{tpu_custom_call.1} parent=5 // pred_fallthru
        _
      %p180 = scmp.le.s32.totalorder 1, %s11
      %p181 = scmp.lt.s32.totalorder %s11, 3
      %p182 = pnand %p180, %p181
      %p183 = pneg %p182
      // Predicated region
      $region25: #{tpu_custom_call.1} parent=5 // pred_check
        _
      $region26: #{tpu_custom_call.1} parent=5 // pred_check_branch
        %185 = sbr.rel (%p182) target = $region28
      $region27: #{tpu_custom_call.1} parent=5 // pred_region
        %s186 = ssub.s32 %s11, 1
        %p187 = scmp.lt.s32.totalorder %s22, 1
        %s188 = scalar_select %p187, %s22, 1
        %p189 = scmp.lt.s32.totalorder %s23, 0
        %s190 = scalar_select %p189, %s23, 0
        %s191 = smul.addr %s188, 32
        %s192 = sadd.s32 %s190, %s191
        %s193 = smul.addr %s192, 8
        %s194 = scalar_lea.vmem %s0, %s193
        %p195 = pneg %p58
        %p196 = pneg %p55
        %p197 = scmp.lt.s32.totalorder %s23, 0
        %s198 = scalar_select %p197, %s23, 0
        %p199 = scmp.lt.s32.totalorder %s21, 0
        %s200 = scalar_select %p199, %s21, 0
        %s201 = sadd.s32 %s200, %s198
        %s202 = smul.addr %s201, 4
        %s203 = scalar_lea.vmem %s1, %s202
        %p204 = pneg %p86
        %p205 = pneg %p83
        %p206 = pneg %p114
        %p207 = pneg %p111
        %p208 = scmp.lt.s32.totalorder %s22, 1
        %s209 = scalar_select %p208, %s22, 1
        %p210 = scmp.lt.s32.totalorder %s21, 0
        %s211 = scalar_select %p210, %s21, 0
        %s212 = smul.addr %s209, 32
        %s213 = sadd.s32 %s211, %s212
        %s214 = smul.addr %s213, 8
        %s215 = scalar_lea.vmem %s2, %s214
        %p216 = pneg %p140
        %p217 = pneg %p137
        %p218 = scmp.lt.s32.totalorder %s22, 1
        %s219 = scalar_select %p218, %s22, 1
        %p220 = scmp.lt.s32.totalorder %s23, 0
        %s221 = scalar_select %p220, %s23, 0
        %s222 = smul.addr %s219, 32
        %s223 = sadd.s32 %s221, %s222
        %s224 = smul.addr %s223, 8
        %s225 = scalar_lea.vmem %s0, %s224
        %p226 = scmp.lt.s32.totalorder %s23, 0
        %s227 = scalar_select %p226, %s23, 0
        %p228 = scmp.lt.s32.totalorder %s21, 0
        %s229 = scalar_select %p228, %s21, 0
        %s230 = sadd.s32 %s229, %s227
        %s231 = smul.addr %s230, 4
        %s232 = scalar_lea.vmem %s1, %s231
        %p233 = scmp.lt.s32.totalorder %s22, 1
        %s234 = scalar_select %p233, %s22, 1
        %p235 = scmp.lt.s32.totalorder %s21, 0
        %s236 = scalar_select %p235, %s21, 0
        %s237 = smul.addr %s234, 32
        %s238 = sadd.s32 %s236, %s237
        %s239 = smul.addr %s238, 8
        %s240 = scalar_lea.vmem %s2, %s239
        %p241 = scmp.eq.s32.totalorder %s22, 0
        %p242 = scmp.eq.s32.totalorder %s23, 0
        %p243 = pnand %p241, %p242
        %p244 = pneg %p243
        // Predicated region
        $region29: #{tpu_custom_call.1} parent=27 // pred_check
          _
        $region30: #{tpu_custom_call.1} parent=27 // pred_check_branch
          %246 = sbr.rel (%p243) target = $region32
        $region31: #{tpu_custom_call.1} parent=27 // pred_region
          %vm247 = vcmask 58368
          %248 = vst.msk [vmem:[#allocation4] sm:$0x3] %vm247, 0.0
          %vm249 = vcmask 31744
          %250 = vst.msk [vmem:[#allocation2] sm:$0xff] %vm249, 0.0
          %251 = vst.msk [vmem:[#allocation2 + $0x8] sm:$0xff] %vm249, 0.0
          %vm252 = vcmask 27648
          %253 = vst.msk [vmem:[#allocation2 + $0x10] sm:$0xf] %vm252, 0.0
          %254 = vst.msk [vmem:[#allocation2 + $0x18] sm:$0xff] %vm249, 0.0
          %255 = vst.msk [vmem:[#allocation2 + $0x20] sm:$0xff] %vm249, 0.0
          %256 = vst.msk [vmem:[#allocation2 + $0x28] sm:$0xf] %vm252, 0.0
          %257 = vst.msk [vmem:[#allocation2 + $0x30] sm:$0xff] %vm249, 0.0
          %258 = vst.msk [vmem:[#allocation2 + $0x38] sm:$0xff] %vm249, 0.0
          %259 = vst.msk [vmem:[#allocation2 + $0x40] sm:$0xf] %vm252, 0.0
          %260 = vst.msk [vmem:[#allocation2 + $0x48] sm:$0xff] %vm249, 0.0
          %261 = vst.msk [vmem:[#allocation2 + $0x50] sm:$0xff] %vm249, 0.0
          %262 = vst.msk [vmem:[#allocation2 + $0x58] sm:$0xf] %vm252, 0.0
          %263 = vst.msk [vmem:[#allocation2 + $0x60] sm:$0xff] %vm249, 0.0
          %264 = vst.msk [vmem:[#allocation2 + $0x68] sm:$0xff] %vm249, 0.0
          %265 = vst.msk [vmem:[#allocation2 + $0x70] sm:$0xf] %vm252, 0.0
          %266 = vst.msk [vmem:[#allocation2 + $0x78] sm:$0xff] %vm249, 0.0
          %267 = vst.msk [vmem:[#allocation2 + $0x80] sm:$0xff] %vm249, 0.0
          %268 = vst.msk [vmem:[#allocation2 + $0x88] sm:$0xf] %vm252, 0.0
          %269 = vst.msk [vmem:[#allocation2 + $0x90] sm:$0xff] %vm249, 0.0
          %270 = vst.msk [vmem:[#allocation2 + $0x98] sm:$0xff] %vm249, 0.0
          %271 = vst.msk [vmem:[#allocation2 + $0xa0] sm:$0xf] %vm252, 0.0
          %272 = vst.msk [vmem:[#allocation2 + $0xa8] sm:$0xff] %vm249, 0.0
          %273 = vst.msk [vmem:[#allocation2 + $0xb0] sm:$0xff] %vm249, 0.0
          %274 = vst.msk [vmem:[#allocation2 + $0xb8] sm:$0xf] %vm252, 0.0
          %275 = vst.msk [vmem:[#allocation2 + $0xc0] sm:$0xff] %vm249, 0.0
          %276 = vst.msk [vmem:[#allocation2 + $0xc8] sm:$0xff] %vm249, 0.0
          %277 = vst.msk [vmem:[#allocation2 + $0xd0] sm:$0xf] %vm252, 0.0
          %278 = vst.msk [vmem:[#allocation2 + $0xd8] sm:$0xff] %vm249, 0.0
          %279 = vst.msk [vmem:[#allocation2 + $0xe0] sm:$0xff] %vm249, 0.0
          %280 = vst.msk [vmem:[#allocation2 + $0xe8] sm:$0xf] %vm252, 0.0
          %281 = vst.msk [vmem:[#allocation2 + $0xf0] sm:$0xff] %vm249, 0.0
          %282 = vst.msk [vmem:[#allocation2 + $0xf8] sm:$0xff] %vm249, 0.0
          %283 = vst.msk [vmem:[#allocation2 + $0x100] sm:$0xf] %vm252, 0.0
          %284 = vst.msk [vmem:[#allocation2 + $0x108] sm:$0xff] %vm249, 0.0
          %285 = vst.msk [vmem:[#allocation2 + $0x110] sm:$0xff] %vm249, 0.0
          %286 = vst.msk [vmem:[#allocation2 + $0x118] sm:$0xf] %vm252, 0.0
          %287 = vst.msk [vmem:[#allocation2 + $0x120] sm:$0xff] %vm249, 0.0
          %288 = vst.msk [vmem:[#allocation2 + $0x128] sm:$0xff] %vm249, 0.0
          %289 = vst.msk [vmem:[#allocation2 + $0x130] sm:$0xf] %vm252, 0.0
          %290 = vst.msk [vmem:[#allocation2 + $0x138] sm:$0xff] %vm249, 0.0
          %291 = vst.msk [vmem:[#allocation2 + $0x140] sm:$0xff] %vm249, 0.0
          %292 = vst.msk [vmem:[#allocation2 + $0x148] sm:$0xf] %vm252, 0.0
          %293 = vst.msk [vmem:[#allocation2 + $0x150] sm:$0xff] %vm249, 0.0
          %294 = vst.msk [vmem:[#allocation2 + $0x158] sm:$0xff] %vm249, 0.0
          %295 = vst.msk [vmem:[#allocation2 + $0x160] sm:$0xf] %vm252, 0.0
          %296 = vst.msk [vmem:[#allocation2 + $0x168] sm:$0xff] %vm249, 0.0
          %297 = vst.msk [vmem:[#allocation2 + $0x170] sm:$0xff] %vm249, 0.0
          %298 = vst.msk [vmem:[#allocation2 + $0x178] sm:$0xf] %vm252, 0.0
          %299 = vst.msk [vmem:[#allocation2 + $0x180] sm:$0xff] %vm249, 0.0
          %300 = vst.msk [vmem:[#allocation2 + $0x188] sm:$0xff] %vm249, 0.0
          %301 = vst.msk [vmem:[#allocation2 + $0x190] sm:$0xf] %vm252, 0.0
          %302 = vst.msk [vmem:[#allocation2 + $0x198] sm:$0xff] %vm249, 0.0
          %303 = vst.msk [vmem:[#allocation2 + $0x1a0] sm:$0xff] %vm249, 0.0
          %304 = vst.msk [vmem:[#allocation2 + $0x1a8] sm:$0xf] %vm252, 0.0
          %305 = vst.msk [vmem:[#allocation2 + $0x1b0] sm:$0xff] %vm249, 0.0
          %306 = vst.msk [vmem:[#allocation2 + $0x1b8] sm:$0xff] %vm249, 0.0
          %307 = vst.msk [vmem:[#allocation2 + $0x1c0] sm:$0xf] %vm252, 0.0
          %308 = vst.msk [vmem:[#allocation2 + $0x1c8] sm:$0xff] %vm249, 0.0
          %309 = vst.msk [vmem:[#allocation2 + $0x1d0] sm:$0xff] %vm249, 0.0
          %310 = vst.msk [vmem:[#allocation2 + $0x1d8] sm:$0xf] %vm252, 0.0
        $region32: #{tpu_custom_call.1} parent=27 // pred_fallthru
          _
        %v311 = vld [vmem:[%s225] sm:$0xff]
        %v312 = vld [vmem:[%s225 + $0x8] sm:$0xff]
        %v313 = vld [vmem:[%s225 + $0x10] sm:$0xff]
        %v314 = vld [vmem:[%s225 + $0x18] sm:$0xff]
        %v315 = vld [vmem:[%s225 + $0x20] sm:$0xff]
        %v316 = vld [vmem:[%s225 + $0x28] sm:$0xff]
        %v317 = vld [vmem:[%s225 + $0x30] sm:$0xff]
        %v318 = vld [vmem:[%s225 + $0x38] sm:$0xff]
        %v319 = vld [vmem:[%s225 + $0x40] sm:$0xff]
        %v320 = vld [vmem:[%s225 + $0x48] sm:$0xff]
        %v321 = vld [vmem:[%s225 + $0x50] sm:$0xff]
        %v322 = vld [vmem:[%s225 + $0x58] sm:$0xff]
        %v323 = vld [vmem:[%s225 + $0x60] sm:$0xff]
        %v324 = vld [vmem:[%s225 + $0x68] sm:$0xff]
        %v325 = vld [vmem:[%s225 + $0x70] sm:$0xff]
        %v326 = vld [vmem:[%s225 + $0x78] sm:$0xff]
        %v327 = vld [vmem:[%s225 + $0x80] sm:$0xff]
        %v328 = vld [vmem:[%s225 + $0x88] sm:$0xff]
        %v329 = vld [vmem:[%s225 + $0x90] sm:$0xff]
        %v330 = vld [vmem:[%s225 + $0x98] sm:$0xff]
        %v331 = vld [vmem:[%s225 + $0xa0] sm:$0xff]
        %v332 = vld [vmem:[%s225 + $0xa8] sm:$0xff]
        %v333 = vld [vmem:[%s225 + $0xb0] sm:$0xff]
        %v334 = vld [vmem:[%s225 + $0xb8] sm:$0xff]
        %v335 = vld [vmem:[%s225 + $0xc0] sm:$0xff]
        %v336 = vld [vmem:[%s225 + $0xc8] sm:$0xff]
        %v337 = vld [vmem:[%s225 + $0xd0] sm:$0xff]
        %v338 = vld [vmem:[%s225 + $0xd8] sm:$0xff]
        %v339 = vld [vmem:[%s225 + $0xe0] sm:$0xff]
        %v340 = vld [vmem:[%s225 + $0xe8] sm:$0xff]
        %v341 = vld [vmem:[%s225 + $0xf0] sm:$0xff]
        %v342 = vld [vmem:[%s225 + $0xf8] sm:$0xff]
        %s343 = scalar_lea.vmem [#allocation2], 48
        %vm344 = vcmask 31744
        %345 = vst.msk [vmem:[%s343 + $0x2] sm:$0xff] %vm344, %v311
        %346 = vst.msk [vmem:[%s343 + $0xa] sm:$0xff] %vm344, %v312
        %347 = vst.msk [vmem:[%s343 + $0x1a] sm:$0xff] %vm344, %v313
        %348 = vst.msk [vmem:[%s343 + $0x22] sm:$0xff] %vm344, %v314
        %349 = vst.msk [vmem:[%s343 + $0x32] sm:$0xff] %vm344, %v315
        %350 = vst.msk [vmem:[%s343 + $0x3a] sm:$0xff] %vm344, %v316
        %351 = vst.msk [vmem:[%s343 + $0x4a] sm:$0xff] %vm344, %v317
        %352 = vst.msk [vmem:[%s343 + $0x52] sm:$0xff] %vm344, %v318
        %353 = vst.msk [vmem:[%s343 + $0x62] sm:$0xff] %vm344, %v319
        %354 = vst.msk [vmem:[%s343 + $0x6a] sm:$0xff] %vm344, %v320
        %355 = vst.msk [vmem:[%s343 + $0x7a] sm:$0xff] %vm344, %v321
        %356 = vst.msk [vmem:[%s343 + $0x82] sm:$0xff] %vm344, %v322
        %357 = vst.msk [vmem:[%s343 + $0x92] sm:$0xff] %vm344, %v323
        %358 = vst.msk [vmem:[%s343 + $0x9a] sm:$0xff] %vm344, %v324
        %359 = vst.msk [vmem:[%s343 + $0xaa] sm:$0xff] %vm344, %v325
        %360 = vst.msk [vmem:[%s343 + $0xb2] sm:$0xff] %vm344, %v326
        %361 = vst.msk [vmem:[%s343 + $0xc2] sm:$0xff] %vm344, %v327
        %362 = vst.msk [vmem:[%s343 + $0xca] sm:$0xff] %vm344, %v328
        %363 = vst.msk [vmem:[%s343 + $0xda] sm:$0xff] %vm344, %v329
        %364 = vst.msk [vmem:[%s343 + $0xe2] sm:$0xff] %vm344, %v330
        %365 = vst.msk [vmem:[%s343 + $0xf2] sm:$0xff] %vm344, %v331
        %366 = vst.msk [vmem:[%s343 + $0xfa] sm:$0xff] %vm344, %v332
        %367 = vst.msk [vmem:[%s343 + $0x10a] sm:$0xff] %vm344, %v333
        %368 = vst.msk [vmem:[%s343 + $0x112] sm:$0xff] %vm344, %v334
        %369 = vst.msk [vmem:[%s343 + $0x122] sm:$0xff] %vm344, %v335
        %370 = vst.msk [vmem:[%s343 + $0x12a] sm:$0xff] %vm344, %v336
        %371 = vst.msk [vmem:[%s343 + $0x13a] sm:$0xff] %vm344, %v337
        %372 = vst.msk [vmem:[%s343 + $0x142] sm:$0xff] %vm344, %v338
        %373 = vst.msk [vmem:[%s343 + $0x152] sm:$0xff] %vm344, %v339
        %374 = vst.msk [vmem:[%s343 + $0x15a] sm:$0xff] %vm344, %v340
        %375 = vst.msk [vmem:[%s343 + $0x16a] sm:$0xff] %vm344, %v341
        %376 = vst.msk [vmem:[%s343 + $0x172] sm:$0xff] %vm344, %v342
        %v377 = vld [vmem:[#allocation2] sm:$0xff]
        %v378 = vld [vmem:[#allocation2 + $0x8] sm:$0xff]
        %v379 = vld [vmem:[#allocation2 + $0x18] sm:$0xff]
        %v380 = vld [vmem:[#allocation2 + $0x20] sm:$0xff]
        %v381 = vld [vmem:[#allocation2 + $0x30] sm:$0xff]
        %v382 = vld [vmem:[#allocation2 + $0x38] sm:$0xff]
        %v383 = vld [vmem:[#allocation2 + $0x48] sm:$0xff]
        %v384 = vld [vmem:[#allocation2 + $0x50] sm:$0xff]
        %v385 = vld [vmem:[#allocation2 + $0x60] sm:$0xff]
        %v386 = vld [vmem:[#allocation2 + $0x68] sm:$0xff]
        %v387 = vld [vmem:[#allocation2 + $0x78] sm:$0xff]
        %v388 = vld [vmem:[#allocation2 + $0x80] sm:$0xff]
        %v389 = vld [vmem:[#allocation2 + $0x90] sm:$0xff]
        %v390 = vld [vmem:[#allocation2 + $0x98] sm:$0xff]
        %v391 = vld [vmem:[#allocation2 + $0xa8] sm:$0xff]
        %v392 = vld [vmem:[#allocation2 + $0xb0] sm:$0xff]
        %v393 = vld [vmem:[#allocation2 + $0xc0] sm:$0xff]
        %v394 = vld [vmem:[#allocation2 + $0xc8] sm:$0xff]
        %v395 = vld [vmem:[#allocation2 + $0xd8] sm:$0xff]
        %v396 = vld [vmem:[#allocation2 + $0xe0] sm:$0xff]
        %v397 = vld [vmem:[#allocation2 + $0xf0] sm:$0xff]
        %v398 = vld [vmem:[#allocation2 + $0xf8] sm:$0xff]
        %v399 = vld [vmem:[#allocation2 + $0x108] sm:$0xff]
        %v400 = vld [vmem:[#allocation2 + $0x110] sm:$0xff]
        %v401 = vld [vmem:[#allocation2 + $0x120] sm:$0xff]
        %v402 = vld [vmem:[#allocation2 + $0x128] sm:$0xff]
        %v403 = vld [vmem:[#allocation2 + $0x138] sm:$0xff]
        %v404 = vld [vmem:[#allocation2 + $0x140] sm:$0xff]
        %v405 = vld [vmem:[#allocation2 + $0x150] sm:$0xff]
        %v406 = vld [vmem:[#allocation2 + $0x158] sm:$0xff]
        %v407 = vld [vmem:[#allocation2 + $0x168] sm:$0xff]
        %v408 = vld [vmem:[#allocation2 + $0x170] sm:$0xff]
        %v409 = vld [vmem:[%s232] sm:$0xf]
        %v410 = vld [vmem:[#allocation2 + $0x2] sm:$0xff]
        %v411 = vld [vmem:[#allocation2 + $0xa] sm:$0xff]
        %v412 = vld [vmem:[#allocation2 + $0x1a] sm:$0xff]
        %v413 = vld [vmem:[#allocation2 + $0x22] sm:$0xff]
        %v414 = vld [vmem:[#allocation2 + $0x32] sm:$0xff]
        %v415 = vld [vmem:[#allocation2 + $0x3a] sm:$0xff]
        %v416 = vld [vmem:[#allocation2 + $0x4a] sm:$0xff]
        %v417 = vld [vmem:[#allocation2 + $0x52] sm:$0xff]
        %v418 = vld [vmem:[#allocation2 + $0x62] sm:$0xff]
        %v419 = vld [vmem:[#allocation2 + $0x6a] sm:$0xff]
        %v420 = vld [vmem:[#allocation2 + $0x7a] sm:$0xff]
        %v421 = vld [vmem:[#allocation2 + $0x82] sm:$0xff]
        %v422 = vld [vmem:[#allocation2 + $0x92] sm:$0xff]
        %v423 = vld [vmem:[#allocation2 + $0x9a] sm:$0xff]
        %v424 = vld [vmem:[#allocation2 + $0xaa] sm:$0xff]
        %v425 = vld [vmem:[#allocation2 + $0xb2] sm:$0xff]
        %v426 = vld [vmem:[#allocation2 + $0xc2] sm:$0xff]
        %v427 = vld [vmem:[#allocation2 + $0xca] sm:$0xff]
        %v428 = vld [vmem:[#allocation2 + $0xda] sm:$0xff]
        %v429 = vld [vmem:[#allocation2 + $0xe2] sm:$0xff]
        %v430 = vld [vmem:[#allocation2 + $0xf2] sm:$0xff]
        %v431 = vld [vmem:[#allocation2 + $0xfa] sm:$0xff]
        %v432 = vld [vmem:[#allocation2 + $0x10a] sm:$0xff]
        %v433 = vld [vmem:[#allocation2 + $0x112] sm:$0xff]
        %v434 = vld [vmem:[#allocation2 + $0x122] sm:$0xff]
        %v435 = vld [vmem:[#allocation2 + $0x12a] sm:$0xff]
        %v436 = vld [vmem:[#allocation2 + $0x13a] sm:$0xff]
        %v437 = vld [vmem:[#allocation2 + $0x142] sm:$0xff]
        %v438 = vld [vmem:[#allocation2 + $0x152] sm:$0xff]
        %v439 = vld [vmem:[#allocation2 + $0x15a] sm:$0xff]
        %v440 = vld [vmem:[#allocation2 + $0x16a] sm:$0xff]
        %v441 = vld [vmem:[#allocation2 + $0x172] sm:$0xff]
        %s442 = scalar_lea.vmem %s232, 4
        %v443 = vld [vmem:[%s442] sm:$0xf]
        %v445 = vsel %vm344, %v410, 0
        %v448 = vsel %vm344, %v411, 0
        %v451 = vsel %vm344, %v412, 0
        %v454 = vsel %vm344, %v413, 0
        %v457 = vsel %vm344, %v414, 0
        %v460 = vsel %vm344, %v415, 0
        %v463 = vsel %vm344, %v416, 0
        %v466 = vsel %vm344, %v417, 0
        %v469 = vsel %vm344, %v418, 0
        %v472 = vsel %vm344, %v419, 0
        %v475 = vsel %vm344, %v420, 0
        %v478 = vsel %vm344, %v421, 0
        %v481 = vsel %vm344, %v422, 0
        %v484 = vsel %vm344, %v423, 0
        %v487 = vsel %vm344, %v424, 0
        %v490 = vsel %vm344, %v425, 0
        %v493 = vsel %vm344, %v426, 0
        %v496 = vsel %vm344, %v427, 0
        %v499 = vsel %vm344, %v428, 0
        %v502 = vsel %vm344, %v429, 0
        %v505 = vsel %vm344, %v430, 0
        %v508 = vsel %vm344, %v431, 0
        %v511 = vsel %vm344, %v432, 0
        %v514 = vsel %vm344, %v433, 0
        %v517 = vsel %vm344, %v434, 0
        %v520 = vsel %vm344, %v435, 0
        %v523 = vsel %vm344, %v436, 0
        %v526 = vsel %vm344, %v437, 0
        %v529 = vsel %vm344, %v438, 0
        %v532 = vsel %vm344, %v439, 0
        %v535 = vsel %vm344, %v440, 0
        %v538 = vsel %vm344, %v441, 0
        %vm540 = vcmask 1043456
        %v542 = vsel %vm540, %v443, 0
        %544 = vmatprep.subr.mxu0 0.0
        %545 = vmatpush1.msra.mxu0 %v542
        %546 = vmatprep.subr.mxu0 0.0
        %547 = vmatpush1.msra.mxu0 0.0
        %548 = vmatprep.subr.mxu0 0.0
        %549 = vmatpush1.msra.mxu0 0.0
        %550 = vmatprep.subr.mxu0 0.0
        %551 = vmatpush1.msra.mxu0 0.0
        %552 = vmatprep.subr.mxu0 0.0
        %553 = vmatpush1.msra.mxu0 0.0
        %554 = vmatprep.subr.mxu0 0.0
        %555 = vmatpush1.msra.mxu0 0.0
        %556 = vmatprep.subr.mxu0 0.0
        %557 = vmatpush1.msra.mxu0 0.0
        %558 = vmatprep.subr.mxu0 0.0
        %559 = vmatpush1.msra.mxu0 0.0
        %560 = vmatprep.subr.mxu0 0.0
        %561 = vmatpush1.msra.mxu0 0.0
        %562 = vmatprep.subr.mxu0 0.0
        %563 = vmatpush1.msra.mxu0 0.0
        %564 = vmatprep.subr.mxu0 0.0
        %565 = vmatpush1.msra.mxu0 0.0
        %566 = vmatprep.subr.mxu0 0.0
        %567 = vmatpush1.msra.mxu0 0.0
        %568 = vmatprep.subr.mxu0 0.0
        %569 = vmatpush1.msra.mxu0 0.0
        %570 = vmatprep.subr.mxu0 0.0
        %571 = vmatpush1.msra.mxu0 0.0
        %572 = vmatprep.subr.mxu0 0.0
        %573 = vmatpush1.msra.mxu0 0.0
        %574 = vmatprep.subr.mxu0 0.0
        %575 = vmatpush1.msra.mxu0 0.0
        %576 = vmatprep.subr.mxu0 0.0
        %577 = vmatpush1.msra.mxu0 0.0
        %578 = vmatprep.subr.mxu0 0.0
        %579 = vmatpush1.msra.mxu0 0.0
        %580 = vmatprep.subr.mxu0 0.0
        %581 = vmatpush1.msra.mxu0 0.0
        %582 = vmatprep.subr.mxu0 0.0
        %583 = vmatpush1.msra.mxu0 0.0
        %584 = vmatprep.subr.mxu0 0.0
        %585 = vmatpush1.msra.mxu0 0.0
        %586 = vmatprep.subr.mxu0 0.0
        %587 = vmatpush1.msra.mxu0 0.0
        %588 = vmatprep.subr.mxu0 0.0
        %589 = vmatpush1.msra.mxu0 0.0
        %590 = vmatprep.subr.mxu0 0.0
        %591 = vmatpush1.msra.mxu0 0.0
        %592 = vmatprep.subr.mxu0 0.0
        %593 = vmatpush1.msra.mxu0 0.0
        %594 = vmatprep.subr.mxu0 0.0
        %595 = vmatpush1.msra.mxu0 0.0
        %596 = vmatprep.subr.mxu0 0.0
        %597 = vmatpush1.msra.mxu0 0.0
        %598 = vmatprep.subr.mxu0 0.0
        %599 = vmatpush1.msra.mxu0 0.0
        %600 = vmatprep.subr.mxu0 0.0
        %601 = vmatpush1.msra.mxu0 0.0
        %602 = vmatprep.subr.mxu0 0.0
        %603 = vmatpush1.msra.mxu0 0.0
        %604 = vmatprep.subr.mxu0 0.0
        %605 = vmatpush1.msra.mxu0 0.0
        %606 = vmatprep.subr.mxu0 0.0
        %607 = vmatpush1.msra.mxu0 0.0
        %608 = vmatprep.mubr.f32.mxu0 0.0
        %609 = vmatmul.mubr.f32.gmra.mrb[0].mxu0 %v445
        %v610 = vpop.f32.mrb[0].mxu0
        %v611 = vadd.f32 0.0, %v610
        %v612 = vpop.f32.mrb[0].mxu0
        %613 = vmatprep.mubr.f32.mxu0 0.0
        %614 = vmatmul.mubr.f32.gmra.mrb[0].mxu0 %v448
        %v615 = vpop.f32.mrb[0].mxu0
        %v616 = vadd.f32 0.0, %v615
        %v617 = vpop.f32.mrb[0].mxu0
        %618 = vmatprep.mubr.f32.mxu0 0.0
        %619 = vmatmul.mubr.f32.gmra.mrb[0].mxu0 %v451
        %v620 = vpop.f32.mrb[0].mxu0
        %v621 = vadd.f32 0.0, %v620
        %v622 = vpop.f32.mrb[0].mxu0
        %623 = vmatprep.mubr.f32.mxu0 0.0
        %624 = vmatmul.mubr.f32.gmra.mrb[0].mxu0 %v454
        %v625 = vpop.f32.mrb[0].mxu0
        %v626 = vadd.f32 0.0, %v625
        %v627 = vpop.f32.mrb[0].mxu0
        %628 = vmatprep.mubr.f32.mxu0 0.0
        %629 = vmatmul.mubr.f32.gmra.mrb[0].mxu0 %v457
        %v630 = vpop.f32.mrb[0].mxu0
        %v631 = vadd.f32 0.0, %v630
        %v632 = vpop.f32.mrb[0].mxu0
        %633 = vmatprep.mubr.f32.mxu0 0.0
        %634 = vmatmul.mubr.f32.gmra.mrb[0].mxu0 %v460
        %v635 = vpop.f32.mrb[0].mxu0
        %v636 = vadd.f32 0.0, %v635
        %v637 = vpop.f32.mrb[0].mxu0
        %638 = vmatprep.mubr.f32.mxu0 0.0
        %639 = vmatmul.mubr.f32.gmra.mrb[0].mxu0 %v463
        %v640 = vpop.f32.mrb[0].mxu0
        %v641 = vadd.f32 0.0, %v640
        %v642 = vpop.f32.mrb[0].mxu0
        %643 = vmatprep.mubr.f32.mxu0 0.0
        %644 = vmatmul.mubr.f32.gmra.mrb[0].mxu0 %v466
        %v645 = vpop.f32.mrb[0].mxu0
        %v646 = vadd.f32 0.0, %v645
        %v647 = vpop.f32.mrb[0].mxu0
        %648 = vmatprep.mubr.f32.mxu0 0.0
        %649 = vmatmul.mubr.f32.gmra.mrb[0].mxu0 %v469
        %v650 = vpop.f32.mrb[0].mxu0
        %v651 = vadd.f32 0.0, %v650
        %v652 = vpop.f32.mrb[0].mxu0
        %653 = vmatprep.mubr.f32.mxu0 0.0
        %654 = vmatmul.mubr.f32.gmra.mrb[0].mxu0 %v472
        %v655 = vpop.f32.mrb[0].mxu0
        %v656 = vadd.f32 0.0, %v655
        %v657 = vpop.f32.mrb[0].mxu0
        %658 = vmatprep.mubr.f32.mxu0 0.0
        %659 = vmatmul.mubr.f32.gmra.mrb[0].mxu0 %v475
        %v660 = vpop.f32.mrb[0].mxu0
        %v661 = vadd.f32 0.0, %v660
        %v662 = vpop.f32.mrb[0].mxu0
        %663 = vmatprep.mubr.f32.mxu0 0.0
        %664 = vmatmul.mubr.f32.gmra.mrb[0].mxu0 %v478
        %v665 = vpop.f32.mrb[0].mxu0
        %v666 = vadd.f32 0.0, %v665
        %v667 = vpop.f32.mrb[0].mxu0
        %668 = vmatprep.mubr.f32.mxu0 0.0
        %669 = vmatmul.mubr.f32.gmra.mrb[0].mxu0 %v481
        %v670 = vpop.f32.mrb[0].mxu0
        %v671 = vadd.f32 0.0, %v670
        %v672 = vpop.f32.mrb[0].mxu0
        %673 = vmatprep.mubr.f32.mxu0 0.0
        %674 = vmatmul.mubr.f32.gmra.mrb[0].mxu0 %v484
        %v675 = vpop.f32.mrb[0].mxu0
        %v676 = vadd.f32 0.0, %v675
        %v677 = vpop.f32.mrb[0].mxu0
        %678 = vmatprep.mubr.f32.mxu0 0.0
        %679 = vmatmul.mubr.f32.gmra.mrb[0].mxu0 %v487
        %v680 = vpop.f32.mrb[0].mxu0
        %v681 = vadd.f32 0.0, %v680
        %v682 = vpop.f32.mrb[0].mxu0
        %683 = vmatprep.mubr.f32.mxu0 0.0
        %684 = vmatmul.mubr.f32.gmra.mrb[0].mxu0 %v490
        %v685 = vpop.f32.mrb[0].mxu0
        %v686 = vadd.f32 0.0, %v685
        %v687 = vpop.f32.mrb[0].mxu0
        %688 = vmatprep.mubr.f32.mxu0 0.0
        %689 = vmatmul.mubr.f32.gmra.mrb[0].mxu0 %v493
        %v690 = vpop.f32.mrb[0].mxu0
        %v691 = vadd.f32 0.0, %v690
        %v692 = vpop.f32.mrb[0].mxu0
        %693 = vmatprep.mubr.f32.mxu0 0.0
        %694 = vmatmul.mubr.f32.gmra.mrb[0].mxu0 %v496
        %v695 = vpop.f32.mrb[0].mxu0
        %v696 = vadd.f32 0.0, %v695
        %v697 = vpop.f32.mrb[0].mxu0
        %698 = vmatprep.mubr.f32.mxu0 0.0
        %699 = vmatmul.mubr.f32.gmra.mrb[0].mxu0 %v499
        %v700 = vpop.f32.mrb[0].mxu0
        %v701 = vadd.f32 0.0, %v700
        %v702 = vpop.f32.mrb[0].mxu0
        %703 = vmatprep.mubr.f32.mxu0 0.0
        %704 = vmatmul.mubr.f32.gmra.mrb[0].mxu0 %v502
        %v705 = vpop.f32.mrb[0].mxu0
        %v706 = vadd.f32 0.0, %v705
        %v707 = vpop.f32.mrb[0].mxu0
        %708 = vmatprep.mubr.f32.mxu0 0.0
        %709 = vmatmul.mubr.f32.gmra.mrb[0].mxu0 %v505
        %v710 = vpop.f32.mrb[0].mxu0
        %v711 = vadd.f32 0.0, %v710
        %v712 = vpop.f32.mrb[0].mxu0
        %713 = vmatprep.mubr.f32.mxu0 0.0
        %714 = vmatmul.mubr.f32.gmra.mrb[0].mxu0 %v508
        %v715 = vpop.f32.mrb[0].mxu0
        %v716 = vadd.f32 0.0, %v715
        %v717 = vpop.f32.mrb[0].mxu0
        %718 = vmatprep.mubr.f32.mxu0 0.0
        %719 = vmatmul.mubr.f32.gmra.mrb[0].mxu0 %v511
        %v720 = vpop.f32.mrb[0].mxu0
        %v721 = vadd.f32 0.0, %v720
        %v722 = vpop.f32.mrb[0].mxu0
        %723 = vmatprep.mubr.f32.mxu0 0.0
        %724 = vmatmul.mubr.f32.gmra.mrb[0].mxu0 %v514
        %v725 = vpop.f32.mrb[0].mxu0
        %v726 = vadd.f32 0.0, %v725
        %v727 = vpop.f32.mrb[0].mxu0
        %728 = vmatprep.mubr.f32.mxu0 0.0
        %729 = vmatmul.mubr.f32.gmra.mrb[0].mxu0 %v517
        %v730 = vpop.f32.mrb[0].mxu0
        %v731 = vadd.f32 0.0, %v730
        %v732 = vpop.f32.mrb[0].mxu0
        %733 = vmatprep.mubr.f32.mxu0 0.0
        %734 = vmatmul.mubr.f32.gmra.mrb[0].mxu0 %v520
        %v735 = vpop.f32.mrb[0].mxu0
        %v736 = vadd.f32 0.0, %v735
        %v737 = vpop.f32.mrb[0].mxu0
        %738 = vmatprep.mubr.f32.mxu0 0.0
        %739 = vmatmul.mubr.f32.gmra.mrb[0].mxu0 %v523
        %v740 = vpop.f32.mrb[0].mxu0
        %v741 = vadd.f32 0.0, %v740
        %v742 = vpop.f32.mrb[0].mxu0
        %743 = vmatprep.mubr.f32.mxu0 0.0
        %744 = vmatmul.mubr.f32.gmra.mrb[0].mxu0 %v526
        %v745 = vpop.f32.mrb[0].mxu0
        %v746 = vadd.f32 0.0, %v745
        %v747 = vpop.f32.mrb[0].mxu0
        %748 = vmatprep.mubr.f32.mxu0 0.0
        %749 = vmatmul.mubr.f32.gmra.mrb[0].mxu0 %v529
        %v750 = vpop.f32.mrb[0].mxu0
        %v751 = vadd.f32 0.0, %v750
        %v752 = vpop.f32.mrb[0].mxu0
        %753 = vmatprep.mubr.f32.mxu0 0.0
        %754 = vmatmul.mubr.f32.gmra.mrb[0].mxu0 %v532
        %v755 = vpop.f32.mrb[0].mxu0
        %v756 = vadd.f32 0.0, %v755
        %v757 = vpop.f32.mrb[0].mxu0
        %758 = vmatprep.mubr.f32.mxu0 0.0
        %759 = vmatmul.mubr.f32.gmra.mrb[0].mxu0 %v535
        %v760 = vpop.f32.mrb[0].mxu0
        %v761 = vadd.f32 0.0, %v760
        %v762 = vpop.f32.mrb[0].mxu0
        %763 = vmatprep.mubr.f32.mxu0 0.0
        %764 = vmatmul.mubr.f32.gmra.mrb[0].mxu0 %v538
        %v765 = vpop.f32.mrb[0].mxu0
        %v766 = vadd.f32 0.0, %v765
        %v767 = vpop.f32.mrb[0].mxu0
        %768 = vdwg.mxu0
        %v770 = vsel %vm344, %v377, 0
        %v773 = vsel %vm344, %v378, 0
        %v776 = vsel %vm344, %v379, 0
        %v779 = vsel %vm344, %v380, 0
        %v782 = vsel %vm344, %v381, 0
        %v785 = vsel %vm344, %v382, 0
        %v788 = vsel %vm344, %v383, 0
        %v791 = vsel %vm344, %v384, 0
        %v794 = vsel %vm344, %v385, 0
        %v797 = vsel %vm344, %v386, 0
        %v800 = vsel %vm344, %v387, 0
        %v803 = vsel %vm344, %v388, 0
        %v806 = vsel %vm344, %v389, 0
        %v809 = vsel %vm344, %v390, 0
        %v812 = vsel %vm344, %v391, 0
        %v815 = vsel %vm344, %v392, 0
        %v818 = vsel %vm344, %v393, 0
        %v821 = vsel %vm344, %v394, 0
        %v824 = vsel %vm344, %v395, 0
        %v827 = vsel %vm344, %v396, 0
        %v830 = vsel %vm344, %v397, 0
        %v833 = vsel %vm344, %v398, 0
        %v836 = vsel %vm344, %v399, 0
        %v839 = vsel %vm344, %v400, 0
        %v842 = vsel %vm344, %v401, 0
        %v845 = vsel %vm344, %v402, 0
        %v848 = vsel %vm344, %v403, 0
        %v851 = vsel %vm344, %v404, 0
        %v854 = vsel %vm344, %v405, 0
        %v857 = vsel %vm344, %v406, 0
        %v860 = vsel %vm344, %v407, 0
        %v863 = vsel %vm344, %v408, 0
        %v866 = vsel %vm540, %v409, 0
        %868 = vmatprep.subr.mxu0 0.0
        %869 = vmatpush1.msra.mxu0 %v866
        %870 = vmatprep.subr.mxu0 0.0
        %871 = vmatpush1.msra.mxu0 0.0
        %872 = vmatprep.subr.mxu0 0.0
        %873 = vmatpush1.msra.mxu0 0.0
        %874 = vmatprep.subr.mxu0 0.0
        %875 = vmatpush1.msra.mxu0 0.0
        %876 = vmatprep.subr.mxu0 0.0
        %877 = vmatpush1.msra.mxu0 0.0
        %878 = vmatprep.subr.mxu0 0.0
        %879 = vmatpush1.msra.mxu0 0.0
        %880 = vmatprep.subr.mxu0 0.0
        %881 = vmatpush1.msra.mxu0 0.0
        %882 = vmatprep.subr.mxu0 0.0
        %883 = vmatpush1.msra.mxu0 0.0
        %884 = vmatprep.subr.mxu0 0.0
        %885 = vmatpush1.msra.mxu0 0.0
        %886 = vmatprep.subr.mxu0 0.0
        %887 = vmatpush1.msra.mxu0 0.0
        %888 = vmatprep.subr.mxu0 0.0
        %889 = vmatpush1.msra.mxu0 0.0
        %890 = vmatprep.subr.mxu0 0.0
        %891 = vmatpush1.msra.mxu0 0.0
        %892 = vmatprep.subr.mxu0 0.0
        %893 = vmatpush1.msra.mxu0 0.0
        %894 = vmatprep.subr.mxu0 0.0
        %895 = vmatpush1.msra.mxu0 0.0
        %896 = vmatprep.subr.mxu0 0.0
        %897 = vmatpush1.msra.mxu0 0.0
        %898 = vmatprep.subr.mxu0 0.0
        %899 = vmatpush1.msra.mxu0 0.0
        %900 = vmatprep.subr.mxu0 0.0
        %901 = vmatpush1.msra.mxu0 0.0
        %902 = vmatprep.subr.mxu0 0.0
        %903 = vmatpush1.msra.mxu0 0.0
        %904 = vmatprep.subr.mxu0 0.0
        %905 = vmatpush1.msra.mxu0 0.0
        %906 = vmatprep.subr.mxu0 0.0
        %907 = vmatpush1.msra.mxu0 0.0
        %908 = vmatprep.subr.mxu0 0.0
        %909 = vmatpush1.msra.mxu0 0.0
        %910 = vmatprep.subr.mxu0 0.0
        %911 = vmatpush1.msra.mxu0 0.0
        %912 = vmatprep.subr.mxu0 0.0
        %913 = vmatpush1.msra.mxu0 0.0
        %914 = vmatprep.subr.mxu0 0.0
        %915 = vmatpush1.msra.mxu0 0.0
        %916 = vmatprep.subr.mxu0 0.0
        %917 = vmatpush1.msra.mxu0 0.0
        %918 = vmatprep.subr.mxu0 0.0
        %919 = vmatpush1.msra.mxu0 0.0
        %920 = vmatprep.subr.mxu0 0.0
        %921 = vmatpush1.msra.mxu0 0.0
        %922 = vmatprep.subr.mxu0 0.0
        %923 = vmatpush1.msra.mxu0 0.0
        %924 = vmatprep.subr.mxu0 0.0
        %925 = vmatpush1.msra.mxu0 0.0
        %926 = vmatprep.subr.mxu0 0.0
        %927 = vmatpush1.msra.mxu0 0.0
        %928 = vmatprep.subr.mxu0 0.0
        %929 = vmatpush1.msra.mxu0 0.0
        %930 = vmatprep.subr.mxu0 0.0
        %931 = vmatpush1.msra.mxu0 0.0
        %932 = vmatprep.mubr.f32.mxu0 0.0
        %933 = vmatmul.mubr.f32.gmra.mrb[0].mxu0 %v770
        %v934 = vpop.f32.mrb[0].mxu0
        %v935 = vadd.f32 %v611, %v934
        %v936 = vpop.f32.mrb[0].mxu0
        %937 = vmatprep.mubr.f32.mxu0 0.0
        %938 = vmatmul.mubr.f32.gmra.mrb[0].mxu0 %v773
        %v939 = vpop.f32.mrb[0].mxu0
        %v940 = vadd.f32 %v616, %v939
        %v941 = vpop.f32.mrb[0].mxu0
        %942 = vmatprep.mubr.f32.mxu0 0.0
        %943 = vmatmul.mubr.f32.gmra.mrb[0].mxu0 %v776
        %v944 = vpop.f32.mrb[0].mxu0
        %v945 = vadd.f32 %v621, %v944
        %v946 = vpop.f32.mrb[0].mxu0
        %947 = vmatprep.mubr.f32.mxu0 0.0
        %948 = vmatmul.mubr.f32.gmra.mrb[0].mxu0 %v779
        %v949 = vpop.f32.mrb[0].mxu0
        %v950 = vadd.f32 %v626, %v949
        %v951 = vpop.f32.mrb[0].mxu0
        %952 = vmatprep.mubr.f32.mxu0 0.0
        %953 = vmatmul.mubr.f32.gmra.mrb[0].mxu0 %v782
        %v954 = vpop.f32.mrb[0].mxu0
        %v955 = vadd.f32 %v631, %v954
        %v956 = vpop.f32.mrb[0].mxu0
        %957 = vmatprep.mubr.f32.mxu0 0.0
        %958 = vmatmul.mubr.f32.gmra.mrb[0].mxu0 %v785
        %v959 = vpop.f32.mrb[0].mxu0
        %v960 = vadd.f32 %v636, %v959
        %v961 = vpop.f32.mrb[0].mxu0
        %962 = vmatprep.mubr.f32.mxu0 0.0
        %963 = vmatmul.mubr.f32.gmra.mrb[0].mxu0 %v788
        %v964 = vpop.f32.mrb[0].mxu0
        %v965 = vadd.f32 %v641, %v964
        %v966 = vpop.f32.mrb[0].mxu0
        %967 = vmatprep.mubr.f32.mxu0 0.0
        %968 = vmatmul.mubr.f32.gmra.mrb[0].mxu0 %v791
        %v969 = vpop.f32.mrb[0].mxu0
        %v970 = vadd.f32 %v646, %v969
        %v971 = vpop.f32.mrb[0].mxu0
        %972 = vmatprep.mubr.f32.mxu0 0.0
        %973 = vmatmul.mubr.f32.gmra.mrb[0].mxu0 %v794
        %v974 = vpop.f32.mrb[0].mxu0
        %v975 = vadd.f32 %v651, %v974
        %v976 = vpop.f32.mrb[0].mxu0
        %977 = vmatprep.mubr.f32.mxu0 0.0
        %978 = vmatmul.mubr.f32.gmra.mrb[0].mxu0 %v797
        %v979 = vpop.f32.mrb[0].mxu0
        %v980 = vadd.f32 %v656, %v979
        %v981 = vpop.f32.mrb[0].mxu0
        %982 = vmatprep.mubr.f32.mxu0 0.0
        %983 = vmatmul.mubr.f32.gmra.mrb[0].mxu0 %v800
        %v984 = vpop.f32.mrb[0].mxu0
        %v985 = vadd.f32 %v661, %v984
        %v986 = vpop.f32.mrb[0].mxu0
        %987 = vmatprep.mubr.f32.mxu0 0.0
        %988 = vmatmul.mubr.f32.gmra.mrb[0].mxu0 %v803
        %v989 = vpop.f32.mrb[0].mxu0
        %v990 = vadd.f32 %v666, %v989
        %v991 = vpop.f32.mrb[0].mxu0
        %992 = vmatprep.mubr.f32.mxu0 0.0
        %993 = vmatmul.mubr.f32.gmra.mrb[0].mxu0 %v806
        %v994 = vpop.f32.mrb[0].mxu0
        %v995 = vadd.f32 %v671, %v994
        %v996 = vpop.f32.mrb[0].mxu0
        %997 = vmatprep.mubr.f32.mxu0 0.0
        %998 = vmatmul.mubr.f32.gmra.mrb[0].mxu0 %v809
        %v999 = vpop.f32.mrb[0].mxu0
        %v1000 = vadd.f32 %v676, %v999
        %v1001 = vpop.f32.mrb[0].mxu0
        %1002 = vmatprep.mubr.f32.mxu0 0.0
        %1003 = vmatmul.mubr.f32.gmra.mrb[0].mxu0 %v812
        %v1004 = vpop.f32.mrb[0].mxu0
        %v1005 = vadd.f32 %v681, %v1004
        %v1006 = vpop.f32.mrb[0].mxu0
        %1007 = vmatprep.mubr.f32.mxu0 0.0
        %1008 = vmatmul.mubr.f32.gmra.mrb[0].mxu0 %v815
        %v1009 = vpop.f32.mrb[0].mxu0
        %v1010 = vadd.f32 %v686, %v1009
        %v1011 = vpop.f32.mrb[0].mxu0
        %1012 = vmatprep.mubr.f32.mxu0 0.0
        %1013 = vmatmul.mubr.f32.gmra.mrb[0].mxu0 %v818
        %v1014 = vpop.f32.mrb[0].mxu0
        %v1015 = vadd.f32 %v691, %v1014
        %v1016 = vpop.f32.mrb[0].mxu0
        %1017 = vmatprep.mubr.f32.mxu0 0.0
        %1018 = vmatmul.mubr.f32.gmra.mrb[0].mxu0 %v821
        %v1019 = vpop.f32.mrb[0].mxu0
        %v1020 = vadd.f32 %v696, %v1019
        %v1021 = vpop.f32.mrb[0].mxu0
        %1022 = vmatprep.mubr.f32.mxu0 0.0
        %1023 = vmatmul.mubr.f32.gmra.mrb[0].mxu0 %v824
        %v1024 = vpop.f32.mrb[0].mxu0
        %v1025 = vadd.f32 %v701, %v1024
        %v1026 = vpop.f32.mrb[0].mxu0
        %1027 = vmatprep.mubr.f32.mxu0 0.0
        %1028 = vmatmul.mubr.f32.gmra.mrb[0].mxu0 %v827
        %v1029 = vpop.f32.mrb[0].mxu0
        %v1030 = vadd.f32 %v706, %v1029
        %v1031 = vpop.f32.mrb[0].mxu0
        %1032 = vmatprep.mubr.f32.mxu0 0.0
        %1033 = vmatmul.mubr.f32.gmra.mrb[0].mxu0 %v830
        %v1034 = vpop.f32.mrb[0].mxu0
        %v1035 = vadd.f32 %v711, %v1034
        %v1036 = vpop.f32.mrb[0].mxu0
        %1037 = vmatprep.mubr.f32.mxu0 0.0
        %1038 = vmatmul.mubr.f32.gmra.mrb[0].mxu0 %v833
        %v1039 = vpop.f32.mrb[0].mxu0
        %v1040 = vadd.f32 %v716, %v1039
        %v1041 = vpop.f32.mrb[0].mxu0
        %1042 = vmatprep.mubr.f32.mxu0 0.0
        %1043 = vmatmul.mubr.f32.gmra.mrb[0].mxu0 %v836
        %v1044 = vpop.f32.mrb[0].mxu0
        %v1045 = vadd.f32 %v721, %v1044
        %v1046 = vpop.f32.mrb[0].mxu0
        %1047 = vmatprep.mubr.f32.mxu0 0.0
        %1048 = vmatmul.mubr.f32.gmra.mrb[0].mxu0 %v839
        %v1049 = vpop.f32.mrb[0].mxu0
        %v1050 = vadd.f32 %v726, %v1049
        %v1051 = vpop.f32.mrb[0].mxu0
        %1052 = vmatprep.mubr.f32.mxu0 0.0
        %1053 = vmatmul.mubr.f32.gmra.mrb[0].mxu0 %v842
        %v1054 = vpop.f32.mrb[0].mxu0
        %v1055 = vadd.f32 %v731, %v1054
        %v1056 = vpop.f32.mrb[0].mxu0
        %1057 = vmatprep.mubr.f32.mxu0 0.0
        %1058 = vmatmul.mubr.f32.gmra.mrb[0].mxu0 %v845
        %v1059 = vpop.f32.mrb[0].mxu0
        %v1060 = vadd.f32 %v736, %v1059
        %v1061 = vpop.f32.mrb[0].mxu0
        %1062 = vmatprep.mubr.f32.mxu0 0.0
        %1063 = vmatmul.mubr.f32.gmra.mrb[0].mxu0 %v848
        %v1064 = vpop.f32.mrb[0].mxu0
        %v1065 = vadd.f32 %v741, %v1064
        %v1066 = vpop.f32.mrb[0].mxu0
        %1067 = vmatprep.mubr.f32.mxu0 0.0
        %1068 = vmatmul.mubr.f32.gmra.mrb[0].mxu0 %v851
        %v1069 = vpop.f32.mrb[0].mxu0
        %v1070 = vadd.f32 %v746, %v1069
        %v1071 = vpop.f32.mrb[0].mxu0
        %1072 = vmatprep.mubr.f32.mxu0 0.0
        %1073 = vmatmul.mubr.f32.gmra.mrb[0].mxu0 %v854
        %v1074 = vpop.f32.mrb[0].mxu0
        %v1075 = vadd.f32 %v751, %v1074
        %v1076 = vpop.f32.mrb[0].mxu0
        %1077 = vmatprep.mubr.f32.mxu0 0.0
        %1078 = vmatmul.mubr.f32.gmra.mrb[0].mxu0 %v857
        %v1079 = vpop.f32.mrb[0].mxu0
        %v1080 = vadd.f32 %v756, %v1079
        %v1081 = vpop.f32.mrb[0].mxu0
        %1082 = vmatprep.mubr.f32.mxu0 0.0
        %1083 = vmatmul.mubr.f32.gmra.mrb[0].mxu0 %v860
        %v1084 = vpop.f32.mrb[0].mxu0
        %v1085 = vadd.f32 %v761, %v1084
        %v1086 = vpop.f32.mrb[0].mxu0
        %1087 = vmatprep.mubr.f32.mxu0 0.0
        %1088 = vmatmul.mubr.f32.gmra.mrb[0].mxu0 %v863
        %v1089 = vpop.f32.mrb[0].mxu0
        %v1090 = vadd.f32 %v766, %v1089
        %v1091 = vpop.f32.mrb[0].mxu0
        %1092 = vdwg.mxu0
        %v1093 = vld [vmem:[#allocation2 + $0x4] sm:$0xff]
        %v1094 = vld [vmem:[#allocation2 + $0xc] sm:$0xff]
        %v1095 = vld [vmem:[#allocation2 + $0x1c] sm:$0xff]
        %v1096 = vld [vmem:[#allocation2 + $0x24] sm:$0xff]
        %v1097 = vld [vmem:[#allocation2 + $0x34] sm:$0xff]
        %v1098 = vld [vmem:[#allocation2 + $0x3c] sm:$0xff]
        %v1099 = vld [vmem:[#allocation2 + $0x4c] sm:$0xff]
        %v1100 = vld [vmem:[#allocation2 + $0x54] sm:$0xff]
        %v1101 = vld [vmem:[#allocation2 + $0x64] sm:$0xff]
        %v1102 = vld [vmem:[#allocation2 + $0x6c] sm:$0xff]
        %v1103 = vld [vmem:[#allocation2 + $0x7c] sm:$0xff]
        %v1104 = vld [vmem:[#allocation2 + $0x84] sm:$0xff]
        %v1105 = vld [vmem:[#allocation2 + $0x94] sm:$0xff]
        %v1106 = vld [vmem:[#allocation2 + $0x9c] sm:$0xff]
        %v1107 = vld [vmem:[#allocation2 + $0xac] sm:$0xff]
        %v1108 = vld [vmem:[#allocation2 + $0xb4] sm:$0xff]
        %v1109 = vld [vmem:[#allocation2 + $0xc4] sm:$0xff]
        %v1110 = vld [vmem:[#allocation2 + $0xcc] sm:$0xff]
        %v1111 = vld [vmem:[#allocation2 + $0xdc] sm:$0xff]
        %v1112 = vld [vmem:[#allocation2 + $0xe4] sm:$0xff]
        %v1113 = vld [vmem:[#allocation2 + $0xf4] sm:$0xff]
        %v1114 = vld [vmem:[#allocation2 + $0xfc] sm:$0xff]
        %v1115 = vld [vmem:[#allocation2 + $0x10c] sm:$0xff]
        %v1116 = vld [vmem:[#allocation2 + $0x114] sm:$0xff]
        %v1117 = vld [vmem:[#allocation2 + $0x124] sm:$0xff]
        %v1118 = vld [vmem:[#allocation2 + $0x12c] sm:$0xff]
        %v1119 = vld [vmem:[#allocation2 + $0x13c] sm:$0xff]
        %v1120 = vld [vmem:[#allocation2 + $0x144] sm:$0xff]
        %v1121 = vld [vmem:[#allocation2 + $0x154] sm:$0xff]
        %v1122 = vld [vmem:[#allocation2 + $0x15c] sm:$0xff]
        %v1123 = vld [vmem:[#allocation2 + $0x16c] sm:$0xff]
        %v1124 = vld [vmem:[#allocation2 + $0x174] sm:$0xff]
        %s1125 = scalar_lea.vmem %s232, 8
        %v1126 = vld [vmem:[%s1125] sm:$0xf]
        %v1128 = vsel %vm344, %v1093, 0
        %v1131 = vsel %vm344, %v1094, 0
        %v1134 = vsel %vm344, %v1095, 0
        %v1137 = vsel %vm344, %v1096, 0
        %v1140 = vsel %vm344, %v1097, 0
        %v1143 = vsel %vm344, %v1098, 0
        %v1146 = vsel %vm344, %v1099, 0
        %v1149 = vsel %vm344, %v1100, 0
        %v1152 = vsel %vm344, %v1101, 0
        %v1155 = vsel %vm344, %v1102, 0
        %v1158 = vsel %vm344, %v1103, 0
        %v1161 = vsel %vm344, %v1104, 0
        %v1164 = vsel %vm344, %v1105, 0
        %v1167 = vsel %vm344, %v1106, 0
        %v1170 = vsel %vm344, %v1107, 0
        %v1173 = vsel %vm344, %v1108, 0
        %v1176 = vsel %vm344, %v1109, 0
        %v1179 = vsel %vm344, %v1110, 0
        %v1182 = vsel %vm344, %v1111, 0
        %v1185 = vsel %vm344, %v1112, 0
        %v1188 = vsel %vm344, %v1113, 0
        %v1191 = vsel %vm344, %v1114, 0
        %v1194 = vsel %vm344, %v1115, 0
        %v1197 = vsel %vm344, %v1116, 0
        %v1200 = vsel %vm344, %v1117, 0
        %v1203 = vsel %vm344, %v1118, 0
        %v1206 = vsel %vm344, %v1119, 0
        %v1209 = vsel %vm344, %v1120, 0
        %v1212 = vsel %vm344, %v1121, 0
        %v1215 = vsel %vm344, %v1122, 0
        %v1218 = vsel %vm344, %v1123, 0
        %v1221 = vsel %vm344, %v1124, 0
        %v1224 = vsel %vm540, %v1126, 0
        %1226 = vmatprep.subr.mxu0 0.0
        %1227 = vmatpush1.msra.mxu0 %v1224
        %1228 = vmatprep.subr.mxu0 0.0
        %1229 = vmatpush1.msra.mxu0 0.0
        %1230 = vmatprep.subr.mxu0 0.0
        %1231 = vmatpush1.msra.mxu0 0.0
        %1232 = vmatprep.subr.mxu0 0.0
        %1233 = vmatpush1.msra.mxu0 0.0
        %1234 = vmatprep.subr.mxu0 0.0
        %1235 = vmatpush1.msra.mxu0 0.0
        %1236 = vmatprep.subr.mxu0 0.0
        %1237 = vmatpush1.msra.mxu0 0.0
        %1238 = vmatprep.subr.mxu0 0.0
        %1239 = vmatpush1.msra.mxu0 0.0
        %1240 = vmatprep.subr.mxu0 0.0
        %1241 = vmatpush1.msra.mxu0 0.0
        %1242 = vmatprep.subr.mxu0 0.0
        %1243 = vmatpush1.msra.mxu0 0.0
        %1244 = vmatprep.subr.mxu0 0.0
        %1245 = vmatpush1.msra.mxu0 0.0
        %1246 = vmatprep.subr.mxu0 0.0
        %1247 = vmatpush1.msra.mxu0 0.0
        %1248 = vmatprep.subr.mxu0 0.0
        %1249 = vmatpush1.msra.mxu0 0.0
        %1250 = vmatprep.subr.mxu0 0.0
        %1251 = vmatpush1.msra.mxu0 0.0
        %1252 = vmatprep.subr.mxu0 0.0
        %1253 = vmatpush1.msra.mxu0 0.0
        %1254 = vmatprep.subr.mxu0 0.0
        %1255 = vmatpush1.msra.mxu0 0.0
        %1256 = vmatprep.subr.mxu0 0.0
        %1257 = vmatpush1.msra.mxu0 0.0
        %1258 = vmatprep.subr.mxu0 0.0
        %1259 = vmatpush1.msra.mxu0 0.0
        %1260 = vmatprep.subr.mxu0 0.0
        %1261 = vmatpush1.msra.mxu0 0.0
        %1262 = vmatprep.subr.mxu0 0.0
        %1263 = vmatpush1.msra.mxu0 0.0
        %1264 = vmatprep.subr.mxu0 0.0
        %1265 = vmatpush1.msra.mxu0 0.0
        %1266 = vmatprep.subr.mxu0 0.0
        %1267 = vmatpush1.msra.mxu0 0.0
        %1268 = vmatprep.subr.mxu0 0.0
        %1269 = vmatpush1.msra.mxu0 0.0
        %1270 = vmatprep.subr.mxu0 0.0
        %1271 = vmatpush1.msra.mxu0 0.0
        %1272 = vmatprep.subr.mxu0 0.0
        %1273 = vmatpush1.msra.mxu0 0.0
        %1274 = vmatprep.subr.mxu0 0.0
        %1275 = vmatpush1.msra.mxu0 0.0
        %1276 = vmatprep.subr.mxu0 0.0
        %1277 = vmatpush1.msra.mxu0 0.0
        %1278 = vmatprep.subr.mxu0 0.0
        %1279 = vmatpush1.msra.mxu0 0.0
        %1280 = vmatprep.subr.mxu0 0.0
        %1281 = vmatpush1.msra.mxu0 0.0
        %1282 = vmatprep.subr.mxu0 0.0
        %1283 = vmatpush1.msra.mxu0 0.0
        %1284 = vmatprep.subr.mxu0 0.0
        %1285 = vmatpush1.msra.mxu0 0.0
        %1286 = vmatprep.subr.mxu0 0.0
        %1287 = vmatpush1.msra.mxu0 0.0
        %1288 = vmatprep.subr.mxu0 0.0
        %1289 = vmatpush1.msra.mxu0 0.0
        %1290 = vmatprep.mubr.f32.mxu0 0.0
        %1291 = vmatmul.mubr.f32.gmra.mrb[0].mxu0 %v1128
        %v1292 = vpop.f32.mrb[0].mxu0
        %v1293 = vadd.f32 0.0, %v1292
        %v1294 = vpop.f32.mrb[0].mxu0
        %1295 = vmatprep.mubr.f32.mxu0 0.0
        %1296 = vmatmul.mubr.f32.gmra.mrb[0].mxu0 %v1131
        %v1297 = vpop.f32.mrb[0].mxu0
        %v1298 = vadd.f32 0.0, %v1297
        %v1299 = vpop.f32.mrb[0].mxu0
        %1300 = vmatprep.mubr.f32.mxu0 0.0
        %1301 = vmatmul.mubr.f32.gmra.mrb[0].mxu0 %v1134
        %v1302 = vpop.f32.mrb[0].mxu0
        %v1303 = vadd.f32 0.0, %v1302
        %v1304 = vpop.f32.mrb[0].mxu0
        %1305 = vmatprep.mubr.f32.mxu0 0.0
        %1306 = vmatmul.mubr.f32.gmra.mrb[0].mxu0 %v1137
        %v1307 = vpop.f32.mrb[0].mxu0
        %v1308 = vadd.f32 0.0, %v1307
        %v1309 = vpop.f32.mrb[0].mxu0
        %1310 = vmatprep.mubr.f32.mxu0 0.0
        %1311 = vmatmul.mubr.f32.gmra.mrb[0].mxu0 %v1140
        %v1312 = vpop.f32.mrb[0].mxu0
        %v1313 = vadd.f32 0.0, %v1312
        %v1314 = vpop.f32.mrb[0].mxu0
        %1315 = vmatprep.mubr.f32.mxu0 0.0
        %1316 = vmatmul.mubr.f32.gmra.mrb[0].mxu0 %v1143
        %v1317 = vpop.f32.mrb[0].mxu0
        %v1318 = vadd.f32 0.0, %v1317
        %v1319 = vpop.f32.mrb[0].mxu0
        %1320 = vmatprep.mubr.f32.mxu0 0.0
        %1321 = vmatmul.mubr.f32.gmra.mrb[0].mxu0 %v1146
        %v1322 = vpop.f32.mrb[0].mxu0
        %v1323 = vadd.f32 0.0, %v1322
        %v1324 = vpop.f32.mrb[0].mxu0
        %1325 = vmatprep.mubr.f32.mxu0 0.0
        %1326 = vmatmul.mubr.f32.gmra.mrb[0].mxu0 %v1149
        %v1327 = vpop.f32.mrb[0].mxu0
        %v1328 = vadd.f32 0.0, %v1327
        %v1329 = vpop.f32.mrb[0].mxu0
        %1330 = vmatprep.mubr.f32.mxu0 0.0
        %1331 = vmatmul.mubr.f32.gmra.mrb[0].mxu0 %v1152
        %v1332 = vpop.f32.mrb[0].mxu0
        %v1333 = vadd.f32 0.0, %v1332
        %v1334 = vpop.f32.mrb[0].mxu0
        %1335 = vmatprep.mubr.f32.mxu0 0.0
        %1336 = vmatmul.mubr.f32.gmra.mrb[0].mxu0 %v1155
        %v1337 = vpop.f32.mrb[0].mxu0
        %v1338 = vadd.f32 0.0, %v1337
        %v1339 = vpop.f32.mrb[0].mxu0
        %1340 = vmatprep.mubr.f32.mxu0 0.0
        %1341 = vmatmul.mubr.f32.gmra.mrb[0].mxu0 %v1158
        %v1342 = vpop.f32.mrb[0].mxu0
        %v1343 = vadd.f32 0.0, %v1342
        %v1344 = vpop.f32.mrb[0].mxu0
        %1345 = vmatprep.mubr.f32.mxu0 0.0
        %1346 = vmatmul.mubr.f32.gmra.mrb[0].mxu0 %v1161
        %v1347 = vpop.f32.mrb[0].mxu0
        %v1348 = vadd.f32 0.0, %v1347
        %v1349 = vpop.f32.mrb[0].mxu0
        %1350 = vmatprep.mubr.f32.mxu0 0.0
        %1351 = vmatmul.mubr.f32.gmra.mrb[0].mxu0 %v1164
        %v1352 = vpop.f32.mrb[0].mxu0
        %v1353 = vadd.f32 0.0, %v1352
        %v1354 = vpop.f32.mrb[0].mxu0
        %1355 = vmatprep.mubr.f32.mxu0 0.0
        %1356 = vmatmul.mubr.f32.gmra.mrb[0].mxu0 %v1167
        %v1357 = vpop.f32.mrb[0].mxu0
        %v1358 = vadd.f32 0.0, %v1357
        %v1359 = vpop.f32.mrb[0].mxu0
        %1360 = vmatprep.mubr.f32.mxu0 0.0
        %1361 = vmatmul.mubr.f32.gmra.mrb[0].mxu0 %v1170
        %v1362 = vpop.f32.mrb[0].mxu0
        %v1363 = vadd.f32 0.0, %v1362
        %v1364 = vpop.f32.mrb[0].mxu0
        %1365 = vmatprep.mubr.f32.mxu0 0.0
        %1366 = vmatmul.mubr.f32.gmra.mrb[0].mxu0 %v1173
        %v1367 = vpop.f32.mrb[0].mxu0
        %v1368 = vadd.f32 0.0, %v1367
        %v1369 = vpop.f32.mrb[0].mxu0
        %1370 = vmatprep.mubr.f32.mxu0 0.0
        %1371 = vmatmul.mubr.f32.gmra.mrb[0].mxu0 %v1176
        %v1372 = vpop.f32.mrb[0].mxu0
        %v1373 = vadd.f32 0.0, %v1372
        %v1374 = vpop.f32.mrb[0].mxu0
        %1375 = vmatprep.mubr.f32.mxu0 0.0
        %1376 = vmatmul.mubr.f32.gmra.mrb[0].mxu0 %v1179
        %v1377 = vpop.f32.mrb[0].mxu0
        %v1378 = vadd.f32 0.0, %v1377
        %v1379 = vpop.f32.mrb[0].mxu0
        %1380 = vmatprep.mubr.f32.mxu0 0.0
        %1381 = vmatmul.mubr.f32.gmra.mrb[0].mxu0 %v1182
        %v1382 = vpop.f32.mrb[0].mxu0
        %v1383 = vadd.f32 0.0, %v1382
        %v1384 = vpop.f32.mrb[0].mxu0
        %1385 = vmatprep.mubr.f32.mxu0 0.0
        %1386 = vmatmul.mubr.f32.gmra.mrb[0].mxu0 %v1185
        %v1387 = vpop.f32.mrb[0].mxu0
        %v1388 = vadd.f32 0.0, %v1387
        %v1389 = vpop.f32.mrb[0].mxu0
        %1390 = vmatprep.mubr.f32.mxu0 0.0
        %1391 = vmatmul.mubr.f32.gmra.mrb[0].mxu0 %v1188
        %v1392 = vpop.f32.mrb[0].mxu0
        %v1393 = vadd.f32 0.0, %v1392
        %v1394 = vpop.f32.mrb[0].mxu0
        %1395 = vmatprep.mubr.f32.mxu0 0.0
        %1396 = vmatmul.mubr.f32.gmra.mrb[0].mxu0 %v1191
        %v1397 = vpop.f32.mrb[0].mxu0
        %v1398 = vadd.f32 0.0, %v1397
        %v1399 = vpop.f32.mrb[0].mxu0
        %1400 = vmatprep.mubr.f32.mxu0 0.0
        %1401 = vmatmul.mubr.f32.gmra.mrb[0].mxu0 %v1194
        %v1402 = vpop.f32.mrb[0].mxu0
        %v1403 = vadd.f32 0.0, %v1402
        %v1404 = vpop.f32.mrb[0].mxu0
        %1405 = vmatprep.mubr.f32.mxu0 0.0
        %1406 = vmatmul.mubr.f32.gmra.mrb[0].mxu0 %v1197
        %v1407 = vpop.f32.mrb[0].mxu0
        %v1408 = vadd.f32 0.0, %v1407
        %v1409 = vpop.f32.mrb[0].mxu0
        %1410 = vmatprep.mubr.f32.mxu0 0.0
        %1411 = vmatmul.mubr.f32.gmra.mrb[0].mxu0 %v1200
        %v1412 = vpop.f32.mrb[0].mxu0
        %v1413 = vadd.f32 0.0, %v1412
        %v1414 = vpop.f32.mrb[0].mxu0
        %1415 = vmatprep.mubr.f32.mxu0 0.0
        %1416 = vmatmul.mubr.f32.gmra.mrb[0].mxu0 %v1203
        %v1417 = vpop.f32.mrb[0].mxu0
        %v1418 = vadd.f32 0.0, %v1417
        %v1419 = vpop.f32.mrb[0].mxu0
        %1420 = vmatprep.mubr.f32.mxu0 0.0
        %1421 = vmatmul.mubr.f32.gmra.mrb[0].mxu0 %v1206
        %v1422 = vpop.f32.mrb[0].mxu0
        %v1423 = vadd.f32 0.0, %v1422
        %v1424 = vpop.f32.mrb[0].mxu0
        %1425 = vmatprep.mubr.f32.mxu0 0.0
        %1426 = vmatmul.mubr.f32.gmra.mrb[0].mxu0 %v1209
        %v1427 = vpop.f32.mrb[0].mxu0
        %v1428 = vadd.f32 0.0, %v1427
        %v1429 = vpop.f32.mrb[0].mxu0
        %1430 = vmatprep.mubr.f32.mxu0 0.0
        %1431 = vmatmul.mubr.f32.gmra.mrb[0].mxu0 %v1212
        %v1432 = vpop.f32.mrb[0].mxu0
        %v1433 = vadd.f32 0.0, %v1432
        %v1434 = vpop.f32.mrb[0].mxu0
        %1435 = vmatprep.mubr.f32.mxu0 0.0
        %1436 = vmatmul.mubr.f32.gmra.mrb[0].mxu0 %v1215
        %v1437 = vpop.f32.mrb[0].mxu0
        %v1438 = vadd.f32 0.0, %v1437
        %v1439 = vpop.f32.mrb[0].mxu0
        %1440 = vmatprep.mubr.f32.mxu0 0.0
        %1441 = vmatmul.mubr.f32.gmra.mrb[0].mxu0 %v1218
        %v1442 = vpop.f32.mrb[0].mxu0
        %v1443 = vadd.f32 0.0, %v1442
        %v1444 = vpop.f32.mrb[0].mxu0
        %1445 = vmatprep.mubr.f32.mxu0 0.0
        %1446 = vmatmul.mubr.f32.gmra.mrb[0].mxu0 %v1221
        %v1447 = vpop.f32.mrb[0].mxu0
        %v1448 = vadd.f32 0.0, %v1447
        %v1449 = vpop.f32.mrb[0].mxu0
        %1450 = vdwg.mxu0
        %v1451 = vadd.f32 %v935, %v1293
        %v1452 = vadd.f32 %v940, %v1298
        %v1453 = vadd.f32 %v945, %v1303
        %v1454 = vadd.f32 %v950, %v1308
        %v1455 = vadd.f32 %v955, %v1313
        %v1456 = vadd.f32 %v960, %v1318
        %v1457 = vadd.f32 %v965, %v1323
        %v1458 = vadd.f32 %v970, %v1328
        %v1459 = vadd.f32 %v975, %v1333
        %v1460 = vadd.f32 %v980, %v1338
        %v1461 = vadd.f32 %v985, %v1343
        %v1462 = vadd.f32 %v990, %v1348
        %v1463 = vadd.f32 %v995, %v1353
        %v1464 = vadd.f32 %v1000, %v1358
        %v1465 = vadd.f32 %v1005, %v1363
        %v1466 = vadd.f32 %v1010, %v1368
        %v1467 = vadd.f32 %v1015, %v1373
        %v1468 = vadd.f32 %v1020, %v1378
        %v1469 = vadd.f32 %v1025, %v1383
        %v1470 = vadd.f32 %v1030, %v1388
        %v1471 = vadd.f32 %v1035, %v1393
        %v1472 = vadd.f32 %v1040, %v1398
        %v1473 = vadd.f32 %v1045, %v1403
        %v1474 = vadd.f32 %v1050, %v1408
        %v1475 = vadd.f32 %v1055, %v1413
        %v1476 = vadd.f32 %v1060, %v1418
        %v1477 = vadd.f32 %v1065, %v1423
        %v1478 = vadd.f32 %v1070, %v1428
        %v1479 = vadd.f32 %v1075, %v1433
        %v1480 = vadd.f32 %v1080, %v1438
        %v1481 = vadd.f32 %v1085, %v1443
        %v1482 = vadd.f32 %v1090, %v1448
        %v1483 = vld [vmem:[%s343] sm:$0xff]
        %v1484 = vld [vmem:[%s343 + $0x8] sm:$0xff]
        %v1485 = vld [vmem:[%s343 + $0x18] sm:$0xff]
        %v1486 = vld [vmem:[%s343 + $0x20] sm:$0xff]
        %v1487 = vld [vmem:[%s343 + $0x30] sm:$0xff]
        %v1488 = vld [vmem:[%s343 + $0x38] sm:$0xff]
        %v1489 = vld [vmem:[%s343 + $0x48] sm:$0xff]
        %v1490 = vld [vmem:[%s343 + $0x50] sm:$0xff]
        %v1491 = vld [vmem:[%s343 + $0x60] sm:$0xff]
        %v1492 = vld [vmem:[%s343 + $0x68] sm:$0xff]
        %v1493 = vld [vmem:[%s343 + $0x78] sm:$0xff]
        %v1494 = vld [vmem:[%s343 + $0x80] sm:$0xff]
        %v1495 = vld [vmem:[%s343 + $0x90] sm:$0xff]
        %v1496 = vld [vmem:[%s343 + $0x98] sm:$0xff]
        %v1497 = vld [vmem:[%s343 + $0xa8] sm:$0xff]
        %v1498 = vld [vmem:[%s343 + $0xb0] sm:$0xff]
        %v1499 = vld [vmem:[%s343 + $0xc0] sm:$0xff]
        %v1500 = vld [vmem:[%s343 + $0xc8] sm:$0xff]
        %v1501 = vld [vmem:[%s343 + $0xd8] sm:$0xff]
        %v1502 = vld [vmem:[%s343 + $0xe0] sm:$0xff]
        %v1503 = vld [vmem:[%s343 + $0xf0] sm:$0xff]
        %v1504 = vld [vmem:[%s343 + $0xf8] sm:$0xff]
        %v1505 = vld [vmem:[%s343 + $0x108] sm:$0xff]
        %v1506 = vld [vmem:[%s343 + $0x110] sm:$0xff]
        %v1507 = vld [vmem:[%s343 + $0x120] sm:$0xff]
        %v1508 = vld [vmem:[%s343 + $0x128] sm:$0xff]
        %v1509 = vld [vmem:[%s343 + $0x138] sm:$0xff]
        %v1510 = vld [vmem:[%s343 + $0x140] sm:$0xff]
        %v1511 = vld [vmem:[%s343 + $0x150] sm:$0xff]
        %v1512 = vld [vmem:[%s343 + $0x158] sm:$0xff]
        %v1513 = vld [vmem:[%s343 + $0x168] sm:$0xff]
        %v1514 = vld [vmem:[%s343 + $0x170] sm:$0xff]
        %s1515 = scalar_lea.vmem %s232, 12
        %v1516 = vld [vmem:[%s1515] sm:$0xf]
        %v1518 = vsel %vm344, %v1483, 0
        %v1521 = vsel %vm344, %v1484, 0
        %v1524 = vsel %vm344, %v1485, 0
        %v1527 = vsel %vm344, %v1486, 0
        %v1530 = vsel %vm344, %v1487, 0
        %v1533 = vsel %vm344, %v1488, 0
        %v1536 = vsel %vm344, %v1489, 0
        %v1539 = vsel %vm344, %v1490, 0
        %v1542 = vsel %vm344, %v1491, 0
        %v1545 = vsel %vm344, %v1492, 0
        %v1548 = vsel %vm344, %v1493, 0
        %v1551 = vsel %vm344, %v1494, 0
        %v1554 = vsel %vm344, %v1495, 0
        %v1557 = vsel %vm344, %v1496, 0
        %v1560 = vsel %vm344, %v1497, 0
        %v1563 = vsel %vm344, %v1498, 0
        %v1566 = vsel %vm344, %v1499, 0
        %v1569 = vsel %vm344, %v1500, 0
        %v1572 = vsel %vm344, %v1501, 0
        %v1575 = vsel %vm344, %v1502, 0
        %v1578 = vsel %vm344, %v1503, 0
        %v1581 = vsel %vm344, %v1504, 0
        %v1584 = vsel %vm344, %v1505, 0
        %v1587 = vsel %vm344, %v1506, 0
        %v1590 = vsel %vm344, %v1507, 0
        %v1593 = vsel %vm344, %v1508, 0
        %v1596 = vsel %vm344, %v1509, 0
        %v1599 = vsel %vm344, %v1510, 0
        %v1602 = vsel %vm344, %v1511, 0
        %v1605 = vsel %vm344, %v1512, 0
        %v1608 = vsel %vm344, %v1513, 0
        %v1611 = vsel %vm344, %v1514, 0
        %v1614 = vsel %vm540, %v1516, 0
        %1616 = vmatprep.subr.mxu0 0.0
        %1617 = vmatpush1.msra.mxu0 %v1614
        %1618 = vmatprep.subr.mxu0 0.0
        %1619 = vmatpush1.msra.mxu0 0.0
        %1620 = vmatprep.subr.mxu0 0.0
        %1621 = vmatpush1.msra.mxu0 0.0
        %1622 = vmatprep.subr.mxu0 0.0
        %1623 = vmatpush1.msra.mxu0 0.0
        %1624 = vmatprep.subr.mxu0 0.0
        %1625 = vmatpush1.msra.mxu0 0.0
        %1626 = vmatprep.subr.mxu0 0.0
        %1627 = vmatpush1.msra.mxu0 0.0
        %1628 = vmatprep.subr.mxu0 0.0
        %1629 = vmatpush1.msra.mxu0 0.0
        %1630 = vmatprep.subr.mxu0 0.0
        %1631 = vmatpush1.msra.mxu0 0.0
        %1632 = vmatprep.subr.mxu0 0.0
        %1633 = vmatpush1.msra.mxu0 0.0
        %1634 = vmatprep.subr.mxu0 0.0
        %1635 = vmatpush1.msra.mxu0 0.0
        %1636 = vmatprep.subr.mxu0 0.0
        %1637 = vmatpush1.msra.mxu0 0.0
        %1638 = vmatprep.subr.mxu0 0.0
        %1639 = vmatpush1.msra.mxu0 0.0
        %1640 = vmatprep.subr.mxu0 0.0
        %1641 = vmatpush1.msra.mxu0 0.0
        %1642 = vmatprep.subr.mxu0 0.0
        %1643 = vmatpush1.msra.mxu0 0.0
        %1644 = vmatprep.subr.mxu0 0.0
        %1645 = vmatpush1.msra.mxu0 0.0
        %1646 = vmatprep.subr.mxu0 0.0
        %1647 = vmatpush1.msra.mxu0 0.0
        %1648 = vmatprep.subr.mxu0 0.0
        %1649 = vmatpush1.msra.mxu0 0.0
        %1650 = vmatprep.subr.mxu0 0.0
        %1651 = vmatpush1.msra.mxu0 0.0
        %1652 = vmatprep.subr.mxu0 0.0
        %1653 = vmatpush1.msra.mxu0 0.0
        %1654 = vmatprep.subr.mxu0 0.0
        %1655 = vmatpush1.msra.mxu0 0.0
        %1656 = vmatprep.subr.mxu0 0.0
        %1657 = vmatpush1.msra.mxu0 0.0
        %1658 = vmatprep.subr.mxu0 0.0
        %1659 = vmatpush1.msra.mxu0 0.0
        %1660 = vmatprep.subr.mxu0 0.0
        %1661 = vmatpush1.msra.mxu0 0.0
        %1662 = vmatprep.subr.mxu0 0.0
        %1663 = vmatpush1.msra.mxu0 0.0
        %1664 = vmatprep.subr.mxu0 0.0
        %1665 = vmatpush1.msra.mxu0 0.0
        %1666 = vmatprep.subr.mxu0 0.0
        %1667 = vmatpush1.msra.mxu0 0.0
        %1668 = vmatprep.subr.mxu0 0.0
        %1669 = vmatpush1.msra.mxu0 0.0
        %1670 = vmatprep.subr.mxu0 0.0
        %1671 = vmatpush1.msra.mxu0 0.0
        %1672 = vmatprep.subr.mxu0 0.0
        %1673 = vmatpush1.msra.mxu0 0.0
        %1674 = vmatprep.subr.mxu0 0.0
        %1675 = vmatpush1.msra.mxu0 0.0
        %1676 = vmatprep.subr.mxu0 0.0
        %1677 = vmatpush1.msra.mxu0 0.0
        %1678 = vmatprep.subr.mxu0 0.0
        %1679 = vmatpush1.msra.mxu0 0.0
        %1680 = vmatprep.mubr.f32.mxu0 0.0
        %1681 = vmatmul.mubr.f32.gmra.mrb[0].mxu0 %v1518
        %v1682 = vpop.f32.mrb[0].mxu0
        %v1683 = vadd.f32 0.0, %v1682
        %v1684 = vpop.f32.mrb[0].mxu0
        %1685 = vmatprep.mubr.f32.mxu0 0.0
        %1686 = vmatmul.mubr.f32.gmra.mrb[0].mxu0 %v1521
        %v1687 = vpop.f32.mrb[0].mxu0
        %v1688 = vadd.f32 0.0, %v1687
        %v1689 = vpop.f32.mrb[0].mxu0
        %1690 = vmatprep.mubr.f32.mxu0 0.0
        %1691 = vmatmul.mubr.f32.gmra.mrb[0].mxu0 %v1524
        %v1692 = vpop.f32.mrb[0].mxu0
        %v1693 = vadd.f32 0.0, %v1692
        %v1694 = vpop.f32.mrb[0].mxu0
        %1695 = vmatprep.mubr.f32.mxu0 0.0
        %1696 = vmatmul.mubr.f32.gmra.mrb[0].mxu0 %v1527
        %v1697 = vpop.f32.mrb[0].mxu0
        %v1698 = vadd.f32 0.0, %v1697
        %v1699 = vpop.f32.mrb[0].mxu0
        %1700 = vmatprep.mubr.f32.mxu0 0.0
        %1701 = vmatmul.mubr.f32.gmra.mrb[0].mxu0 %v1530
        %v1702 = vpop.f32.mrb[0].mxu0
        %v1703 = vadd.f32 0.0, %v1702
        %v1704 = vpop.f32.mrb[0].mxu0
        %1705 = vmatprep.mubr.f32.mxu0 0.0
        %1706 = vmatmul.mubr.f32.gmra.mrb[0].mxu0 %v1533
        %v1707 = vpop.f32.mrb[0].mxu0
        %v1708 = vadd.f32 0.0, %v1707
        %v1709 = vpop.f32.mrb[0].mxu0
        %1710 = vmatprep.mubr.f32.mxu0 0.0
        %1711 = vmatmul.mubr.f32.gmra.mrb[0].mxu0 %v1536
        %v1712 = vpop.f32.mrb[0].mxu0
        %v1713 = vadd.f32 0.0, %v1712
        %v1714 = vpop.f32.mrb[0].mxu0
        %1715 = vmatprep.mubr.f32.mxu0 0.0
        %1716 = vmatmul.mubr.f32.gmra.mrb[0].mxu0 %v1539
        %v1717 = vpop.f32.mrb[0].mxu0
        %v1718 = vadd.f32 0.0, %v1717
        %v1719 = vpop.f32.mrb[0].mxu0
        %1720 = vmatprep.mubr.f32.mxu0 0.0
        %1721 = vmatmul.mubr.f32.gmra.mrb[0].mxu0 %v1542
        %v1722 = vpop.f32.mrb[0].mxu0
        %v1723 = vadd.f32 0.0, %v1722
        %v1724 = vpop.f32.mrb[0].mxu0
        %1725 = vmatprep.mubr.f32.mxu0 0.0
        %1726 = vmatmul.mubr.f32.gmra.mrb[0].mxu0 %v1545
        %v1727 = vpop.f32.mrb[0].mxu0
        %v1728 = vadd.f32 0.0, %v1727
        %v1729 = vpop.f32.mrb[0].mxu0
        %1730 = vmatprep.mubr.f32.mxu0 0.0
        %1731 = vmatmul.mubr.f32.gmra.mrb[0].mxu0 %v1548
        %v1732 = vpop.f32.mrb[0].mxu0
        %v1733 = vadd.f32 0.0, %v1732
        %v1734 = vpop.f32.mrb[0].mxu0
        %1735 = vmatprep.mubr.f32.mxu0 0.0
        %1736 = vmatmul.mubr.f32.gmra.mrb[0].mxu0 %v1551
        %v1737 = vpop.f32.mrb[0].mxu0
        %v1738 = vadd.f32 0.0, %v1737
        %v1739 = vpop.f32.mrb[0].mxu0
        %1740 = vmatprep.mubr.f32.mxu0 0.0
        %1741 = vmatmul.mubr.f32.gmra.mrb[0].mxu0 %v1554
        %v1742 = vpop.f32.mrb[0].mxu0
        %v1743 = vadd.f32 0.0, %v1742
        %v1744 = vpop.f32.mrb[0].mxu0
        %1745 = vmatprep.mubr.f32.mxu0 0.0
        %1746 = vmatmul.mubr.f32.gmra.mrb[0].mxu0 %v1557
        %v1747 = vpop.f32.mrb[0].mxu0
        %v1748 = vadd.f32 0.0, %v1747
        %v1749 = vpop.f32.mrb[0].mxu0
        %1750 = vmatprep.mubr.f32.mxu0 0.0
        %1751 = vmatmul.mubr.f32.gmra.mrb[0].mxu0 %v1560
        %v1752 = vpop.f32.mrb[0].mxu0
        %v1753 = vadd.f32 0.0, %v1752
        %v1754 = vpop.f32.mrb[0].mxu0
        %1755 = vmatprep.mubr.f32.mxu0 0.0
        %1756 = vmatmul.mubr.f32.gmra.mrb[0].mxu0 %v1563
        %v1757 = vpop.f32.mrb[0].mxu0
        %v1758 = vadd.f32 0.0, %v1757
        %v1759 = vpop.f32.mrb[0].mxu0
        %1760 = vmatprep.mubr.f32.mxu0 0.0
        %1761 = vmatmul.mubr.f32.gmra.mrb[0].mxu0 %v1566
        %v1762 = vpop.f32.mrb[0].mxu0
        %v1763 = vadd.f32 0.0, %v1762
        %v1764 = vpop.f32.mrb[0].mxu0
        %1765 = vmatprep.mubr.f32.mxu0 0.0
        %1766 = vmatmul.mubr.f32.gmra.mrb[0].mxu0 %v1569
        %v1767 = vpop.f32.mrb[0].mxu0
        %v1768 = vadd.f32 0.0, %v1767
        %v1769 = vpop.f32.mrb[0].mxu0
        %1770 = vmatprep.mubr.f32.mxu0 0.0
        %1771 = vmatmul.mubr.f32.gmra.mrb[0].mxu0 %v1572
        %v1772 = vpop.f32.mrb[0].mxu0
        %v1773 = vadd.f32 0.0, %v1772
        %v1774 = vpop.f32.mrb[0].mxu0
        %1775 = vmatprep.mubr.f32.mxu0 0.0
        %1776 = vmatmul.mubr.f32.gmra.mrb[0].mxu0 %v1575
        %v1777 = vpop.f32.mrb[0].mxu0
        %v1778 = vadd.f32 0.0, %v1777
        %v1779 = vpop.f32.mrb[0].mxu0
        %1780 = vmatprep.mubr.f32.mxu0 0.0
        %1781 = vmatmul.mubr.f32.gmra.mrb[0].mxu0 %v1578
        %v1782 = vpop.f32.mrb[0].mxu0
        %v1783 = vadd.f32 0.0, %v1782
        %v1784 = vpop.f32.mrb[0].mxu0
        %1785 = vmatprep.mubr.f32.mxu0 0.0
        %1786 = vmatmul.mubr.f32.gmra.mrb[0].mxu0 %v1581
        %v1787 = vpop.f32.mrb[0].mxu0
        %v1788 = vadd.f32 0.0, %v1787
        %v1789 = vpop.f32.mrb[0].mxu0
        %1790 = vmatprep.mubr.f32.mxu0 0.0
        %1791 = vmatmul.mubr.f32.gmra.mrb[0].mxu0 %v1584
        %v1792 = vpop.f32.mrb[0].mxu0
        %v1793 = vadd.f32 0.0, %v1792
        %v1794 = vpop.f32.mrb[0].mxu0
        %1795 = vmatprep.mubr.f32.mxu0 0.0
        %1796 = vmatmul.mubr.f32.gmra.mrb[0].mxu0 %v1587
        %v1797 = vpop.f32.mrb[0].mxu0
        %v1798 = vadd.f32 0.0, %v1797
        %v1799 = vpop.f32.mrb[0].mxu0
        %1800 = vmatprep.mubr.f32.mxu0 0.0
        %1801 = vmatmul.mubr.f32.gmra.mrb[0].mxu0 %v1590
        %v1802 = vpop.f32.mrb[0].mxu0
        %v1803 = vadd.f32 0.0, %v1802
        %v1804 = vpop.f32.mrb[0].mxu0
        %1805 = vmatprep.mubr.f32.mxu0 0.0
        %1806 = vmatmul.mubr.f32.gmra.mrb[0].mxu0 %v1593
        %v1807 = vpop.f32.mrb[0].mxu0
        %v1808 = vadd.f32 0.0, %v1807
        %v1809 = vpop.f32.mrb[0].mxu0
        %1810 = vmatprep.mubr.f32.mxu0 0.0
        %1811 = vmatmul.mubr.f32.gmra.mrb[0].mxu0 %v1596
        %v1812 = vpop.f32.mrb[0].mxu0
        %v1813 = vadd.f32 0.0, %v1812
        %v1814 = vpop.f32.mrb[0].mxu0
        %1815 = vmatprep.mubr.f32.mxu0 0.0
        %1816 = vmatmul.mubr.f32.gmra.mrb[0].mxu0 %v1599
        %v1817 = vpop.f32.mrb[0].mxu0
        %v1818 = vadd.f32 0.0, %v1817
        %v1819 = vpop.f32.mrb[0].mxu0
        %1820 = vmatprep.mubr.f32.mxu0 0.0
        %1821 = vmatmul.mubr.f32.gmra.mrb[0].mxu0 %v1602
        %v1822 = vpop.f32.mrb[0].mxu0
        %v1823 = vadd.f32 0.0, %v1822
        %v1824 = vpop.f32.mrb[0].mxu0
        %1825 = vmatprep.mubr.f32.mxu0 0.0
        %1826 = vmatmul.mubr.f32.gmra.mrb[0].mxu0 %v1605
        %v1827 = vpop.f32.mrb[0].mxu0
        %v1828 = vadd.f32 0.0, %v1827
        %v1829 = vpop.f32.mrb[0].mxu0
        %1830 = vmatprep.mubr.f32.mxu0 0.0
        %1831 = vmatmul.mubr.f32.gmra.mrb[0].mxu0 %v1608
        %v1832 = vpop.f32.mrb[0].mxu0
        %v1833 = vadd.f32 0.0, %v1832
        %v1834 = vpop.f32.mrb[0].mxu0
        %1835 = vmatprep.mubr.f32.mxu0 0.0
        %1836 = vmatmul.mubr.f32.gmra.mrb[0].mxu0 %v1611
        %v1837 = vpop.f32.mrb[0].mxu0
        %v1838 = vadd.f32 0.0, %v1837
        %v1839 = vpop.f32.mrb[0].mxu0
        %1840 = vdwg.mxu0
        %v1841 = vadd.f32 %v1451, %v1683
        %v1842 = vadd.f32 %v1452, %v1688
        %v1843 = vadd.f32 %v1453, %v1693
        %v1844 = vadd.f32 %v1454, %v1698
        %v1845 = vadd.f32 %v1455, %v1703
        %v1846 = vadd.f32 %v1456, %v1708
        %v1847 = vadd.f32 %v1457, %v1713
        %v1848 = vadd.f32 %v1458, %v1718
        %v1849 = vadd.f32 %v1459, %v1723
        %v1850 = vadd.f32 %v1460, %v1728
        %v1851 = vadd.f32 %v1461, %v1733
        %v1852 = vadd.f32 %v1462, %v1738
        %v1853 = vadd.f32 %v1463, %v1743
        %v1854 = vadd.f32 %v1464, %v1748
        %v1855 = vadd.f32 %v1465, %v1753
        %v1856 = vadd.f32 %v1466, %v1758
        %v1857 = vadd.f32 %v1467, %v1763
        %v1858 = vadd.f32 %v1468, %v1768
        %v1859 = vadd.f32 %v1469, %v1773
        %v1860 = vadd.f32 %v1470, %v1778
        %v1861 = vadd.f32 %v1471, %v1783
        %v1862 = vadd.f32 %v1472, %v1788
        %v1863 = vadd.f32 %v1473, %v1793
        %v1864 = vadd.f32 %v1474, %v1798
        %v1865 = vadd.f32 %v1475, %v1803
        %v1866 = vadd.f32 %v1476, %v1808
        %v1867 = vadd.f32 %v1477, %v1813
        %v1868 = vadd.f32 %v1478, %v1818
        %v1869 = vadd.f32 %v1479, %v1823
        %v1870 = vadd.f32 %v1480, %v1828
        %v1871 = vadd.f32 %v1481, %v1833
        %v1872 = vadd.f32 %v1482, %v1838
        %v1873 = vld [vmem:[%s343 + $0x2] sm:$0xff]
        %v1874 = vld [vmem:[%s343 + $0xa] sm:$0xff]
        %v1875 = vld [vmem:[%s343 + $0x1a] sm:$0xff]
        %v1876 = vld [vmem:[%s343 + $0x22] sm:$0xff]
        %v1877 = vld [vmem:[%s343 + $0x32] sm:$0xff]
        %v1878 = vld [vmem:[%s343 + $0x3a] sm:$0xff]
        %v1879 = vld [vmem:[%s343 + $0x4a] sm:$0xff]
        %v1880 = vld [vmem:[%s343 + $0x52] sm:$0xff]
        %v1881 = vld [vmem:[%s343 + $0x62] sm:$0xff]
        %v1882 = vld [vmem:[%s343 + $0x6a] sm:$0xff]
        %v1883 = vld [vmem:[%s343 + $0x7a] sm:$0xff]
        %v1884 = vld [vmem:[%s343 + $0x82] sm:$0xff]
        %v1885 = vld [vmem:[%s343 + $0x92] sm:$0xff]
        %v1886 = vld [vmem:[%s343 + $0x9a] sm:$0xff]
        %v1887 = vld [vmem:[%s343 + $0xaa] sm:$0xff]
        %v1888 = vld [vmem:[%s343 + $0xb2] sm:$0xff]
        %v1889 = vld [vmem:[%s343 + $0xc2] sm:$0xff]
        %v1890 = vld [vmem:[%s343 + $0xca] sm:$0xff]
        %v1891 = vld [vmem:[%s343 + $0xda] sm:$0xff]
        %v1892 = vld [vmem:[%s343 + $0xe2] sm:$0xff]
        %v1893 = vld [vmem:[%s343 + $0xf2] sm:$0xff]
        %v1894 = vld [vmem:[%s343 + $0xfa] sm:$0xff]
        %v1895 = vld [vmem:[%s343 + $0x10a] sm:$0xff]
        %v1896 = vld [vmem:[%s343 + $0x112] sm:$0xff]
        %v1897 = vld [vmem:[%s343 + $0x122] sm:$0xff]
        %v1898 = vld [vmem:[%s343 + $0x12a] sm:$0xff]
        %v1899 = vld [vmem:[%s343 + $0x13a] sm:$0xff]
        %v1900 = vld [vmem:[%s343 + $0x142] sm:$0xff]
        %v1901 = vld [vmem:[%s343 + $0x152] sm:$0xff]
        %v1902 = vld [vmem:[%s343 + $0x15a] sm:$0xff]
        %v1903 = vld [vmem:[%s343 + $0x16a] sm:$0xff]
        %v1904 = vld [vmem:[%s343 + $0x172] sm:$0xff]
        %s1905 = scalar_lea.vmem %s232, 16
        %v1906 = vld [vmem:[%s1905] sm:$0xf]
        %v1908 = vsel %vm344, %v1873, 0
        %v1911 = vsel %vm344, %v1874, 0
        %v1914 = vsel %vm344, %v1875, 0
        %v1917 = vsel %vm344, %v1876, 0
        %v1920 = vsel %vm344, %v1877, 0
        %v1923 = vsel %vm344, %v1878, 0
        %v1926 = vsel %vm344, %v1879, 0
        %v1929 = vsel %vm344, %v1880, 0
        %v1932 = vsel %vm344, %v1881, 0
        %v1935 = vsel %vm344, %v1882, 0
        %v1938 = vsel %vm344, %v1883, 0
        %v1941 = vsel %vm344, %v1884, 0
        %v1944 = vsel %vm344, %v1885, 0
        %v1947 = vsel %vm344, %v1886, 0
        %v1950 = vsel %vm344, %v1887, 0
        %v1953 = vsel %vm344, %v1888, 0
        %v1956 = vsel %vm344, %v1889, 0
        %v1959 = vsel %vm344, %v1890, 0
        %v1962 = vsel %vm344, %v1891, 0
        %v1965 = vsel %vm344, %v1892, 0
        %v1968 = vsel %vm344, %v1893, 0
        %v1971 = vsel %vm344, %v1894, 0
        %v1974 = vsel %vm344, %v1895, 0
        %v1977 = vsel %vm344, %v1896, 0
        %v1980 = vsel %vm344, %v1897, 0
        %v1983 = vsel %vm344, %v1898, 0
        %v1986 = vsel %vm344, %v1899, 0
        %v1989 = vsel %vm344, %v1900, 0
        %v1992 = vsel %vm344, %v1901, 0
        %v1995 = vsel %vm344, %v1902, 0
        %v1998 = vsel %vm344, %v1903, 0
        %v2001 = vsel %vm344, %v1904, 0
        %v2004 = vsel %vm540, %v1906, 0
        %2006 = vmatprep.subr.mxu0 0.0
        %2007 = vmatpush1.msra.mxu0 %v2004
        %2008 = vmatprep.subr.mxu0 0.0
        %2009 = vmatpush1.msra.mxu0 0.0
        %2010 = vmatprep.subr.mxu0 0.0
        %2011 = vmatpush1.msra.mxu0 0.0
        %2012 = vmatprep.subr.mxu0 0.0
        %2013 = vmatpush1.msra.mxu0 0.0
        %2014 = vmatprep.subr.mxu0 0.0
        %2015 = vmatpush1.msra.mxu0 0.0
        %2016 = vmatprep.subr.mxu0 0.0
        %2017 = vmatpush1.msra.mxu0 0.0
        %2018 = vmatprep.subr.mxu0 0.0
        %2019 = vmatpush1.msra.mxu0 0.0
        %2020 = vmatprep.subr.mxu0 0.0
        %2021 = vmatpush1.msra.mxu0 0.0
        %2022 = vmatprep.subr.mxu0 0.0
        %2023 = vmatpush1.msra.mxu0 0.0
        %2024 = vmatprep.subr.mxu0 0.0
        %2025 = vmatpush1.msra.mxu0 0.0
        %2026 = vmatprep.subr.mxu0 0.0
        %2027 = vmatpush1.msra.mxu0 0.0
        %2028 = vmatprep.subr.mxu0 0.0
        %2029 = vmatpush1.msra.mxu0 0.0
        %2030 = vmatprep.subr.mxu0 0.0
        %2031 = vmatpush1.msra.mxu0 0.0
        %2032 = vmatprep.subr.mxu0 0.0
        %2033 = vmatpush1.msra.mxu0 0.0
        %2034 = vmatprep.subr.mxu0 0.0
        %2035 = vmatpush1.msra.mxu0 0.0
        %2036 = vmatprep.subr.mxu0 0.0
        %2037 = vmatpush1.msra.mxu0 0.0
        %2038 = vmatprep.subr.mxu0 0.0
        %2039 = vmatpush1.msra.mxu0 0.0
        %2040 = vmatprep.subr.mxu0 0.0
        %2041 = vmatpush1.msra.mxu0 0.0
        %2042 = vmatprep.subr.mxu0 0.0
        %2043 = vmatpush1.msra.mxu0 0.0
        %2044 = vmatprep.subr.mxu0 0.0
        %2045 = vmatpush1.msra.mxu0 0.0
        %2046 = vmatprep.subr.mxu0 0.0
        %2047 = vmatpush1.msra.mxu0 0.0
        %2048 = vmatprep.subr.mxu0 0.0
        %2049 = vmatpush1.msra.mxu0 0.0
        %2050 = vmatprep.subr.mxu0 0.0
        %2051 = vmatpush1.msra.mxu0 0.0
        %2052 = vmatprep.subr.mxu0 0.0
        %2053 = vmatpush1.msra.mxu0 0.0
        %2054 = vmatprep.subr.mxu0 0.0
        %2055 = vmatpush1.msra.mxu0 0.0
        %2056 = vmatprep.subr.mxu0 0.0
        %2057 = vmatpush1.msra.mxu0 0.0
        %2058 = vmatprep.subr.mxu0 0.0
        %2059 = vmatpush1.msra.mxu0 0.0
        %2060 = vmatprep.subr.mxu0 0.0
        %2061 = vmatpush1.msra.mxu0 0.0
        %2062 = vmatprep.subr.mxu0 0.0
        %2063 = vmatpush1.msra.mxu0 0.0
        %2064 = vmatprep.subr.mxu0 0.0
        %2065 = vmatpush1.msra.mxu0 0.0
        %2066 = vmatprep.subr.mxu0 0.0
        %2067 = vmatpush1.msra.mxu0 0.0
        %2068 = vmatprep.subr.mxu0 0.0
        %2069 = vmatpush1.msra.mxu0 0.0
        %2070 = vmatprep.mubr.f32.mxu0 0.0
        %2071 = vmatmul.mubr.f32.gmra.mrb[0].mxu0 %v1908
        %v2072 = vpop.f32.mrb[0].mxu0
        %v2073 = vadd.f32 0.0, %v2072
        %v2074 = vpop.f32.mrb[0].mxu0
        %2075 = vmatprep.mubr.f32.mxu0 0.0
        %2076 = vmatmul.mubr.f32.gmra.mrb[0].mxu0 %v1911
        %v2077 = vpop.f32.mrb[0].mxu0
        %v2078 = vadd.f32 0.0, %v2077
        %v2079 = vpop.f32.mrb[0].mxu0
        %2080 = vmatprep.mubr.f32.mxu0 0.0
        %2081 = vmatmul.mubr.f32.gmra.mrb[0].mxu0 %v1914
        %v2082 = vpop.f32.mrb[0].mxu0
        %v2083 = vadd.f32 0.0, %v2082
        %v2084 = vpop.f32.mrb[0].mxu0
        %2085 = vmatprep.mubr.f32.mxu0 0.0
        %2086 = vmatmul.mubr.f32.gmra.mrb[0].mxu0 %v1917
        %v2087 = vpop.f32.mrb[0].mxu0
        %v2088 = vadd.f32 0.0, %v2087
        %v2089 = vpop.f32.mrb[0].mxu0
        %2090 = vmatprep.mubr.f32.mxu0 0.0
        %2091 = vmatmul.mubr.f32.gmra.mrb[0].mxu0 %v1920
        %v2092 = vpop.f32.mrb[0].mxu0
        %v2093 = vadd.f32 0.0, %v2092
        %v2094 = vpop.f32.mrb[0].mxu0
        %2095 = vmatprep.mubr.f32.mxu0 0.0
        %2096 = vmatmul.mubr.f32.gmra.mrb[0].mxu0 %v1923
        %v2097 = vpop.f32.mrb[0].mxu0
        %v2098 = vadd.f32 0.0, %v2097
        %v2099 = vpop.f32.mrb[0].mxu0
        %2100 = vmatprep.mubr.f32.mxu0 0.0
        %2101 = vmatmul.mubr.f32.gmra.mrb[0].mxu0 %v1926
        %v2102 = vpop.f32.mrb[0].mxu0
        %v2103 = vadd.f32 0.0, %v2102
        %v2104 = vpop.f32.mrb[0].mxu0
        %2105 = vmatprep.mubr.f32.mxu0 0.0
        %2106 = vmatmul.mubr.f32.gmra.mrb[0].mxu0 %v1929
        %v2107 = vpop.f32.mrb[0].mxu0
        %v2108 = vadd.f32 0.0, %v2107
        %v2109 = vpop.f32.mrb[0].mxu0
        %2110 = vmatprep.mubr.f32.mxu0 0.0
        %2111 = vmatmul.mubr.f32.gmra.mrb[0].mxu0 %v1932
        %v2112 = vpop.f32.mrb[0].mxu0
        %v2113 = vadd.f32 0.0, %v2112
        %v2114 = vpop.f32.mrb[0].mxu0
        %2115 = vmatprep.mubr.f32.mxu0 0.0
        %2116 = vmatmul.mubr.f32.gmra.mrb[0].mxu0 %v1935
        %v2117 = vpop.f32.mrb[0].mxu0
        %v2118 = vadd.f32 0.0, %v2117
        %v2119 = vpop.f32.mrb[0].mxu0
        %2120 = vmatprep.mubr.f32.mxu0 0.0
        %2121 = vmatmul.mubr.f32.gmra.mrb[0].mxu0 %v1938
        %v2122 = vpop.f32.mrb[0].mxu0
        %v2123 = vadd.f32 0.0, %v2122
        %v2124 = vpop.f32.mrb[0].mxu0
        %2125 = vmatprep.mubr.f32.mxu0 0.0
        %2126 = vmatmul.mubr.f32.gmra.mrb[0].mxu0 %v1941
        %v2127 = vpop.f32.mrb[0].mxu0
        %v2128 = vadd.f32 0.0, %v2127
        %v2129 = vpop.f32.mrb[0].mxu0
        %2130 = vmatprep.mubr.f32.mxu0 0.0
        %2131 = vmatmul.mubr.f32.gmra.mrb[0].mxu0 %v1944
        %v2132 = vpop.f32.mrb[0].mxu0
        %v2133 = vadd.f32 0.0, %v2132
        %v2134 = vpop.f32.mrb[0].mxu0
        %2135 = vmatprep.mubr.f32.mxu0 0.0
        %2136 = vmatmul.mubr.f32.gmra.mrb[0].mxu0 %v1947
        %v2137 = vpop.f32.mrb[0].mxu0
        %v2138 = vadd.f32 0.0, %v2137
        %v2139 = vpop.f32.mrb[0].mxu0
        %2140 = vmatprep.mubr.f32.mxu0 0.0
        %2141 = vmatmul.mubr.f32.gmra.mrb[0].mxu0 %v1950
        %v2142 = vpop.f32.mrb[0].mxu0
        %v2143 = vadd.f32 0.0, %v2142
        %v2144 = vpop.f32.mrb[0].mxu0
        %2145 = vmatprep.mubr.f32.mxu0 0.0
        %2146 = vmatmul.mubr.f32.gmra.mrb[0].mxu0 %v1953
        %v2147 = vpop.f32.mrb[0].mxu0
        %v2148 = vadd.f32 0.0, %v2147
        %v2149 = vpop.f32.mrb[0].mxu0
        %2150 = vmatprep.mubr.f32.mxu0 0.0
        %2151 = vmatmul.mubr.f32.gmra.mrb[0].mxu0 %v1956
        %v2152 = vpop.f32.mrb[0].mxu0
        %v2153 = vadd.f32 0.0, %v2152
        %v2154 = vpop.f32.mrb[0].mxu0
        %2155 = vmatprep.mubr.f32.mxu0 0.0
        %2156 = vmatmul.mubr.f32.gmra.mrb[0].mxu0 %v1959
        %v2157 = vpop.f32.mrb[0].mxu0
        %v2158 = vadd.f32 0.0, %v2157
        %v2159 = vpop.f32.mrb[0].mxu0
        %2160 = vmatprep.mubr.f32.mxu0 0.0
        %2161 = vmatmul.mubr.f32.gmra.mrb[0].mxu0 %v1962
        %v2162 = vpop.f32.mrb[0].mxu0
        %v2163 = vadd.f32 0.0, %v2162
        %v2164 = vpop.f32.mrb[0].mxu0
        %2165 = vmatprep.mubr.f32.mxu0 0.0
        %2166 = vmatmul.mubr.f32.gmra.mrb[0].mxu0 %v1965
        %v2167 = vpop.f32.mrb[0].mxu0
        %v2168 = vadd.f32 0.0, %v2167
        %v2169 = vpop.f32.mrb[0].mxu0
        %2170 = vmatprep.mubr.f32.mxu0 0.0
        %2171 = vmatmul.mubr.f32.gmra.mrb[0].mxu0 %v1968
        %v2172 = vpop.f32.mrb[0].mxu0
        %v2173 = vadd.f32 0.0, %v2172
        %v2174 = vpop.f32.mrb[0].mxu0
        %2175 = vmatprep.mubr.f32.mxu0 0.0
        %2176 = vmatmul.mubr.f32.gmra.mrb[0].mxu0 %v1971
        %v2177 = vpop.f32.mrb[0].mxu0
        %v2178 = vadd.f32 0.0, %v2177
        %v2179 = vpop.f32.mrb[0].mxu0
        %2180 = vmatprep.mubr.f32.mxu0 0.0
        %2181 = vmatmul.mubr.f32.gmra.mrb[0].mxu0 %v1974
        %v2182 = vpop.f32.mrb[0].mxu0
        %v2183 = vadd.f32 0.0, %v2182
        %v2184 = vpop.f32.mrb[0].mxu0
        %2185 = vmatprep.mubr.f32.mxu0 0.0
        %2186 = vmatmul.mubr.f32.gmra.mrb[0].mxu0 %v1977
        %v2187 = vpop.f32.mrb[0].mxu0
        %v2188 = vadd.f32 0.0, %v2187
        %v2189 = vpop.f32.mrb[0].mxu0
        %2190 = vmatprep.mubr.f32.mxu0 0.0
        %2191 = vmatmul.mubr.f32.gmra.mrb[0].mxu0 %v1980
        %v2192 = vpop.f32.mrb[0].mxu0
        %v2193 = vadd.f32 0.0, %v2192
        %v2194 = vpop.f32.mrb[0].mxu0
        %2195 = vmatprep.mubr.f32.mxu0 0.0
        %2196 = vmatmul.mubr.f32.gmra.mrb[0].mxu0 %v1983
        %v2197 = vpop.f32.mrb[0].mxu0
        %v2198 = vadd.f32 0.0, %v2197
        %v2199 = vpop.f32.mrb[0].mxu0
        %2200 = vmatprep.mubr.f32.mxu0 0.0
        %2201 = vmatmul.mubr.f32.gmra.mrb[0].mxu0 %v1986
        %v2202 = vpop.f32.mrb[0].mxu0
        %v2203 = vadd.f32 0.0, %v2202
        %v2204 = vpop.f32.mrb[0].mxu0
        %2205 = vmatprep.mubr.f32.mxu0 0.0
        %2206 = vmatmul.mubr.f32.gmra.mrb[0].mxu0 %v1989
        %v2207 = vpop.f32.mrb[0].mxu0
        %v2208 = vadd.f32 0.0, %v2207
        %v2209 = vpop.f32.mrb[0].mxu0
        %2210 = vmatprep.mubr.f32.mxu0 0.0
        %2211 = vmatmul.mubr.f32.gmra.mrb[0].mxu0 %v1992
        %v2212 = vpop.f32.mrb[0].mxu0
        %v2213 = vadd.f32 0.0, %v2212
        %v2214 = vpop.f32.mrb[0].mxu0
        %2215 = vmatprep.mubr.f32.mxu0 0.0
        %2216 = vmatmul.mubr.f32.gmra.mrb[0].mxu0 %v1995
        %v2217 = vpop.f32.mrb[0].mxu0
        %v2218 = vadd.f32 0.0, %v2217
        %v2219 = vpop.f32.mrb[0].mxu0
        %2220 = vmatprep.mubr.f32.mxu0 0.0
        %2221 = vmatmul.mubr.f32.gmra.mrb[0].mxu0 %v1998
        %v2222 = vpop.f32.mrb[0].mxu0
        %v2223 = vadd.f32 0.0, %v2222
        %v2224 = vpop.f32.mrb[0].mxu0
        %2225 = vmatprep.mubr.f32.mxu0 0.0
        %2226 = vmatmul.mubr.f32.gmra.mrb[0].mxu0 %v2001
        %v2227 = vpop.f32.mrb[0].mxu0
        %v2228 = vadd.f32 0.0, %v2227
        %v2229 = vpop.f32.mrb[0].mxu0
        %2230 = vdwg.mxu0
        %v2231 = vadd.f32 %v1841, %v2073
        %v2232 = vadd.f32 %v1842, %v2078
        %v2233 = vadd.f32 %v1843, %v2083
        %v2234 = vadd.f32 %v1844, %v2088
        %v2235 = vadd.f32 %v1845, %v2093
        %v2236 = vadd.f32 %v1846, %v2098
        %v2237 = vadd.f32 %v1847, %v2103
        %v2238 = vadd.f32 %v1848, %v2108
        %v2239 = vadd.f32 %v1849, %v2113
        %v2240 = vadd.f32 %v1850, %v2118
        %v2241 = vadd.f32 %v1851, %v2123
        %v2242 = vadd.f32 %v1852, %v2128
        %v2243 = vadd.f32 %v1853, %v2133
        %v2244 = vadd.f32 %v1854, %v2138
        %v2245 = vadd.f32 %v1855, %v2143
        %v2246 = vadd.f32 %v1856, %v2148
        %v2247 = vadd.f32 %v1857, %v2153
        %v2248 = vadd.f32 %v1858, %v2158
        %v2249 = vadd.f32 %v1859, %v2163
        %v2250 = vadd.f32 %v1860, %v2168
        %v2251 = vadd.f32 %v1861, %v2173
        %v2252 = vadd.f32 %v1862, %v2178
        %v2253 = vadd.f32 %v1863, %v2183
        %v2254 = vadd.f32 %v1864, %v2188
        %v2255 = vadd.f32 %v1865, %v2193
        %v2256 = vadd.f32 %v1866, %v2198
        %v2257 = vadd.f32 %v1867, %v2203
        %v2258 = vadd.f32 %v1868, %v2208
        %v2259 = vadd.f32 %v1869, %v2213
        %v2260 = vadd.f32 %v1870, %v2218
        %v2261 = vadd.f32 %v1871, %v2223
        %v2262 = vadd.f32 %v1872, %v2228
        %v2263 = vld [vmem:[%s343 + $0x4] sm:$0xff]
        %v2264 = vld [vmem:[%s343 + $0xc] sm:$0xff]
        %v2265 = vld [vmem:[%s343 + $0x1c] sm:$0xff]
        %v2266 = vld [vmem:[%s343 + $0x24] sm:$0xff]
        %v2267 = vld [vmem:[%s343 + $0x34] sm:$0xff]
        %v2268 = vld [vmem:[%s343 + $0x3c] sm:$0xff]
        %v2269 = vld [vmem:[%s343 + $0x4c] sm:$0xff]
        %v2270 = vld [vmem:[%s343 + $0x54] sm:$0xff]
        %v2271 = vld [vmem:[%s343 + $0x64] sm:$0xff]
        %v2272 = vld [vmem:[%s343 + $0x6c] sm:$0xff]
        %v2273 = vld [vmem:[%s343 + $0x7c] sm:$0xff]
        %v2274 = vld [vmem:[%s343 + $0x84] sm:$0xff]
        %v2275 = vld [vmem:[%s343 + $0x94] sm:$0xff]
        %v2276 = vld [vmem:[%s343 + $0x9c] sm:$0xff]
        %v2277 = vld [vmem:[%s343 + $0xac] sm:$0xff]
        %v2278 = vld [vmem:[%s343 + $0xb4] sm:$0xff]
        %v2279 = vld [vmem:[%s343 + $0xc4] sm:$0xff]
        %v2280 = vld [vmem:[%s343 + $0xcc] sm:$0xff]
        %v2281 = vld [vmem:[%s343 + $0xdc] sm:$0xff]
        %v2282 = vld [vmem:[%s343 + $0xe4] sm:$0xff]
        %v2283 = vld [vmem:[%s343 + $0xf4] sm:$0xff]
        %v2284 = vld [vmem:[%s343 + $0xfc] sm:$0xff]
        %v2285 = vld [vmem:[%s343 + $0x10c] sm:$0xff]
        %v2286 = vld [vmem:[%s343 + $0x114] sm:$0xff]
        %v2287 = vld [vmem:[%s343 + $0x124] sm:$0xff]
        %v2288 = vld [vmem:[%s343 + $0x12c] sm:$0xff]
        %v2289 = vld [vmem:[%s343 + $0x13c] sm:$0xff]
        %v2290 = vld [vmem:[%s343 + $0x144] sm:$0xff]
        %v2291 = vld [vmem:[%s343 + $0x154] sm:$0xff]
        %v2292 = vld [vmem:[%s343 + $0x15c] sm:$0xff]
        %v2293 = vld [vmem:[%s343 + $0x16c] sm:$0xff]
        %v2294 = vld [vmem:[%s343 + $0x174] sm:$0xff]
        %s2295 = scalar_lea.vmem %s232, 20
        %v2296 = vld [vmem:[%s2295] sm:$0xf]
        %v2298 = vsel %vm344, %v2263, 0
        %v2301 = vsel %vm344, %v2264, 0
        %v2304 = vsel %vm344, %v2265, 0
        %v2307 = vsel %vm344, %v2266, 0
        %v2310 = vsel %vm344, %v2267, 0
        %v2313 = vsel %vm344, %v2268, 0
        %v2316 = vsel %vm344, %v2269, 0
        %v2319 = vsel %vm344, %v2270, 0
        %v2322 = vsel %vm344, %v2271, 0
        %v2325 = vsel %vm344, %v2272, 0
        %v2328 = vsel %vm344, %v2273, 0
        %v2331 = vsel %vm344, %v2274, 0
        %v2334 = vsel %vm344, %v2275, 0
        %v2337 = vsel %vm344, %v2276, 0
        %v2340 = vsel %vm344, %v2277, 0
        %v2343 = vsel %vm344, %v2278, 0
        %v2346 = vsel %vm344, %v2279, 0
        %v2349 = vsel %vm344, %v2280, 0
        %v2352 = vsel %vm344, %v2281, 0
        %v2355 = vsel %vm344, %v2282, 0
        %v2358 = vsel %vm344, %v2283, 0
        %v2361 = vsel %vm344, %v2284, 0
        %v2364 = vsel %vm344, %v2285, 0
        %v2367 = vsel %vm344, %v2286, 0
        %v2370 = vsel %vm344, %v2287, 0
        %v2373 = vsel %vm344, %v2288, 0
        %v2376 = vsel %vm344, %v2289, 0
        %v2379 = vsel %vm344, %v2290, 0
        %v2382 = vsel %vm344, %v2291, 0
        %v2385 = vsel %vm344, %v2292, 0
        %v2388 = vsel %vm344, %v2293, 0
        %v2391 = vsel %vm344, %v2294, 0
        %v2394 = vsel %vm540, %v2296, 0
        %2396 = vmatprep.subr.mxu0 0.0
        %2397 = vmatpush1.msra.mxu0 %v2394
        %2398 = vmatprep.subr.mxu0 0.0
        %2399 = vmatpush1.msra.mxu0 0.0
        %2400 = vmatprep.subr.mxu0 0.0
        %2401 = vmatpush1.msra.mxu0 0.0
        %2402 = vmatprep.subr.mxu0 0.0
        %2403 = vmatpush1.msra.mxu0 0.0
        %2404 = vmatprep.subr.mxu0 0.0
        %2405 = vmatpush1.msra.mxu0 0.0
        %2406 = vmatprep.subr.mxu0 0.0
        %2407 = vmatpush1.msra.mxu0 0.0
        %2408 = vmatprep.subr.mxu0 0.0
        %2409 = vmatpush1.msra.mxu0 0.0
        %2410 = vmatprep.subr.mxu0 0.0
        %2411 = vmatpush1.msra.mxu0 0.0
        %2412 = vmatprep.subr.mxu0 0.0
        %2413 = vmatpush1.msra.mxu0 0.0
        %2414 = vmatprep.subr.mxu0 0.0
        %2415 = vmatpush1.msra.mxu0 0.0
        %2416 = vmatprep.subr.mxu0 0.0
        %2417 = vmatpush1.msra.mxu0 0.0
        %2418 = vmatprep.subr.mxu0 0.0
        %2419 = vmatpush1.msra.mxu0 0.0
        %2420 = vmatprep.subr.mxu0 0.0
        %2421 = vmatpush1.msra.mxu0 0.0
        %2422 = vmatprep.subr.mxu0 0.0
        %2423 = vmatpush1.msra.mxu0 0.0
        %2424 = vmatprep.subr.mxu0 0.0
        %2425 = vmatpush1.msra.mxu0 0.0
        %2426 = vmatprep.subr.mxu0 0.0
        %2427 = vmatpush1.msra.mxu0 0.0
        %2428 = vmatprep.subr.mxu0 0.0
        %2429 = vmatpush1.msra.mxu0 0.0
        %2430 = vmatprep.subr.mxu0 0.0
        %2431 = vmatpush1.msra.mxu0 0.0
        %2432 = vmatprep.subr.mxu0 0.0
        %2433 = vmatpush1.msra.mxu0 0.0
        %2434 = vmatprep.subr.mxu0 0.0
        %2435 = vmatpush1.msra.mxu0 0.0
        %2436 = vmatprep.subr.mxu0 0.0
        %2437 = vmatpush1.msra.mxu0 0.0
        %2438 = vmatprep.subr.mxu0 0.0
        %2439 = vmatpush1.msra.mxu0 0.0
        %2440 = vmatprep.subr.mxu0 0.0
        %2441 = vmatpush1.msra.mxu0 0.0
        %2442 = vmatprep.subr.mxu0 0.0
        %2443 = vmatpush1.msra.mxu0 0.0
        %2444 = vmatprep.subr.mxu0 0.0
        %2445 = vmatpush1.msra.mxu0 0.0
        %2446 = vmatprep.subr.mxu0 0.0
        %2447 = vmatpush1.msra.mxu0 0.0
        %2448 = vmatprep.subr.mxu0 0.0
        %2449 = vmatpush1.msra.mxu0 0.0
        %2450 = vmatprep.subr.mxu0 0.0
        %2451 = vmatpush1.msra.mxu0 0.0
        %2452 = vmatprep.subr.mxu0 0.0
        %2453 = vmatpush1.msra.mxu0 0.0
        %2454 = vmatprep.subr.mxu0 0.0
        %2455 = vmatpush1.msra.mxu0 0.0
        %2456 = vmatprep.subr.mxu0 0.0
        %2457 = vmatpush1.msra.mxu0 0.0
        %2458 = vmatprep.subr.mxu0 0.0
        %2459 = vmatpush1.msra.mxu0 0.0
        %2460 = vmatprep.mubr.f32.mxu0 0.0
        %2461 = vmatmul.mubr.f32.gmra.mrb[0].mxu0 %v2298
        %v2462 = vpop.f32.mrb[0].mxu0
        %v2463 = vadd.f32 0.0, %v2462
        %v2464 = vpop.f32.mrb[0].mxu0
        %2465 = vmatprep.mubr.f32.mxu0 0.0
        %2466 = vmatmul.mubr.f32.gmra.mrb[0].mxu0 %v2301
        %v2467 = vpop.f32.mrb[0].mxu0
        %v2468 = vadd.f32 0.0, %v2467
        %v2469 = vpop.f32.mrb[0].mxu0
        %2470 = vmatprep.mubr.f32.mxu0 0.0
        %2471 = vmatmul.mubr.f32.gmra.mrb[0].mxu0 %v2304
        %v2472 = vpop.f32.mrb[0].mxu0
        %v2473 = vadd.f32 0.0, %v2472
        %v2474 = vpop.f32.mrb[0].mxu0
        %2475 = vmatprep.mubr.f32.mxu0 0.0
        %2476 = vmatmul.mubr.f32.gmra.mrb[0].mxu0 %v2307
        %v2477 = vpop.f32.mrb[0].mxu0
        %v2478 = vadd.f32 0.0, %v2477
        %v2479 = vpop.f32.mrb[0].mxu0
        %2480 = vmatprep.mubr.f32.mxu0 0.0
        %2481 = vmatmul.mubr.f32.gmra.mrb[0].mxu0 %v2310
        %v2482 = vpop.f32.mrb[0].mxu0
        %v2483 = vadd.f32 0.0, %v2482
        %v2484 = vpop.f32.mrb[0].mxu0
        %2485 = vmatprep.mubr.f32.mxu0 0.0
        %2486 = vmatmul.mubr.f32.gmra.mrb[0].mxu0 %v2313
        %v2487 = vpop.f32.mrb[0].mxu0
        %v2488 = vadd.f32 0.0, %v2487
        %v2489 = vpop.f32.mrb[0].mxu0
        %2490 = vmatprep.mubr.f32.mxu0 0.0
        %2491 = vmatmul.mubr.f32.gmra.mrb[0].mxu0 %v2316
        %v2492 = vpop.f32.mrb[0].mxu0
        %v2493 = vadd.f32 0.0, %v2492
        %v2494 = vpop.f32.mrb[0].mxu0
        %2495 = vmatprep.mubr.f32.mxu0 0.0
        %2496 = vmatmul.mubr.f32.gmra.mrb[0].mxu0 %v2319
        %v2497 = vpop.f32.mrb[0].mxu0
        %v2498 = vadd.f32 0.0, %v2497
        %v2499 = vpop.f32.mrb[0].mxu0
        %2500 = vmatprep.mubr.f32.mxu0 0.0
        %2501 = vmatmul.mubr.f32.gmra.mrb[0].mxu0 %v2322
        %v2502 = vpop.f32.mrb[0].mxu0
        %v2503 = vadd.f32 0.0, %v2502
        %v2504 = vpop.f32.mrb[0].mxu0
        %2505 = vmatprep.mubr.f32.mxu0 0.0
        %2506 = vmatmul.mubr.f32.gmra.mrb[0].mxu0 %v2325
        %v2507 = vpop.f32.mrb[0].mxu0
        %v2508 = vadd.f32 0.0, %v2507
        %v2509 = vpop.f32.mrb[0].mxu0
        %2510 = vmatprep.mubr.f32.mxu0 0.0
        %2511 = vmatmul.mubr.f32.gmra.mrb[0].mxu0 %v2328
        %v2512 = vpop.f32.mrb[0].mxu0
        %v2513 = vadd.f32 0.0, %v2512
        %v2514 = vpop.f32.mrb[0].mxu0
        %2515 = vmatprep.mubr.f32.mxu0 0.0
        %2516 = vmatmul.mubr.f32.gmra.mrb[0].mxu0 %v2331
        %v2517 = vpop.f32.mrb[0].mxu0
        %v2518 = vadd.f32 0.0, %v2517
        %v2519 = vpop.f32.mrb[0].mxu0
        %2520 = vmatprep.mubr.f32.mxu0 0.0
        %2521 = vmatmul.mubr.f32.gmra.mrb[0].mxu0 %v2334
        %v2522 = vpop.f32.mrb[0].mxu0
        %v2523 = vadd.f32 0.0, %v2522
        %v2524 = vpop.f32.mrb[0].mxu0
        %2525 = vmatprep.mubr.f32.mxu0 0.0
        %2526 = vmatmul.mubr.f32.gmra.mrb[0].mxu0 %v2337
        %v2527 = vpop.f32.mrb[0].mxu0
        %v2528 = vadd.f32 0.0, %v2527
        %v2529 = vpop.f32.mrb[0].mxu0
        %2530 = vmatprep.mubr.f32.mxu0 0.0
        %2531 = vmatmul.mubr.f32.gmra.mrb[0].mxu0 %v2340
        %v2532 = vpop.f32.mrb[0].mxu0
        %v2533 = vadd.f32 0.0, %v2532
        %v2534 = vpop.f32.mrb[0].mxu0
        %2535 = vmatprep.mubr.f32.mxu0 0.0
        %2536 = vmatmul.mubr.f32.gmra.mrb[0].mxu0 %v2343
        %v2537 = vpop.f32.mrb[0].mxu0
        %v2538 = vadd.f32 0.0, %v2537
        %v2539 = vpop.f32.mrb[0].mxu0
        %2540 = vmatprep.mubr.f32.mxu0 0.0
        %2541 = vmatmul.mubr.f32.gmra.mrb[0].mxu0 %v2346
        %v2542 = vpop.f32.mrb[0].mxu0
        %v2543 = vadd.f32 0.0, %v2542
        %v2544 = vpop.f32.mrb[0].mxu0
        %2545 = vmatprep.mubr.f32.mxu0 0.0
        %2546 = vmatmul.mubr.f32.gmra.mrb[0].mxu0 %v2349
        %v2547 = vpop.f32.mrb[0].mxu0
        %v2548 = vadd.f32 0.0, %v2547
        %v2549 = vpop.f32.mrb[0].mxu0
        %2550 = vmatprep.mubr.f32.mxu0 0.0
        %2551 = vmatmul.mubr.f32.gmra.mrb[0].mxu0 %v2352
        %v2552 = vpop.f32.mrb[0].mxu0
        %v2553 = vadd.f32 0.0, %v2552
        %v2554 = vpop.f32.mrb[0].mxu0
        %2555 = vmatprep.mubr.f32.mxu0 0.0
        %2556 = vmatmul.mubr.f32.gmra.mrb[0].mxu0 %v2355
        %v2557 = vpop.f32.mrb[0].mxu0
        %v2558 = vadd.f32 0.0, %v2557
        %v2559 = vpop.f32.mrb[0].mxu0
        %2560 = vmatprep.mubr.f32.mxu0 0.0
        %2561 = vmatmul.mubr.f32.gmra.mrb[0].mxu0 %v2358
        %v2562 = vpop.f32.mrb[0].mxu0
        %v2563 = vadd.f32 0.0, %v2562
        %v2564 = vpop.f32.mrb[0].mxu0
        %2565 = vmatprep.mubr.f32.mxu0 0.0
        %2566 = vmatmul.mubr.f32.gmra.mrb[0].mxu0 %v2361
        %v2567 = vpop.f32.mrb[0].mxu0
        %v2568 = vadd.f32 0.0, %v2567
        %v2569 = vpop.f32.mrb[0].mxu0
        %2570 = vmatprep.mubr.f32.mxu0 0.0
        %2571 = vmatmul.mubr.f32.gmra.mrb[0].mxu0 %v2364
        %v2572 = vpop.f32.mrb[0].mxu0
        %v2573 = vadd.f32 0.0, %v2572
        %v2574 = vpop.f32.mrb[0].mxu0
        %2575 = vmatprep.mubr.f32.mxu0 0.0
        %2576 = vmatmul.mubr.f32.gmra.mrb[0].mxu0 %v2367
        %v2577 = vpop.f32.mrb[0].mxu0
        %v2578 = vadd.f32 0.0, %v2577
        %v2579 = vpop.f32.mrb[0].mxu0
        %2580 = vmatprep.mubr.f32.mxu0 0.0
        %2581 = vmatmul.mubr.f32.gmra.mrb[0].mxu0 %v2370
        %v2582 = vpop.f32.mrb[0].mxu0
        %v2583 = vadd.f32 0.0, %v2582
        %v2584 = vpop.f32.mrb[0].mxu0
        %2585 = vmatprep.mubr.f32.mxu0 0.0
        %2586 = vmatmul.mubr.f32.gmra.mrb[0].mxu0 %v2373
        %v2587 = vpop.f32.mrb[0].mxu0
        %v2588 = vadd.f32 0.0, %v2587
        %v2589 = vpop.f32.mrb[0].mxu0
        %2590 = vmatprep.mubr.f32.mxu0 0.0
        %2591 = vmatmul.mubr.f32.gmra.mrb[0].mxu0 %v2376
        %v2592 = vpop.f32.mrb[0].mxu0
        %v2593 = vadd.f32 0.0, %v2592
        %v2594 = vpop.f32.mrb[0].mxu0
        %2595 = vmatprep.mubr.f32.mxu0 0.0
        %2596 = vmatmul.mubr.f32.gmra.mrb[0].mxu0 %v2379
        %v2597 = vpop.f32.mrb[0].mxu0
        %v2598 = vadd.f32 0.0, %v2597
        %v2599 = vpop.f32.mrb[0].mxu0
        %2600 = vmatprep.mubr.f32.mxu0 0.0
        %2601 = vmatmul.mubr.f32.gmra.mrb[0].mxu0 %v2382
        %v2602 = vpop.f32.mrb[0].mxu0
        %v2603 = vadd.f32 0.0, %v2602
        %v2604 = vpop.f32.mrb[0].mxu0
        %2605 = vmatprep.mubr.f32.mxu0 0.0
        %2606 = vmatmul.mubr.f32.gmra.mrb[0].mxu0 %v2385
        %v2607 = vpop.f32.mrb[0].mxu0
        %v2608 = vadd.f32 0.0, %v2607
        %v2609 = vpop.f32.mrb[0].mxu0
        %2610 = vmatprep.mubr.f32.mxu0 0.0
        %2611 = vmatmul.mubr.f32.gmra.mrb[0].mxu0 %v2388
        %v2612 = vpop.f32.mrb[0].mxu0
        %v2613 = vadd.f32 0.0, %v2612
        %v2614 = vpop.f32.mrb[0].mxu0
        %2615 = vmatprep.mubr.f32.mxu0 0.0
        %2616 = vmatmul.mubr.f32.gmra.mrb[0].mxu0 %v2391
        %v2617 = vpop.f32.mrb[0].mxu0
        %v2618 = vadd.f32 0.0, %v2617
        %v2619 = vpop.f32.mrb[0].mxu0
        %2620 = vdwg.mxu0
        %v2621 = vadd.f32 %v2231, %v2463
        %v2622 = vadd.f32 %v2232, %v2468
        %v2623 = vadd.f32 %v2233, %v2473
        %v2624 = vadd.f32 %v2234, %v2478
        %v2625 = vadd.f32 %v2235, %v2483
        %v2626 = vadd.f32 %v2236, %v2488
        %v2627 = vadd.f32 %v2237, %v2493
        %v2628 = vadd.f32 %v2238, %v2498
        %v2629 = vadd.f32 %v2239, %v2503
        %v2630 = vadd.f32 %v2240, %v2508
        %v2631 = vadd.f32 %v2241, %v2513
        %v2632 = vadd.f32 %v2242, %v2518
        %v2633 = vadd.f32 %v2243, %v2523
        %v2634 = vadd.f32 %v2244, %v2528
        %v2635 = vadd.f32 %v2245, %v2533
        %v2636 = vadd.f32 %v2246, %v2538
        %v2637 = vadd.f32 %v2247, %v2543
        %v2638 = vadd.f32 %v2248, %v2548
        %v2639 = vadd.f32 %v2249, %v2553
        %v2640 = vadd.f32 %v2250, %v2558
        %v2641 = vadd.f32 %v2251, %v2563
        %v2642 = vadd.f32 %v2252, %v2568
        %v2643 = vadd.f32 %v2253, %v2573
        %v2644 = vadd.f32 %v2254, %v2578
        %v2645 = vadd.f32 %v2255, %v2583
        %v2646 = vadd.f32 %v2256, %v2588
        %v2647 = vadd.f32 %v2257, %v2593
        %v2648 = vadd.f32 %v2258, %v2598
        %v2649 = vadd.f32 %v2259, %v2603
        %v2650 = vadd.f32 %v2260, %v2608
        %v2651 = vadd.f32 %v2261, %v2613
        %v2652 = vadd.f32 %v2262, %v2618
        %s2653 = scalar_lea.vmem [#allocation2], 96
        %v2654 = vld [vmem:[%s2653] sm:$0xff]
        %v2655 = vld [vmem:[%s2653 + $0x8] sm:$0xff]
        %v2656 = vld [vmem:[%s2653 + $0x18] sm:$0xff]
        %v2657 = vld [vmem:[%s2653 + $0x20] sm:$0xff]
        %v2658 = vld [vmem:[%s2653 + $0x30] sm:$0xff]
        %v2659 = vld [vmem:[%s2653 + $0x38] sm:$0xff]
        %v2660 = vld [vmem:[%s2653 + $0x48] sm:$0xff]
        %v2661 = vld [vmem:[%s2653 + $0x50] sm:$0xff]
        %v2662 = vld [vmem:[%s2653 + $0x60] sm:$0xff]
        %v2663 = vld [vmem:[%s2653 + $0x68] sm:$0xff]
        %v2664 = vld [vmem:[%s2653 + $0x78] sm:$0xff]
        %v2665 = vld [vmem:[%s2653 + $0x80] sm:$0xff]
        %v2666 = vld [vmem:[%s2653 + $0x90] sm:$0xff]
        %v2667 = vld [vmem:[%s2653 + $0x98] sm:$0xff]
        %v2668 = vld [vmem:[%s2653 + $0xa8] sm:$0xff]
        %v2669 = vld [vmem:[%s2653 + $0xb0] sm:$0xff]
        %v2670 = vld [vmem:[%s2653 + $0xc0] sm:$0xff]
        %v2671 = vld [vmem:[%s2653 + $0xc8] sm:$0xff]
        %v2672 = vld [vmem:[%s2653 + $0xd8] sm:$0xff]
        %v2673 = vld [vmem:[%s2653 + $0xe0] sm:$0xff]
        %v2674 = vld [vmem:[%s2653 + $0xf0] sm:$0xff]
        %v2675 = vld [vmem:[%s2653 + $0xf8] sm:$0xff]
        %v2676 = vld [vmem:[%s2653 + $0x108] sm:$0xff]
        %v2677 = vld [vmem:[%s2653 + $0x110] sm:$0xff]
        %v2678 = vld [vmem:[%s2653 + $0x120] sm:$0xff]
        %v2679 = vld [vmem:[%s2653 + $0x128] sm:$0xff]
        %v2680 = vld [vmem:[%s2653 + $0x138] sm:$0xff]
        %v2681 = vld [vmem:[%s2653 + $0x140] sm:$0xff]
        %v2682 = vld [vmem:[%s2653 + $0x150] sm:$0xff]
        %v2683 = vld [vmem:[%s2653 + $0x158] sm:$0xff]
        %v2684 = vld [vmem:[%s2653 + $0x168] sm:$0xff]
        %v2685 = vld [vmem:[%s2653 + $0x170] sm:$0xff]
        %s2686 = scalar_lea.vmem %s232, 24
        %v2687 = vld [vmem:[%s2686] sm:$0xf]
        %v2689 = vsel %vm344, %v2654, 0
        %v2692 = vsel %vm344, %v2655, 0
        %v2695 = vsel %vm344, %v2656, 0
        %v2698 = vsel %vm344, %v2657, 0
        %v2701 = vsel %vm344, %v2658, 0
        %v2704 = vsel %vm344, %v2659, 0
        %v2707 = vsel %vm344, %v2660, 0
        %v2710 = vsel %vm344, %v2661, 0
        %v2713 = vsel %vm344, %v2662, 0
        %v2716 = vsel %vm344, %v2663, 0
        %v2719 = vsel %vm344, %v2664, 0
        %v2722 = vsel %vm344, %v2665, 0
        %v2725 = vsel %vm344, %v2666, 0
        %v2728 = vsel %vm344, %v2667, 0
        %v2731 = vsel %vm344, %v2668, 0
        %v2734 = vsel %vm344, %v2669, 0
        %v2737 = vsel %vm344, %v2670, 0
        %v2740 = vsel %vm344, %v2671, 0
        %v2743 = vsel %vm344, %v2672, 0
        %v2746 = vsel %vm344, %v2673, 0
        %v2749 = vsel %vm344, %v2674, 0
        %v2752 = vsel %vm344, %v2675, 0
        %v2755 = vsel %vm344, %v2676, 0
        %v2758 = vsel %vm344, %v2677, 0
        %v2761 = vsel %vm344, %v2678, 0
        %v2764 = vsel %vm344, %v2679, 0
        %v2767 = vsel %vm344, %v2680, 0
        %v2770 = vsel %vm344, %v2681, 0
        %v2773 = vsel %vm344, %v2682, 0
        %v2776 = vsel %vm344, %v2683, 0
        %v2779 = vsel %vm344, %v2684, 0
        %v2782 = vsel %vm344, %v2685, 0
        %v2785 = vsel %vm540, %v2687, 0
        %2787 = vmatprep.subr.mxu0 0.0
        %2788 = vmatpush1.msra.mxu0 %v2785
        %2789 = vmatprep.subr.mxu0 0.0
        %2790 = vmatpush1.msra.mxu0 0.0
        %2791 = vmatprep.subr.mxu0 0.0
        %2792 = vmatpush1.msra.mxu0 0.0
        %2793 = vmatprep.subr.mxu0 0.0
        %2794 = vmatpush1.msra.mxu0 0.0
        %2795 = vmatprep.subr.mxu0 0.0
        %2796 = vmatpush1.msra.mxu0 0.0
        %2797 = vmatprep.subr.mxu0 0.0
        %2798 = vmatpush1.msra.mxu0 0.0
        %2799 = vmatprep.subr.mxu0 0.0
        %2800 = vmatpush1.msra.mxu0 0.0
        %2801 = vmatprep.subr.mxu0 0.0
        %2802 = vmatpush1.msra.mxu0 0.0
        %2803 = vmatprep.subr.mxu0 0.0
        %2804 = vmatpush1.msra.mxu0 0.0
        %2805 = vmatprep.subr.mxu0 0.0
        %2806 = vmatpush1.msra.mxu0 0.0
        %2807 = vmatprep.subr.mxu0 0.0
        %2808 = vmatpush1.msra.mxu0 0.0
        %2809 = vmatprep.subr.mxu0 0.0
        %2810 = vmatpush1.msra.mxu0 0.0
        %2811 = vmatprep.subr.mxu0 0.0
        %2812 = vmatpush1.msra.mxu0 0.0
        %2813 = vmatprep.subr.mxu0 0.0
        %2814 = vmatpush1.msra.mxu0 0.0
        %2815 = vmatprep.subr.mxu0 0.0
        %2816 = vmatpush1.msra.mxu0 0.0
        %2817 = vmatprep.subr.mxu0 0.0
        %2818 = vmatpush1.msra.mxu0 0.0
        %2819 = vmatprep.subr.mxu0 0.0
        %2820 = vmatpush1.msra.mxu0 0.0
        %2821 = vmatprep.subr.mxu0 0.0
        %2822 = vmatpush1.msra.mxu0 0.0
        %2823 = vmatprep.subr.mxu0 0.0
        %2824 = vmatpush1.msra.mxu0 0.0
        %2825 = vmatprep.subr.mxu0 0.0
        %2826 = vmatpush1.msra.mxu0 0.0
        %2827 = vmatprep.subr.mxu0 0.0
        %2828 = vmatpush1.msra.mxu0 0.0
        %2829 = vmatprep.subr.mxu0 0.0
        %2830 = vmatpush1.msra.mxu0 0.0
        %2831 = vmatprep.subr.mxu0 0.0
        %2832 = vmatpush1.msra.mxu0 0.0
        %2833 = vmatprep.subr.mxu0 0.0
        %2834 = vmatpush1.msra.mxu0 0.0
        %2835 = vmatprep.subr.mxu0 0.0
        %2836 = vmatpush1.msra.mxu0 0.0
        %2837 = vmatprep.subr.mxu0 0.0
        %2838 = vmatpush1.msra.mxu0 0.0
        %2839 = vmatprep.subr.mxu0 0.0
        %2840 = vmatpush1.msra.mxu0 0.0
        %2841 = vmatprep.subr.mxu0 0.0
        %2842 = vmatpush1.msra.mxu0 0.0
        %2843 = vmatprep.subr.mxu0 0.0
        %2844 = vmatpush1.msra.mxu0 0.0
        %2845 = vmatprep.subr.mxu0 0.0
        %2846 = vmatpush1.msra.mxu0 0.0
        %2847 = vmatprep.subr.mxu0 0.0
        %2848 = vmatpush1.msra.mxu0 0.0
        %2849 = vmatprep.subr.mxu0 0.0
        %2850 = vmatpush1.msra.mxu0 0.0
        %2851 = vmatprep.mubr.f32.mxu0 0.0
        %2852 = vmatmul.mubr.f32.gmra.mrb[0].mxu0 %v2689
        %v2853 = vpop.f32.mrb[0].mxu0
        %v2854 = vadd.f32 0.0, %v2853
        %v2855 = vpop.f32.mrb[0].mxu0
        %2856 = vmatprep.mubr.f32.mxu0 0.0
        %2857 = vmatmul.mubr.f32.gmra.mrb[0].mxu0 %v2692
        %v2858 = vpop.f32.mrb[0].mxu0
        %v2859 = vadd.f32 0.0, %v2858
        %v2860 = vpop.f32.mrb[0].mxu0
        %2861 = vmatprep.mubr.f32.mxu0 0.0
        %2862 = vmatmul.mubr.f32.gmra.mrb[0].mxu0 %v2695
        %v2863 = vpop.f32.mrb[0].mxu0
        %v2864 = vadd.f32 0.0, %v2863
        %v2865 = vpop.f32.mrb[0].mxu0
        %2866 = vmatprep.mubr.f32.mxu0 0.0
        %2867 = vmatmul.mubr.f32.gmra.mrb[0].mxu0 %v2698
        %v2868 = vpop.f32.mrb[0].mxu0
        %v2869 = vadd.f32 0.0, %v2868
        %v2870 = vpop.f32.mrb[0].mxu0
        %2871 = vmatprep.mubr.f32.mxu0 0.0
        %2872 = vmatmul.mubr.f32.gmra.mrb[0].mxu0 %v2701
        %v2873 = vpop.f32.mrb[0].mxu0
        %v2874 = vadd.f32 0.0, %v2873
        %v2875 = vpop.f32.mrb[0].mxu0
        %2876 = vmatprep.mubr.f32.mxu0 0.0
        %2877 = vmatmul.mubr.f32.gmra.mrb[0].mxu0 %v2704
        %v2878 = vpop.f32.mrb[0].mxu0
        %v2879 = vadd.f32 0.0, %v2878
        %v2880 = vpop.f32.mrb[0].mxu0
        %2881 = vmatprep.mubr.f32.mxu0 0.0
        %2882 = vmatmul.mubr.f32.gmra.mrb[0].mxu0 %v2707
        %v2883 = vpop.f32.mrb[0].mxu0
        %v2884 = vadd.f32 0.0, %v2883
        %v2885 = vpop.f32.mrb[0].mxu0
        %2886 = vmatprep.mubr.f32.mxu0 0.0
        %2887 = vmatmul.mubr.f32.gmra.mrb[0].mxu0 %v2710
        %v2888 = vpop.f32.mrb[0].mxu0
        %v2889 = vadd.f32 0.0, %v2888
        %v2890 = vpop.f32.mrb[0].mxu0
        %2891 = vmatprep.mubr.f32.mxu0 0.0
        %2892 = vmatmul.mubr.f32.gmra.mrb[0].mxu0 %v2713
        %v2893 = vpop.f32.mrb[0].mxu0
        %v2894 = vadd.f32 0.0, %v2893
        %v2895 = vpop.f32.mrb[0].mxu0
        %2896 = vmatprep.mubr.f32.mxu0 0.0
        %2897 = vmatmul.mubr.f32.gmra.mrb[0].mxu0 %v2716
        %v2898 = vpop.f32.mrb[0].mxu0
        %v2899 = vadd.f32 0.0, %v2898
        %v2900 = vpop.f32.mrb[0].mxu0
        %2901 = vmatprep.mubr.f32.mxu0 0.0
        %2902 = vmatmul.mubr.f32.gmra.mrb[0].mxu0 %v2719
        %v2903 = vpop.f32.mrb[0].mxu0
        %v2904 = vadd.f32 0.0, %v2903
        %v2905 = vpop.f32.mrb[0].mxu0
        %2906 = vmatprep.mubr.f32.mxu0 0.0
        %2907 = vmatmul.mubr.f32.gmra.mrb[0].mxu0 %v2722
        %v2908 = vpop.f32.mrb[0].mxu0
        %v2909 = vadd.f32 0.0, %v2908
        %v2910 = vpop.f32.mrb[0].mxu0
        %2911 = vmatprep.mubr.f32.mxu0 0.0
        %2912 = vmatmul.mubr.f32.gmra.mrb[0].mxu0 %v2725
        %v2913 = vpop.f32.mrb[0].mxu0
        %v2914 = vadd.f32 0.0, %v2913
        %v2915 = vpop.f32.mrb[0].mxu0
        %2916 = vmatprep.mubr.f32.mxu0 0.0
        %2917 = vmatmul.mubr.f32.gmra.mrb[0].mxu0 %v2728
        %v2918 = vpop.f32.mrb[0].mxu0
        %v2919 = vadd.f32 0.0, %v2918
        %v2920 = vpop.f32.mrb[0].mxu0
        %2921 = vmatprep.mubr.f32.mxu0 0.0
        %2922 = vmatmul.mubr.f32.gmra.mrb[0].mxu0 %v2731
        %v2923 = vpop.f32.mrb[0].mxu0
        %v2924 = vadd.f32 0.0, %v2923
        %v2925 = vpop.f32.mrb[0].mxu0
        %2926 = vmatprep.mubr.f32.mxu0 0.0
        %2927 = vmatmul.mubr.f32.gmra.mrb[0].mxu0 %v2734
        %v2928 = vpop.f32.mrb[0].mxu0
        %v2929 = vadd.f32 0.0, %v2928
        %v2930 = vpop.f32.mrb[0].mxu0
        %2931 = vmatprep.mubr.f32.mxu0 0.0
        %2932 = vmatmul.mubr.f32.gmra.mrb[0].mxu0 %v2737
        %v2933 = vpop.f32.mrb[0].mxu0
        %v2934 = vadd.f32 0.0, %v2933
        %v2935 = vpop.f32.mrb[0].mxu0
        %2936 = vmatprep.mubr.f32.mxu0 0.0
        %2937 = vmatmul.mubr.f32.gmra.mrb[0].mxu0 %v2740
        %v2938 = vpop.f32.mrb[0].mxu0
        %v2939 = vadd.f32 0.0, %v2938
        %v2940 = vpop.f32.mrb[0].mxu0
        %2941 = vmatprep.mubr.f32.mxu0 0.0
        %2942 = vmatmul.mubr.f32.gmra.mrb[0].mxu0 %v2743
        %v2943 = vpop.f32.mrb[0].mxu0
        %v2944 = vadd.f32 0.0, %v2943
        %v2945 = vpop.f32.mrb[0].mxu0
        %2946 = vmatprep.mubr.f32.mxu0 0.0
        %2947 = vmatmul.mubr.f32.gmra.mrb[0].mxu0 %v2746
        %v2948 = vpop.f32.mrb[0].mxu0
        %v2949 = vadd.f32 0.0, %v2948
        %v2950 = vpop.f32.mrb[0].mxu0
        %2951 = vmatprep.mubr.f32.mxu0 0.0
        %2952 = vmatmul.mubr.f32.gmra.mrb[0].mxu0 %v2749
        %v2953 = vpop.f32.mrb[0].mxu0
        %v2954 = vadd.f32 0.0, %v2953
        %v2955 = vpop.f32.mrb[0].mxu0
        %2956 = vmatprep.mubr.f32.mxu0 0.0
        %2957 = vmatmul.mubr.f32.gmra.mrb[0].mxu0 %v2752
        %v2958 = vpop.f32.mrb[0].mxu0
        %v2959 = vadd.f32 0.0, %v2958
        %v2960 = vpop.f32.mrb[0].mxu0
        %2961 = vmatprep.mubr.f32.mxu0 0.0
        %2962 = vmatmul.mubr.f32.gmra.mrb[0].mxu0 %v2755
        %v2963 = vpop.f32.mrb[0].mxu0
        %v2964 = vadd.f32 0.0, %v2963
        %v2965 = vpop.f32.mrb[0].mxu0
        %2966 = vmatprep.mubr.f32.mxu0 0.0
        %2967 = vmatmul.mubr.f32.gmra.mrb[0].mxu0 %v2758
        %v2968 = vpop.f32.mrb[0].mxu0
        %v2969 = vadd.f32 0.0, %v2968
        %v2970 = vpop.f32.mrb[0].mxu0
        %2971 = vmatprep.mubr.f32.mxu0 0.0
        %2972 = vmatmul.mubr.f32.gmra.mrb[0].mxu0 %v2761
        %v2973 = vpop.f32.mrb[0].mxu0
        %v2974 = vadd.f32 0.0, %v2973
        %v2975 = vpop.f32.mrb[0].mxu0
        %2976 = vmatprep.mubr.f32.mxu0 0.0
        %2977 = vmatmul.mubr.f32.gmra.mrb[0].mxu0 %v2764
        %v2978 = vpop.f32.mrb[0].mxu0
        %v2979 = vadd.f32 0.0, %v2978
        %v2980 = vpop.f32.mrb[0].mxu0
        %2981 = vmatprep.mubr.f32.mxu0 0.0
        %2982 = vmatmul.mubr.f32.gmra.mrb[0].mxu0 %v2767
        %v2983 = vpop.f32.mrb[0].mxu0
        %v2984 = vadd.f32 0.0, %v2983
        %v2985 = vpop.f32.mrb[0].mxu0
        %2986 = vmatprep.mubr.f32.mxu0 0.0
        %2987 = vmatmul.mubr.f32.gmra.mrb[0].mxu0 %v2770
        %v2988 = vpop.f32.mrb[0].mxu0
        %v2989 = vadd.f32 0.0, %v2988
        %v2990 = vpop.f32.mrb[0].mxu0
        %2991 = vmatprep.mubr.f32.mxu0 0.0
        %2992 = vmatmul.mubr.f32.gmra.mrb[0].mxu0 %v2773
        %v2993 = vpop.f32.mrb[0].mxu0
        %v2994 = vadd.f32 0.0, %v2993
        %v2995 = vpop.f32.mrb[0].mxu0
        %2996 = vmatprep.mubr.f32.mxu0 0.0
        %2997 = vmatmul.mubr.f32.gmra.mrb[0].mxu0 %v2776
        %v2998 = vpop.f32.mrb[0].mxu0
        %v2999 = vadd.f32 0.0, %v2998
        %v3000 = vpop.f32.mrb[0].mxu0
        %3001 = vmatprep.mubr.f32.mxu0 0.0
        %3002 = vmatmul.mubr.f32.gmra.mrb[0].mxu0 %v2779
        %v3003 = vpop.f32.mrb[0].mxu0
        %v3004 = vadd.f32 0.0, %v3003
        %v3005 = vpop.f32.mrb[0].mxu0
        %3006 = vmatprep.mubr.f32.mxu0 0.0
        %3007 = vmatmul.mubr.f32.gmra.mrb[0].mxu0 %v2782
        %v3008 = vpop.f32.mrb[0].mxu0
        %v3009 = vadd.f32 0.0, %v3008
        %v3010 = vpop.f32.mrb[0].mxu0
        %3011 = vdwg.mxu0
        %v3012 = vadd.f32 %v2621, %v2854
        %v3013 = vadd.f32 %v2622, %v2859
        %v3014 = vadd.f32 %v2623, %v2864
        %v3015 = vadd.f32 %v2624, %v2869
        %v3016 = vadd.f32 %v2625, %v2874
        %v3017 = vadd.f32 %v2626, %v2879
        %v3018 = vadd.f32 %v2627, %v2884
        %v3019 = vadd.f32 %v2628, %v2889
        %v3020 = vadd.f32 %v2629, %v2894
        %v3021 = vadd.f32 %v2630, %v2899
        %v3022 = vadd.f32 %v2631, %v2904
        %v3023 = vadd.f32 %v2632, %v2909
        %v3024 = vadd.f32 %v2633, %v2914
        %v3025 = vadd.f32 %v2634, %v2919
        %v3026 = vadd.f32 %v2635, %v2924
        %v3027 = vadd.f32 %v2636, %v2929
        %v3028 = vadd.f32 %v2637, %v2934
        %v3029 = vadd.f32 %v2638, %v2939
        %v3030 = vadd.f32 %v2639, %v2944
        %v3031 = vadd.f32 %v2640, %v2949
        %v3032 = vadd.f32 %v2641, %v2954
        %v3033 = vadd.f32 %v2642, %v2959
        %v3034 = vadd.f32 %v2643, %v2964
        %v3035 = vadd.f32 %v2644, %v2969
        %v3036 = vadd.f32 %v2645, %v2974
        %v3037 = vadd.f32 %v2646, %v2979
        %v3038 = vadd.f32 %v2647, %v2984
        %v3039 = vadd.f32 %v2648, %v2989
        %v3040 = vadd.f32 %v2649, %v2994
        %v3041 = vadd.f32 %v2650, %v2999
        %v3042 = vadd.f32 %v2651, %v3004
        %v3043 = vadd.f32 %v2652, %v3009
        %v3044 = vld [vmem:[%s2653 + $0x2] sm:$0xff]
        %v3045 = vld [vmem:[%s2653 + $0xa] sm:$0xff]
        %v3046 = vld [vmem:[%s2653 + $0x1a] sm:$0xff]
        %v3047 = vld [vmem:[%s2653 + $0x22] sm:$0xff]
        %v3048 = vld [vmem:[%s2653 + $0x32] sm:$0xff]
        %v3049 = vld [vmem:[%s2653 + $0x3a] sm:$0xff]
        %v3050 = vld [vmem:[%s2653 + $0x4a] sm:$0xff]
        %v3051 = vld [vmem:[%s2653 + $0x52] sm:$0xff]
        %v3052 = vld [vmem:[%s2653 + $0x62] sm:$0xff]
        %v3053 = vld [vmem:[%s2653 + $0x6a] sm:$0xff]
        %v3054 = vld [vmem:[%s2653 + $0x7a] sm:$0xff]
        %v3055 = vld [vmem:[%s2653 + $0x82] sm:$0xff]
        %v3056 = vld [vmem:[%s2653 + $0x92] sm:$0xff]
        %v3057 = vld [vmem:[%s2653 + $0x9a] sm:$0xff]
        %v3058 = vld [vmem:[%s2653 + $0xaa] sm:$0xff]
        %v3059 = vld [vmem:[%s2653 + $0xb2] sm:$0xff]
        %v3060 = vld [vmem:[%s2653 + $0xc2] sm:$0xff]
        %v3061 = vld [vmem:[%s2653 + $0xca] sm:$0xff]
        %v3062 = vld [vmem:[%s2653 + $0xda] sm:$0xff]
        %v3063 = vld [vmem:[%s2653 + $0xe2] sm:$0xff]
        %v3064 = vld [vmem:[%s2653 + $0xf2] sm:$0xff]
        %v3065 = vld [vmem:[%s2653 + $0xfa] sm:$0xff]
        %v3066 = vld [vmem:[%s2653 + $0x10a] sm:$0xff]
        %v3067 = vld [vmem:[%s2653 + $0x112] sm:$0xff]
        %v3068 = vld [vmem:[%s2653 + $0x122] sm:$0xff]
        %v3069 = vld [vmem:[%s2653 + $0x12a] sm:$0xff]
        %v3070 = vld [vmem:[%s2653 + $0x13a] sm:$0xff]
        %v3071 = vld [vmem:[%s2653 + $0x142] sm:$0xff]
        %v3072 = vld [vmem:[%s2653 + $0x152] sm:$0xff]
        %v3073 = vld [vmem:[%s2653 + $0x15a] sm:$0xff]
        %v3074 = vld [vmem:[%s2653 + $0x16a] sm:$0xff]
        %v3075 = vld [vmem:[%s2653 + $0x172] sm:$0xff]
        %s3076 = scalar_lea.vmem %s232, 28
        %v3077 = vld [vmem:[%s3076] sm:$0xf]
        %v3079 = vsel %vm344, %v3044, 0
        %v3082 = vsel %vm344, %v3045, 0
        %v3085 = vsel %vm344, %v3046, 0
        %v3088 = vsel %vm344, %v3047, 0
        %v3091 = vsel %vm344, %v3048, 0
        %v3094 = vsel %vm344, %v3049, 0
        %v3097 = vsel %vm344, %v3050, 0
        %v3100 = vsel %vm344, %v3051, 0
        %v3103 = vsel %vm344, %v3052, 0
        %v3106 = vsel %vm344, %v3053, 0
        %v3109 = vsel %vm344, %v3054, 0
        %v3112 = vsel %vm344, %v3055, 0
        %v3115 = vsel %vm344, %v3056, 0
        %v3118 = vsel %vm344, %v3057, 0
        %v3121 = vsel %vm344, %v3058, 0
        %v3124 = vsel %vm344, %v3059, 0
        %v3127 = vsel %vm344, %v3060, 0
        %v3130 = vsel %vm344, %v3061, 0
        %v3133 = vsel %vm344, %v3062, 0
        %v3136 = vsel %vm344, %v3063, 0
        %v3139 = vsel %vm344, %v3064, 0
        %v3142 = vsel %vm344, %v3065, 0
        %v3145 = vsel %vm344, %v3066, 0
        %v3148 = vsel %vm344, %v3067, 0
        %v3151 = vsel %vm344, %v3068, 0
        %v3154 = vsel %vm344, %v3069, 0
        %v3157 = vsel %vm344, %v3070, 0
        %v3160 = vsel %vm344, %v3071, 0
        %v3163 = vsel %vm344, %v3072, 0
        %v3166 = vsel %vm344, %v3073, 0
        %v3169 = vsel %vm344, %v3074, 0
        %v3172 = vsel %vm344, %v3075, 0
        %v3175 = vsel %vm540, %v3077, 0
        %3177 = vmatprep.subr.mxu0 0.0
        %3178 = vmatpush1.msra.mxu0 %v3175
        %3179 = vmatprep.subr.mxu0 0.0
        %3180 = vmatpush1.msra.mxu0 0.0
        %3181 = vmatprep.subr.mxu0 0.0
        %3182 = vmatpush1.msra.mxu0 0.0
        %3183 = vmatprep.subr.mxu0 0.0
        %3184 = vmatpush1.msra.mxu0 0.0
        %3185 = vmatprep.subr.mxu0 0.0
        %3186 = vmatpush1.msra.mxu0 0.0
        %3187 = vmatprep.subr.mxu0 0.0
        %3188 = vmatpush1.msra.mxu0 0.0
        %3189 = vmatprep.subr.mxu0 0.0
        %3190 = vmatpush1.msra.mxu0 0.0
        %3191 = vmatprep.subr.mxu0 0.0
        %3192 = vmatpush1.msra.mxu0 0.0
        %3193 = vmatprep.subr.mxu0 0.0
        %3194 = vmatpush1.msra.mxu0 0.0
        %3195 = vmatprep.subr.mxu0 0.0
        %3196 = vmatpush1.msra.mxu0 0.0
        %3197 = vmatprep.subr.mxu0 0.0
        %3198 = vmatpush1.msra.mxu0 0.0
        %3199 = vmatprep.subr.mxu0 0.0
        %3200 = vmatpush1.msra.mxu0 0.0
        %3201 = vmatprep.subr.mxu0 0.0
        %3202 = vmatpush1.msra.mxu0 0.0
        %3203 = vmatprep.subr.mxu0 0.0
        %3204 = vmatpush1.msra.mxu0 0.0
        %3205 = vmatprep.subr.mxu0 0.0
        %3206 = vmatpush1.msra.mxu0 0.0
        %3207 = vmatprep.subr.mxu0 0.0
        %3208 = vmatpush1.msra.mxu0 0.0
        %3209 = vmatprep.subr.mxu0 0.0
        %3210 = vmatpush1.msra.mxu0 0.0
        %3211 = vmatprep.subr.mxu0 0.0
        %3212 = vmatpush1.msra.mxu0 0.0
        %3213 = vmatprep.subr.mxu0 0.0
        %3214 = vmatpush1.msra.mxu0 0.0
        %3215 = vmatprep.subr.mxu0 0.0
        %3216 = vmatpush1.msra.mxu0 0.0
        %3217 = vmatprep.subr.mxu0 0.0
        %3218 = vmatpush1.msra.mxu0 0.0
        %3219 = vmatprep.subr.mxu0 0.0
        %3220 = vmatpush1.msra.mxu0 0.0
        %3221 = vmatprep.subr.mxu0 0.0
        %3222 = vmatpush1.msra.mxu0 0.0
        %3223 = vmatprep.subr.mxu0 0.0
        %3224 = vmatpush1.msra.mxu0 0.0
        %3225 = vmatprep.subr.mxu0 0.0
        %3226 = vmatpush1.msra.mxu0 0.0
        %3227 = vmatprep.subr.mxu0 0.0
        %3228 = vmatpush1.msra.mxu0 0.0
        %3229 = vmatprep.subr.mxu0 0.0
        %3230 = vmatpush1.msra.mxu0 0.0
        %3231 = vmatprep.subr.mxu0 0.0
        %3232 = vmatpush1.msra.mxu0 0.0
        %3233 = vmatprep.subr.mxu0 0.0
        %3234 = vmatpush1.msra.mxu0 0.0
        %3235 = vmatprep.subr.mxu0 0.0
        %3236 = vmatpush1.msra.mxu0 0.0
        %3237 = vmatprep.subr.mxu0 0.0
        %3238 = vmatpush1.msra.mxu0 0.0
        %3239 = vmatprep.subr.mxu0 0.0
        %3240 = vmatpush1.msra.mxu0 0.0
        %3241 = vmatprep.mubr.f32.mxu0 0.0
        %3242 = vmatmul.mubr.f32.gmra.mrb[0].mxu0 %v3079
        %v3243 = vpop.f32.mrb[0].mxu0
        %v3244 = vadd.f32 0.0, %v3243
        %v3245 = vpop.f32.mrb[0].mxu0
        %3246 = vmatprep.mubr.f32.mxu0 0.0
        %3247 = vmatmul.mubr.f32.gmra.mrb[0].mxu0 %v3082
        %v3248 = vpop.f32.mrb[0].mxu0
        %v3249 = vadd.f32 0.0, %v3248
        %v3250 = vpop.f32.mrb[0].mxu0
        %3251 = vmatprep.mubr.f32.mxu0 0.0
        %3252 = vmatmul.mubr.f32.gmra.mrb[0].mxu0 %v3085
        %v3253 = vpop.f32.mrb[0].mxu0
        %v3254 = vadd.f32 0.0, %v3253
        %v3255 = vpop.f32.mrb[0].mxu0
        %3256 = vmatprep.mubr.f32.mxu0 0.0
        %3257 = vmatmul.mubr.f32.gmra.mrb[0].mxu0 %v3088
        %v3258 = vpop.f32.mrb[0].mxu0
        %v3259 = vadd.f32 0.0, %v3258
        %v3260 = vpop.f32.mrb[0].mxu0
        %3261 = vmatprep.mubr.f32.mxu0 0.0
        %3262 = vmatmul.mubr.f32.gmra.mrb[0].mxu0 %v3091
        %v3263 = vpop.f32.mrb[0].mxu0
        %v3264 = vadd.f32 0.0, %v3263
        %v3265 = vpop.f32.mrb[0].mxu0
        %3266 = vmatprep.mubr.f32.mxu0 0.0
        %3267 = vmatmul.mubr.f32.gmra.mrb[0].mxu0 %v3094
        %v3268 = vpop.f32.mrb[0].mxu0
        %v3269 = vadd.f32 0.0, %v3268
        %v3270 = vpop.f32.mrb[0].mxu0
        %3271 = vmatprep.mubr.f32.mxu0 0.0
        %3272 = vmatmul.mubr.f32.gmra.mrb[0].mxu0 %v3097
        %v3273 = vpop.f32.mrb[0].mxu0
        %v3274 = vadd.f32 0.0, %v3273
        %v3275 = vpop.f32.mrb[0].mxu0
        %3276 = vmatprep.mubr.f32.mxu0 0.0
        %3277 = vmatmul.mubr.f32.gmra.mrb[0].mxu0 %v3100
        %v3278 = vpop.f32.mrb[0].mxu0
        %v3279 = vadd.f32 0.0, %v3278
        %v3280 = vpop.f32.mrb[0].mxu0
        %3281 = vmatprep.mubr.f32.mxu0 0.0
        %3282 = vmatmul.mubr.f32.gmra.mrb[0].mxu0 %v3103
        %v3283 = vpop.f32.mrb[0].mxu0
        %v3284 = vadd.f32 0.0, %v3283
        %v3285 = vpop.f32.mrb[0].mxu0
        %3286 = vmatprep.mubr.f32.mxu0 0.0
        %3287 = vmatmul.mubr.f32.gmra.mrb[0].mxu0 %v3106
        %v3288 = vpop.f32.mrb[0].mxu0
        %v3289 = vadd.f32 0.0, %v3288
        %v3290 = vpop.f32.mrb[0].mxu0
        %3291 = vmatprep.mubr.f32.mxu0 0.0
        %3292 = vmatmul.mubr.f32.gmra.mrb[0].mxu0 %v3109
        %v3293 = vpop.f32.mrb[0].mxu0
        %v3294 = vadd.f32 0.0, %v3293
        %v3295 = vpop.f32.mrb[0].mxu0
        %3296 = vmatprep.mubr.f32.mxu0 0.0
        %3297 = vmatmul.mubr.f32.gmra.mrb[0].mxu0 %v3112
        %v3298 = vpop.f32.mrb[0].mxu0
        %v3299 = vadd.f32 0.0, %v3298
        %v3300 = vpop.f32.mrb[0].mxu0
        %3301 = vmatprep.mubr.f32.mxu0 0.0
        %3302 = vmatmul.mubr.f32.gmra.mrb[0].mxu0 %v3115
        %v3303 = vpop.f32.mrb[0].mxu0
        %v3304 = vadd.f32 0.0, %v3303
        %v3305 = vpop.f32.mrb[0].mxu0
        %3306 = vmatprep.mubr.f32.mxu0 0.0
        %3307 = vmatmul.mubr.f32.gmra.mrb[0].mxu0 %v3118
        %v3308 = vpop.f32.mrb[0].mxu0
        %v3309 = vadd.f32 0.0, %v3308
        %v3310 = vpop.f32.mrb[0].mxu0
        %3311 = vmatprep.mubr.f32.mxu0 0.0
        %3312 = vmatmul.mubr.f32.gmra.mrb[0].mxu0 %v3121
        %v3313 = vpop.f32.mrb[0].mxu0
        %v3314 = vadd.f32 0.0, %v3313
        %v3315 = vpop.f32.mrb[0].mxu0
        %3316 = vmatprep.mubr.f32.mxu0 0.0
        %3317 = vmatmul.mubr.f32.gmra.mrb[0].mxu0 %v3124
        %v3318 = vpop.f32.mrb[0].mxu0
        %v3319 = vadd.f32 0.0, %v3318
        %v3320 = vpop.f32.mrb[0].mxu0
        %3321 = vmatprep.mubr.f32.mxu0 0.0
        %3322 = vmatmul.mubr.f32.gmra.mrb[0].mxu0 %v3127
        %v3323 = vpop.f32.mrb[0].mxu0
        %v3324 = vadd.f32 0.0, %v3323
        %v3325 = vpop.f32.mrb[0].mxu0
        %3326 = vmatprep.mubr.f32.mxu0 0.0
        %3327 = vmatmul.mubr.f32.gmra.mrb[0].mxu0 %v3130
        %v3328 = vpop.f32.mrb[0].mxu0
        %v3329 = vadd.f32 0.0, %v3328
        %v3330 = vpop.f32.mrb[0].mxu0
        %3331 = vmatprep.mubr.f32.mxu0 0.0
        %3332 = vmatmul.mubr.f32.gmra.mrb[0].mxu0 %v3133
        %v3333 = vpop.f32.mrb[0].mxu0
        %v3334 = vadd.f32 0.0, %v3333
        %v3335 = vpop.f32.mrb[0].mxu0
        %3336 = vmatprep.mubr.f32.mxu0 0.0
        %3337 = vmatmul.mubr.f32.gmra.mrb[0].mxu0 %v3136
        %v3338 = vpop.f32.mrb[0].mxu0
        %v3339 = vadd.f32 0.0, %v3338
        %v3340 = vpop.f32.mrb[0].mxu0
        %3341 = vmatprep.mubr.f32.mxu0 0.0
        %3342 = vmatmul.mubr.f32.gmra.mrb[0].mxu0 %v3139
        %v3343 = vpop.f32.mrb[0].mxu0
        %v3344 = vadd.f32 0.0, %v3343
        %v3345 = vpop.f32.mrb[0].mxu0
        %3346 = vmatprep.mubr.f32.mxu0 0.0
        %3347 = vmatmul.mubr.f32.gmra.mrb[0].mxu0 %v3142
        %v3348 = vpop.f32.mrb[0].mxu0
        %v3349 = vadd.f32 0.0, %v3348
        %v3350 = vpop.f32.mrb[0].mxu0
        %3351 = vmatprep.mubr.f32.mxu0 0.0
        %3352 = vmatmul.mubr.f32.gmra.mrb[0].mxu0 %v3145
        %v3353 = vpop.f32.mrb[0].mxu0
        %v3354 = vadd.f32 0.0, %v3353
        %v3355 = vpop.f32.mrb[0].mxu0
        %3356 = vmatprep.mubr.f32.mxu0 0.0
        %3357 = vmatmul.mubr.f32.gmra.mrb[0].mxu0 %v3148
        %v3358 = vpop.f32.mrb[0].mxu0
        %v3359 = vadd.f32 0.0, %v3358
        %v3360 = vpop.f32.mrb[0].mxu0
        %3361 = vmatprep.mubr.f32.mxu0 0.0
        %3362 = vmatmul.mubr.f32.gmra.mrb[0].mxu0 %v3151
        %v3363 = vpop.f32.mrb[0].mxu0
        %v3364 = vadd.f32 0.0, %v3363
        %v3365 = vpop.f32.mrb[0].mxu0
        %3366 = vmatprep.mubr.f32.mxu0 0.0
        %3367 = vmatmul.mubr.f32.gmra.mrb[0].mxu0 %v3154
        %v3368 = vpop.f32.mrb[0].mxu0
        %v3369 = vadd.f32 0.0, %v3368
        %v3370 = vpop.f32.mrb[0].mxu0
        %3371 = vmatprep.mubr.f32.mxu0 0.0
        %3372 = vmatmul.mubr.f32.gmra.mrb[0].mxu0 %v3157
        %v3373 = vpop.f32.mrb[0].mxu0
        %v3374 = vadd.f32 0.0, %v3373
        %v3375 = vpop.f32.mrb[0].mxu0
        %3376 = vmatprep.mubr.f32.mxu0 0.0
        %3377 = vmatmul.mubr.f32.gmra.mrb[0].mxu0 %v3160
        %v3378 = vpop.f32.mrb[0].mxu0
        %v3379 = vadd.f32 0.0, %v3378
        %v3380 = vpop.f32.mrb[0].mxu0
        %3381 = vmatprep.mubr.f32.mxu0 0.0
        %3382 = vmatmul.mubr.f32.gmra.mrb[0].mxu0 %v3163
        %v3383 = vpop.f32.mrb[0].mxu0
        %v3384 = vadd.f32 0.0, %v3383
        %v3385 = vpop.f32.mrb[0].mxu0
        %3386 = vmatprep.mubr.f32.mxu0 0.0
        %3387 = vmatmul.mubr.f32.gmra.mrb[0].mxu0 %v3166
        %v3388 = vpop.f32.mrb[0].mxu0
        %v3389 = vadd.f32 0.0, %v3388
        %v3390 = vpop.f32.mrb[0].mxu0
        %3391 = vmatprep.mubr.f32.mxu0 0.0
        %3392 = vmatmul.mubr.f32.gmra.mrb[0].mxu0 %v3169
        %v3393 = vpop.f32.mrb[0].mxu0
        %v3394 = vadd.f32 0.0, %v3393
        %v3395 = vpop.f32.mrb[0].mxu0
        %3396 = vmatprep.mubr.f32.mxu0 0.0
        %3397 = vmatmul.mubr.f32.gmra.mrb[0].mxu0 %v3172
        %v3398 = vpop.f32.mrb[0].mxu0
        %v3399 = vadd.f32 0.0, %v3398
        %v3400 = vpop.f32.mrb[0].mxu0
        %3401 = vdwg.mxu0
        %v3402 = vadd.f32 %v3012, %v3244
        %v3403 = vadd.f32 %v3013, %v3249
        %v3404 = vadd.f32 %v3014, %v3254
        %v3405 = vadd.f32 %v3015, %v3259
        %v3406 = vadd.f32 %v3016, %v3264
        %v3407 = vadd.f32 %v3017, %v3269
        %v3408 = vadd.f32 %v3018, %v3274
        %v3409 = vadd.f32 %v3019, %v3279
        %v3410 = vadd.f32 %v3020, %v3284
        %v3411 = vadd.f32 %v3021, %v3289
        %v3412 = vadd.f32 %v3022, %v3294
        %v3413 = vadd.f32 %v3023, %v3299
        %v3414 = vadd.f32 %v3024, %v3304
        %v3415 = vadd.f32 %v3025, %v3309
        %v3416 = vadd.f32 %v3026, %v3314
        %v3417 = vadd.f32 %v3027, %v3319
        %v3418 = vadd.f32 %v3028, %v3324
        %v3419 = vadd.f32 %v3029, %v3329
        %v3420 = vadd.f32 %v3030, %v3334
        %v3421 = vadd.f32 %v3031, %v3339
        %v3422 = vadd.f32 %v3032, %v3344
        %v3423 = vadd.f32 %v3033, %v3349
        %v3424 = vadd.f32 %v3034, %v3354
        %v3425 = vadd.f32 %v3035, %v3359
        %v3426 = vadd.f32 %v3036, %v3364
        %v3427 = vadd.f32 %v3037, %v3369
        %v3428 = vadd.f32 %v3038, %v3374
        %v3429 = vadd.f32 %v3039, %v3379
        %v3430 = vadd.f32 %v3040, %v3384
        %v3431 = vadd.f32 %v3041, %v3389
        %v3432 = vadd.f32 %v3042, %v3394
        %v3433 = vadd.f32 %v3043, %v3399
        %v3434 = vld [vmem:[%s2653 + $0x4] sm:$0xff]
        %v3435 = vld [vmem:[%s2653 + $0xc] sm:$0xff]
        %v3436 = vld [vmem:[%s2653 + $0x1c] sm:$0xff]
        %v3437 = vld [vmem:[%s2653 + $0x24] sm:$0xff]
        %v3438 = vld [vmem:[%s2653 + $0x34] sm:$0xff]
        %v3439 = vld [vmem:[%s2653 + $0x3c] sm:$0xff]
        %v3440 = vld [vmem:[%s2653 + $0x4c] sm:$0xff]
        %v3441 = vld [vmem:[%s2653 + $0x54] sm:$0xff]
        %v3442 = vld [vmem:[%s2653 + $0x64] sm:$0xff]
        %v3443 = vld [vmem:[%s2653 + $0x6c] sm:$0xff]
        %v3444 = vld [vmem:[%s2653 + $0x7c] sm:$0xff]
        %v3445 = vld [vmem:[%s2653 + $0x84] sm:$0xff]
        %v3446 = vld [vmem:[%s2653 + $0x94] sm:$0xff]
        %v3447 = vld [vmem:[%s2653 + $0x9c] sm:$0xff]
        %v3448 = vld [vmem:[%s2653 + $0xac] sm:$0xff]
        %v3449 = vld [vmem:[%s2653 + $0xb4] sm:$0xff]
        %v3450 = vld [vmem:[%s2653 + $0xc4] sm:$0xff]
        %v3451 = vld [vmem:[%s2653 + $0xcc] sm:$0xff]
        %v3452 = vld [vmem:[%s2653 + $0xdc] sm:$0xff]
        %v3453 = vld [vmem:[%s2653 + $0xe4] sm:$0xff]
        %v3454 = vld [vmem:[%s2653 + $0xf4] sm:$0xff]
        %v3455 = vld [vmem:[%s2653 + $0xfc] sm:$0xff]
        %v3456 = vld [vmem:[%s2653 + $0x10c] sm:$0xff]
        %v3457 = vld [vmem:[%s2653 + $0x114] sm:$0xff]
        %v3458 = vld [vmem:[%s2653 + $0x124] sm:$0xff]
        %v3459 = vld [vmem:[%s2653 + $0x12c] sm:$0xff]
        %v3460 = vld [vmem:[%s2653 + $0x13c] sm:$0xff]
        %v3461 = vld [vmem:[%s2653 + $0x144] sm:$0xff]
        %v3462 = vld [vmem:[%s2653 + $0x154] sm:$0xff]
        %v3463 = vld [vmem:[%s2653 + $0x15c] sm:$0xff]
        %v3464 = vld [vmem:[%s2653 + $0x16c] sm:$0xff]
        %v3465 = vld [vmem:[%s2653 + $0x174] sm:$0xff]
        %s3466 = scalar_lea.vmem %s232, 32
        %v3467 = vld [vmem:[%s3466] sm:$0xf]
        %v3469 = vsel %vm344, %v3434, 0
        %v3472 = vsel %vm344, %v3435, 0
        %v3475 = vsel %vm344, %v3436, 0
        %v3478 = vsel %vm344, %v3437, 0
        %v3481 = vsel %vm344, %v3438, 0
        %v3484 = vsel %vm344, %v3439, 0
        %v3487 = vsel %vm344, %v3440, 0
        %v3490 = vsel %vm344, %v3441, 0
        %v3493 = vsel %vm344, %v3442, 0
        %v3496 = vsel %vm344, %v3443, 0
        %v3499 = vsel %vm344, %v3444, 0
        %v3502 = vsel %vm344, %v3445, 0
        %v3505 = vsel %vm344, %v3446, 0
        %v3508 = vsel %vm344, %v3447, 0
        %v3511 = vsel %vm344, %v3448, 0
        %v3514 = vsel %vm344, %v3449, 0
        %v3517 = vsel %vm344, %v3450, 0
        %v3520 = vsel %vm344, %v3451, 0
        %v3523 = vsel %vm344, %v3452, 0
        %v3526 = vsel %vm344, %v3453, 0
        %v3529 = vsel %vm344, %v3454, 0
        %v3532 = vsel %vm344, %v3455, 0
        %v3535 = vsel %vm344, %v3456, 0
        %v3538 = vsel %vm344, %v3457, 0
        %v3541 = vsel %vm344, %v3458, 0
        %v3544 = vsel %vm344, %v3459, 0
        %v3547 = vsel %vm344, %v3460, 0
        %v3550 = vsel %vm344, %v3461, 0
        %v3553 = vsel %vm344, %v3462, 0
        %v3556 = vsel %vm344, %v3463, 0
        %v3559 = vsel %vm344, %v3464, 0
        %v3562 = vsel %vm344, %v3465, 0
        %v3565 = vsel %vm540, %v3467, 0
        %3567 = vmatprep.subr.mxu0 0.0
        %3568 = vmatpush1.msra.mxu0 %v3565
        %3569 = vmatprep.subr.mxu0 0.0
        %3570 = vmatpush1.msra.mxu0 0.0
        %3571 = vmatprep.subr.mxu0 0.0
        %3572 = vmatpush1.msra.mxu0 0.0
        %3573 = vmatprep.subr.mxu0 0.0
        %3574 = vmatpush1.msra.mxu0 0.0
        %3575 = vmatprep.subr.mxu0 0.0
        %3576 = vmatpush1.msra.mxu0 0.0
        %3577 = vmatprep.subr.mxu0 0.0
        %3578 = vmatpush1.msra.mxu0 0.0
        %3579 = vmatprep.subr.mxu0 0.0
        %3580 = vmatpush1.msra.mxu0 0.0
        %3581 = vmatprep.subr.mxu0 0.0
        %3582 = vmatpush1.msra.mxu0 0.0
        %3583 = vmatprep.subr.mxu0 0.0
        %3584 = vmatpush1.msra.mxu0 0.0
        %3585 = vmatprep.subr.mxu0 0.0
        %3586 = vmatpush1.msra.mxu0 0.0
        %3587 = vmatprep.subr.mxu0 0.0
        %3588 = vmatpush1.msra.mxu0 0.0
        %3589 = vmatprep.subr.mxu0 0.0
        %3590 = vmatpush1.msra.mxu0 0.0
        %3591 = vmatprep.subr.mxu0 0.0
        %3592 = vmatpush1.msra.mxu0 0.0
        %3593 = vmatprep.subr.mxu0 0.0
        %3594 = vmatpush1.msra.mxu0 0.0
        %3595 = vmatprep.subr.mxu0 0.0
        %3596 = vmatpush1.msra.mxu0 0.0
        %3597 = vmatprep.subr.mxu0 0.0
        %3598 = vmatpush1.msra.mxu0 0.0
        %3599 = vmatprep.subr.mxu0 0.0
        %3600 = vmatpush1.msra.mxu0 0.0
        %3601 = vmatprep.subr.mxu0 0.0
        %3602 = vmatpush1.msra.mxu0 0.0
        %3603 = vmatprep.subr.mxu0 0.0
        %3604 = vmatpush1.msra.mxu0 0.0
        %3605 = vmatprep.subr.mxu0 0.0
        %3606 = vmatpush1.msra.mxu0 0.0
        %3607 = vmatprep.subr.mxu0 0.0
        %3608 = vmatpush1.msra.mxu0 0.0
        %3609 = vmatprep.subr.mxu0 0.0
        %3610 = vmatpush1.msra.mxu0 0.0
        %3611 = vmatprep.subr.mxu0 0.0
        %3612 = vmatpush1.msra.mxu0 0.0
        %3613 = vmatprep.subr.mxu0 0.0
        %3614 = vmatpush1.msra.mxu0 0.0
        %3615 = vmatprep.subr.mxu0 0.0
        %3616 = vmatpush1.msra.mxu0 0.0
        %3617 = vmatprep.subr.mxu0 0.0
        %3618 = vmatpush1.msra.mxu0 0.0
        %3619 = vmatprep.subr.mxu0 0.0
        %3620 = vmatpush1.msra.mxu0 0.0
        %3621 = vmatprep.subr.mxu0 0.0
        %3622 = vmatpush1.msra.mxu0 0.0
        %3623 = vmatprep.subr.mxu0 0.0
        %3624 = vmatpush1.msra.mxu0 0.0
        %3625 = vmatprep.subr.mxu0 0.0
        %3626 = vmatpush1.msra.mxu0 0.0
        %3627 = vmatprep.subr.mxu0 0.0
        %3628 = vmatpush1.msra.mxu0 0.0
        %3629 = vmatprep.subr.mxu0 0.0
        %3630 = vmatpush1.msra.mxu0 0.0
        %3631 = vmatprep.mubr.f32.mxu0 0.0
        %3632 = vmatmul.mubr.f32.gmra.mrb[0].mxu0 %v3469
        %v3633 = vpop.f32.mrb[0].mxu0
        %v3634 = vadd.f32 0.0, %v3633
        %v3635 = vpop.f32.mrb[0].mxu0
        %3636 = vmatprep.mubr.f32.mxu0 0.0
        %3637 = vmatmul.mubr.f32.gmra.mrb[0].mxu0 %v3472
        %v3638 = vpop.f32.mrb[0].mxu0
        %v3639 = vadd.f32 0.0, %v3638
        %v3640 = vpop.f32.mrb[0].mxu0
        %3641 = vmatprep.mubr.f32.mxu0 0.0
        %3642 = vmatmul.mubr.f32.gmra.mrb[0].mxu0 %v3475
        %v3643 = vpop.f32.mrb[0].mxu0
        %v3644 = vadd.f32 0.0, %v3643
        %v3645 = vpop.f32.mrb[0].mxu0
        %3646 = vmatprep.mubr.f32.mxu0 0.0
        %3647 = vmatmul.mubr.f32.gmra.mrb[0].mxu0 %v3478
        %v3648 = vpop.f32.mrb[0].mxu0
        %v3649 = vadd.f32 0.0, %v3648
        %v3650 = vpop.f32.mrb[0].mxu0
        %3651 = vmatprep.mubr.f32.mxu0 0.0
        %3652 = vmatmul.mubr.f32.gmra.mrb[0].mxu0 %v3481
        %v3653 = vpop.f32.mrb[0].mxu0
        %v3654 = vadd.f32 0.0, %v3653
        %v3655 = vpop.f32.mrb[0].mxu0
        %3656 = vmatprep.mubr.f32.mxu0 0.0
        %3657 = vmatmul.mubr.f32.gmra.mrb[0].mxu0 %v3484
        %v3658 = vpop.f32.mrb[0].mxu0
        %v3659 = vadd.f32 0.0, %v3658
        %v3660 = vpop.f32.mrb[0].mxu0
        %3661 = vmatprep.mubr.f32.mxu0 0.0
        %3662 = vmatmul.mubr.f32.gmra.mrb[0].mxu0 %v3487
        %v3663 = vpop.f32.mrb[0].mxu0
        %v3664 = vadd.f32 0.0, %v3663
        %v3665 = vpop.f32.mrb[0].mxu0
        %3666 = vmatprep.mubr.f32.mxu0 0.0
        %3667 = vmatmul.mubr.f32.gmra.mrb[0].mxu0 %v3490
        %v3668 = vpop.f32.mrb[0].mxu0
        %v3669 = vadd.f32 0.0, %v3668
        %v3670 = vpop.f32.mrb[0].mxu0
        %3671 = vmatprep.mubr.f32.mxu0 0.0
        %3672 = vmatmul.mubr.f32.gmra.mrb[0].mxu0 %v3493
        %v3673 = vpop.f32.mrb[0].mxu0
        %v3674 = vadd.f32 0.0, %v3673
        %v3675 = vpop.f32.mrb[0].mxu0
        %3676 = vmatprep.mubr.f32.mxu0 0.0
        %3677 = vmatmul.mubr.f32.gmra.mrb[0].mxu0 %v3496
        %v3678 = vpop.f32.mrb[0].mxu0
        %v3679 = vadd.f32 0.0, %v3678
        %v3680 = vpop.f32.mrb[0].mxu0
        %3681 = vmatprep.mubr.f32.mxu0 0.0
        %3682 = vmatmul.mubr.f32.gmra.mrb[0].mxu0 %v3499
        %v3683 = vpop.f32.mrb[0].mxu0
        %v3684 = vadd.f32 0.0, %v3683
        %v3685 = vpop.f32.mrb[0].mxu0
        %3686 = vmatprep.mubr.f32.mxu0 0.0
        %3687 = vmatmul.mubr.f32.gmra.mrb[0].mxu0 %v3502
        %v3688 = vpop.f32.mrb[0].mxu0
        %v3689 = vadd.f32 0.0, %v3688
        %v3690 = vpop.f32.mrb[0].mxu0
        %3691 = vmatprep.mubr.f32.mxu0 0.0
        %3692 = vmatmul.mubr.f32.gmra.mrb[0].mxu0 %v3505
        %v3693 = vpop.f32.mrb[0].mxu0
        %v3694 = vadd.f32 0.0, %v3693
        %v3695 = vpop.f32.mrb[0].mxu0
        %3696 = vmatprep.mubr.f32.mxu0 0.0
        %3697 = vmatmul.mubr.f32.gmra.mrb[0].mxu0 %v3508
        %v3698 = vpop.f32.mrb[0].mxu0
        %v3699 = vadd.f32 0.0, %v3698
        %v3700 = vpop.f32.mrb[0].mxu0
        %3701 = vmatprep.mubr.f32.mxu0 0.0
        %3702 = vmatmul.mubr.f32.gmra.mrb[0].mxu0 %v3511
        %v3703 = vpop.f32.mrb[0].mxu0
        %v3704 = vadd.f32 0.0, %v3703
        %v3705 = vpop.f32.mrb[0].mxu0
        %3706 = vmatprep.mubr.f32.mxu0 0.0
        %3707 = vmatmul.mubr.f32.gmra.mrb[0].mxu0 %v3514
        %v3708 = vpop.f32.mrb[0].mxu0
        %v3709 = vadd.f32 0.0, %v3708
        %v3710 = vpop.f32.mrb[0].mxu0
        %3711 = vmatprep.mubr.f32.mxu0 0.0
        %3712 = vmatmul.mubr.f32.gmra.mrb[0].mxu0 %v3517
        %v3713 = vpop.f32.mrb[0].mxu0
        %v3714 = vadd.f32 0.0, %v3713
        %v3715 = vpop.f32.mrb[0].mxu0
        %3716 = vmatprep.mubr.f32.mxu0 0.0
        %3717 = vmatmul.mubr.f32.gmra.mrb[0].mxu0 %v3520
        %v3718 = vpop.f32.mrb[0].mxu0
        %v3719 = vadd.f32 0.0, %v3718
        %v3720 = vpop.f32.mrb[0].mxu0
        %3721 = vmatprep.mubr.f32.mxu0 0.0
        %3722 = vmatmul.mubr.f32.gmra.mrb[0].mxu0 %v3523
        %v3723 = vpop.f32.mrb[0].mxu0
        %v3724 = vadd.f32 0.0, %v3723
        %v3725 = vpop.f32.mrb[0].mxu0
        %3726 = vmatprep.mubr.f32.mxu0 0.0
        %3727 = vmatmul.mubr.f32.gmra.mrb[0].mxu0 %v3526
        %v3728 = vpop.f32.mrb[0].mxu0
        %v3729 = vadd.f32 0.0, %v3728
        %v3730 = vpop.f32.mrb[0].mxu0
        %3731 = vmatprep.mubr.f32.mxu0 0.0
        %3732 = vmatmul.mubr.f32.gmra.mrb[0].mxu0 %v3529
        %v3733 = vpop.f32.mrb[0].mxu0
        %v3734 = vadd.f32 0.0, %v3733
        %v3735 = vpop.f32.mrb[0].mxu0
        %3736 = vmatprep.mubr.f32.mxu0 0.0
        %3737 = vmatmul.mubr.f32.gmra.mrb[0].mxu0 %v3532
        %v3738 = vpop.f32.mrb[0].mxu0
        %v3739 = vadd.f32 0.0, %v3738
        %v3740 = vpop.f32.mrb[0].mxu0
        %3741 = vmatprep.mubr.f32.mxu0 0.0
        %3742 = vmatmul.mubr.f32.gmra.mrb[0].mxu0 %v3535
        %v3743 = vpop.f32.mrb[0].mxu0
        %v3744 = vadd.f32 0.0, %v3743
        %v3745 = vpop.f32.mrb[0].mxu0
        %3746 = vmatprep.mubr.f32.mxu0 0.0
        %3747 = vmatmul.mubr.f32.gmra.mrb[0].mxu0 %v3538
        %v3748 = vpop.f32.mrb[0].mxu0
        %v3749 = vadd.f32 0.0, %v3748
        %v3750 = vpop.f32.mrb[0].mxu0
        %3751 = vmatprep.mubr.f32.mxu0 0.0
        %3752 = vmatmul.mubr.f32.gmra.mrb[0].mxu0 %v3541
        %v3753 = vpop.f32.mrb[0].mxu0
        %v3754 = vadd.f32 0.0, %v3753
        %v3755 = vpop.f32.mrb[0].mxu0
        %3756 = vmatprep.mubr.f32.mxu0 0.0
        %3757 = vmatmul.mubr.f32.gmra.mrb[0].mxu0 %v3544
        %v3758 = vpop.f32.mrb[0].mxu0
        %v3759 = vadd.f32 0.0, %v3758
        %v3760 = vpop.f32.mrb[0].mxu0
        %3761 = vmatprep.mubr.f32.mxu0 0.0
        %3762 = vmatmul.mubr.f32.gmra.mrb[0].mxu0 %v3547
        %v3763 = vpop.f32.mrb[0].mxu0
        %v3764 = vadd.f32 0.0, %v3763
        %v3765 = vpop.f32.mrb[0].mxu0
        %3766 = vmatprep.mubr.f32.mxu0 0.0
        %3767 = vmatmul.mubr.f32.gmra.mrb[0].mxu0 %v3550
        %v3768 = vpop.f32.mrb[0].mxu0
        %v3769 = vadd.f32 0.0, %v3768
        %v3770 = vpop.f32.mrb[0].mxu0
        %3771 = vmatprep.mubr.f32.mxu0 0.0
        %3772 = vmatmul.mubr.f32.gmra.mrb[0].mxu0 %v3553
        %v3773 = vpop.f32.mrb[0].mxu0
        %v3774 = vadd.f32 0.0, %v3773
        %v3775 = vpop.f32.mrb[0].mxu0
        %3776 = vmatprep.mubr.f32.mxu0 0.0
        %3777 = vmatmul.mubr.f32.gmra.mrb[0].mxu0 %v3556
        %v3778 = vpop.f32.mrb[0].mxu0
        %v3779 = vadd.f32 0.0, %v3778
        %v3780 = vpop.f32.mrb[0].mxu0
        %3781 = vmatprep.mubr.f32.mxu0 0.0
        %3782 = vmatmul.mubr.f32.gmra.mrb[0].mxu0 %v3559
        %v3783 = vpop.f32.mrb[0].mxu0
        %v3784 = vadd.f32 0.0, %v3783
        %v3785 = vpop.f32.mrb[0].mxu0
        %3786 = vmatprep.mubr.f32.mxu0 0.0
        %3787 = vmatmul.mubr.f32.gmra.mrb[0].mxu0 %v3562
        %v3788 = vpop.f32.mrb[0].mxu0
        %v3789 = vadd.f32 0.0, %v3788
        %v3790 = vpop.f32.mrb[0].mxu0
        %3791 = vdwg.mxu0
        %v3792 = vadd.f32 %v3402, %v3634
        %v3793 = vadd.f32 %v3403, %v3639
        %v3794 = vadd.f32 %v3404, %v3644
        %v3795 = vadd.f32 %v3405, %v3649
        %v3796 = vadd.f32 %v3406, %v3654
        %v3797 = vadd.f32 %v3407, %v3659
        %v3798 = vadd.f32 %v3408, %v3664
        %v3799 = vadd.f32 %v3409, %v3669
        %v3800 = vadd.f32 %v3410, %v3674
        %v3801 = vadd.f32 %v3411, %v3679
        %v3802 = vadd.f32 %v3412, %v3684
        %v3803 = vadd.f32 %v3413, %v3689
        %v3804 = vadd.f32 %v3414, %v3694
        %v3805 = vadd.f32 %v3415, %v3699
        %v3806 = vadd.f32 %v3416, %v3704
        %v3807 = vadd.f32 %v3417, %v3709
        %v3808 = vadd.f32 %v3418, %v3714
        %v3809 = vadd.f32 %v3419, %v3719
        %v3810 = vadd.f32 %v3420, %v3724
        %v3811 = vadd.f32 %v3421, %v3729
        %v3812 = vadd.f32 %v3422, %v3734
        %v3813 = vadd.f32 %v3423, %v3739
        %v3814 = vadd.f32 %v3424, %v3744
        %v3815 = vadd.f32 %v3425, %v3749
        %v3816 = vadd.f32 %v3426, %v3754
        %v3817 = vadd.f32 %v3427, %v3759
        %v3818 = vadd.f32 %v3428, %v3764
        %v3819 = vadd.f32 %v3429, %v3769
        %v3820 = vadd.f32 %v3430, %v3774
        %v3821 = vadd.f32 %v3431, %v3779
        %v3822 = vadd.f32 %v3432, %v3784
        %v3823 = vadd.f32 %v3433, %v3789
        // Predicated region
        $region33: #{tpu_custom_call.1} parent=27 // pred_check
          %p3824 = pneg %p242
        $region34: #{tpu_custom_call.1} parent=27 // pred_check_branch
          %3826 = sbr.rel (%p3824) target = $region36
        $region35: #{tpu_custom_call.1} parent=27 // pred_region
          %vm3827 = vcmask 64512
          %3828 = vst.msk [vmem:[#allocation3] sm:$0xff] %vm3827, %v3792
          %3829 = vst.msk [vmem:[#allocation3 + $0x8] sm:$0xff] %vm3827, %v3793
          %3830 = vst.msk [vmem:[#allocation3 + $0x10] sm:$0xff] %vm3827, %v3794
          %3831 = vst.msk [vmem:[#allocation3 + $0x18] sm:$0xff] %vm3827, %v3795
          %3832 = vst.msk [vmem:[#allocation3 + $0x20] sm:$0xff] %vm3827, %v3796
          %3833 = vst.msk [vmem:[#allocation3 + $0x28] sm:$0xff] %vm3827, %v3797
          %3834 = vst.msk [vmem:[#allocation3 + $0x30] sm:$0xff] %vm3827, %v3798
          %3835 = vst.msk [vmem:[#allocation3 + $0x38] sm:$0xff] %vm3827, %v3799
          %3836 = vst.msk [vmem:[#allocation3 + $0x40] sm:$0xff] %vm3827, %v3800
          %3837 = vst.msk [vmem:[#allocation3 + $0x48] sm:$0xff] %vm3827, %v3801
          %3838 = vst.msk [vmem:[#allocation3 + $0x50] sm:$0xff] %vm3827, %v3802
          %3839 = vst.msk [vmem:[#allocation3 + $0x58] sm:$0xff] %vm3827, %v3803
          %3840 = vst.msk [vmem:[#allocation3 + $0x60] sm:$0xff] %vm3827, %v3804
          %3841 = vst.msk [vmem:[#allocation3 + $0x68] sm:$0xff] %vm3827, %v3805
          %3842 = vst.msk [vmem:[#allocation3 + $0x70] sm:$0xff] %vm3827, %v3806
          %3843 = vst.msk [vmem:[#allocation3 + $0x78] sm:$0xff] %vm3827, %v3807
          %3844 = vst.msk [vmem:[#allocation3 + $0x80] sm:$0xff] %vm3827, %v3808
          %3845 = vst.msk [vmem:[#allocation3 + $0x88] sm:$0xff] %vm3827, %v3809
          %3846 = vst.msk [vmem:[#allocation3 + $0x90] sm:$0xff] %vm3827, %v3810
          %3847 = vst.msk [vmem:[#allocation3 + $0x98] sm:$0xff] %vm3827, %v3811
          %3848 = vst.msk [vmem:[#allocation3 + $0xa0] sm:$0xff] %vm3827, %v3812
          %3849 = vst.msk [vmem:[#allocation3 + $0xa8] sm:$0xff] %vm3827, %v3813
          %3850 = vst.msk [vmem:[#allocation3 + $0xb0] sm:$0xff] %vm3827, %v3814
          %3851 = vst.msk [vmem:[#allocation3 + $0xb8] sm:$0xff] %vm3827, %v3815
          %3852 = vst.msk [vmem:[#allocation3 + $0xc0] sm:$0xff] %vm3827, %v3816
          %3853 = vst.msk [vmem:[#allocation3 + $0xc8] sm:$0xff] %vm3827, %v3817
          %3854 = vst.msk [vmem:[#allocation3 + $0xd0] sm:$0xff] %vm3827, %v3818
          %3855 = vst.msk [vmem:[#allocation3 + $0xd8] sm:$0xff] %vm3827, %v3819
          %3856 = vst.msk [vmem:[#allocation3 + $0xe0] sm:$0xff] %vm3827, %v3820
          %3857 = vst.msk [vmem:[#allocation3 + $0xe8] sm:$0xff] %vm3827, %v3821
          %3858 = vst.msk [vmem:[#allocation3 + $0xf0] sm:$0xff] %vm3827, %v3822
          %3859 = vst.msk [vmem:[#allocation3 + $0xf8] sm:$0xff] %vm3827, %v3823
        $region36: #{tpu_custom_call.1} parent=27 // pred_fallthru
          _
        %p3860 = scmp.ne.s32.totalorder %s23, 0
        // Predicated region
        $region37: #{tpu_custom_call.1} parent=27 // pred_check
          %p3861 = pneg %p3860
        $region38: #{tpu_custom_call.1} parent=27 // pred_check_branch
          %3863 = sbr.rel (%p3861) target = $region40
        $region39: #{tpu_custom_call.1} parent=27 // pred_region
          %v3864 = vld [vmem:[#allocation3] sm:$0xff]
          %v3865 = vld [vmem:[#allocation3 + $0x8] sm:$0xff]
          %v3866 = vld [vmem:[#allocation3 + $0x10] sm:$0xff]
          %v3867 = vld [vmem:[#allocation3 + $0x18] sm:$0xff]
          %v3868 = vld [vmem:[#allocation3 + $0x20] sm:$0xff]
          %v3869 = vld [vmem:[#allocation3 + $0x28] sm:$0xff]
          %v3870 = vld [vmem:[#allocation3 + $0x30] sm:$0xff]
          %v3871 = vld [vmem:[#allocation3 + $0x38] sm:$0xff]
          %v3872 = vld [vmem:[#allocation3 + $0x40] sm:$0xff]
          %v3873 = vld [vmem:[#allocation3 + $0x48] sm:$0xff]
          %v3874 = vld [vmem:[#allocation3 + $0x50] sm:$0xff]
          %v3875 = vld [vmem:[#allocation3 + $0x58] sm:$0xff]
          %v3876 = vld [vmem:[#allocation3 + $0x60] sm:$0xff]
          %v3877 = vld [vmem:[#allocation3 + $0x68] sm:$0xff]
          %v3878 = vld [vmem:[#allocation3 + $0x70] sm:$0xff]
          %v3879 = vld [vmem:[#allocation3 + $0x78] sm:$0xff]
          %v3880 = vld [vmem:[#allocation3 + $0x80] sm:$0xff]
          %v3881 = vld [vmem:[#allocation3 + $0x88] sm:$0xff]
          %v3882 = vld [vmem:[#allocation3 + $0x90] sm:$0xff]
          %v3883 = vld [vmem:[#allocation3 + $0x98] sm:$0xff]
          %v3884 = vld [vmem:[#allocation3 + $0xa0] sm:$0xff]
          %v3885 = vld [vmem:[#allocation3 + $0xa8] sm:$0xff]
          %v3886 = vld [vmem:[#allocation3 + $0xb0] sm:$0xff]
          %v3887 = vld [vmem:[#allocation3 + $0xb8] sm:$0xff]
          %v3888 = vld [vmem:[#allocation3 + $0xc0] sm:$0xff]
          %v3889 = vld [vmem:[#allocation3 + $0xc8] sm:$0xff]
          %v3890 = vld [vmem:[#allocation3 + $0xd0] sm:$0xff]
          %v3891 = vld [vmem:[#allocation3 + $0xd8] sm:$0xff]
          %v3892 = vld [vmem:[#allocation3 + $0xe0] sm:$0xff]
          %v3893 = vld [vmem:[#allocation3 + $0xe8] sm:$0xff]
          %v3894 = vld [vmem:[#allocation3 + $0xf0] sm:$0xff]
          %v3895 = vld [vmem:[#allocation3 + $0xf8] sm:$0xff]
          %v3896 = vadd.f32 %v3864, %v3792
          %v3897 = vadd.f32 %v3865, %v3793
          %v3898 = vadd.f32 %v3866, %v3794
          %v3899 = vadd.f32 %v3867, %v3795
          %v3900 = vadd.f32 %v3868, %v3796
          %v3901 = vadd.f32 %v3869, %v3797
          %v3902 = vadd.f32 %v3870, %v3798
          %v3903 = vadd.f32 %v3871, %v3799
          %v3904 = vadd.f32 %v3872, %v3800
          %v3905 = vadd.f32 %v3873, %v3801
          %v3906 = vadd.f32 %v3874, %v3802
          %v3907 = vadd.f32 %v3875, %v3803
          %v3908 = vadd.f32 %v3876, %v3804
          %v3909 = vadd.f32 %v3877, %v3805
          %v3910 = vadd.f32 %v3878, %v3806
          %v3911 = vadd.f32 %v3879, %v3807
          %v3912 = vadd.f32 %v3880, %v3808
          %v3913 = vadd.f32 %v3881, %v3809
          %v3914 = vadd.f32 %v3882, %v3810
          %v3915 = vadd.f32 %v3883, %v3811
          %v3916 = vadd.f32 %v3884, %v3812
          %v3917 = vadd.f32 %v3885, %v3813
          %v3918 = vadd.f32 %v3886, %v3814
          %v3919 = vadd.f32 %v3887, %v3815
          %v3920 = vadd.f32 %v3888, %v3816
          %v3921 = vadd.f32 %v3889, %v3817
          %v3922 = vadd.f32 %v3890, %v3818
          %v3923 = vadd.f32 %v3891, %v3819
          %v3924 = vadd.f32 %v3892, %v3820
          %v3925 = vadd.f32 %v3893, %v3821
          %v3926 = vadd.f32 %v3894, %v3822
          %v3927 = vadd.f32 %v3895, %v3823
          %vm3928 = vcmask 64512
          %3929 = vst.msk [vmem:[#allocation3] sm:$0xff] %vm3928, %v3896
          %3930 = vst.msk [vmem:[#allocation3 + $0x8] sm:$0xff] %vm3928, %v3897
          %3931 = vst.msk [vmem:[#allocation3 + $0x10] sm:$0xff] %vm3928, %v3898
          %3932 = vst.msk [vmem:[#allocation3 + $0x18] sm:$0xff] %vm3928, %v3899
          %3933 = vst.msk [vmem:[#allocation3 + $0x20] sm:$0xff] %vm3928, %v3900
          %3934 = vst.msk [vmem:[#allocation3 + $0x28] sm:$0xff] %vm3928, %v3901
          %3935 = vst.msk [vmem:[#allocation3 + $0x30] sm:$0xff] %vm3928, %v3902
          %3936 = vst.msk [vmem:[#allocation3 + $0x38] sm:$0xff] %vm3928, %v3903
          %3937 = vst.msk [vmem:[#allocation3 + $0x40] sm:$0xff] %vm3928, %v3904
          %3938 = vst.msk [vmem:[#allocation3 + $0x48] sm:$0xff] %vm3928, %v3905
          %3939 = vst.msk [vmem:[#allocation3 + $0x50] sm:$0xff] %vm3928, %v3906
          %3940 = vst.msk [vmem:[#allocation3 + $0x58] sm:$0xff] %vm3928, %v3907
          %3941 = vst.msk [vmem:[#allocation3 + $0x60] sm:$0xff] %vm3928, %v3908
          %3942 = vst.msk [vmem:[#allocation3 + $0x68] sm:$0xff] %vm3928, %v3909
          %3943 = vst.msk [vmem:[#allocation3 + $0x70] sm:$0xff] %vm3928, %v3910
          %3944 = vst.msk [vmem:[#allocation3 + $0x78] sm:$0xff] %vm3928, %v3911
          %3945 = vst.msk [vmem:[#allocation3 + $0x80] sm:$0xff] %vm3928, %v3912
          %3946 = vst.msk [vmem:[#allocation3 + $0x88] sm:$0xff] %vm3928, %v3913
          %3947 = vst.msk [vmem:[#allocation3 + $0x90] sm:$0xff] %vm3928, %v3914
          %3948 = vst.msk [vmem:[#allocation3 + $0x98] sm:$0xff] %vm3928, %v3915
          %3949 = vst.msk [vmem:[#allocation3 + $0xa0] sm:$0xff] %vm3928, %v3916
          %3950 = vst.msk [vmem:[#allocation3 + $0xa8] sm:$0xff] %vm3928, %v3917
          %3951 = vst.msk [vmem:[#allocation3 + $0xb0] sm:$0xff] %vm3928, %v3918
          %3952 = vst.msk [vmem:[#allocation3 + $0xb8] sm:$0xff] %vm3928, %v3919
          %3953 = vst.msk [vmem:[#allocation3 + $0xc0] sm:$0xff] %vm3928, %v3920
          %3954 = vst.msk [vmem:[#allocation3 + $0xc8] sm:$0xff] %vm3928, %v3921
          %3955 = vst.msk [vmem:[#allocation3 + $0xd0] sm:$0xff] %vm3928, %v3922
          %3956 = vst.msk [vmem:[#allocation3 + $0xd8] sm:$0xff] %vm3928, %v3923
          %3957 = vst.msk [vmem:[#allocation3 + $0xe0] sm:$0xff] %vm3928, %v3924
          %3958 = vst.msk [vmem:[#allocation3 + $0xe8] sm:$0xff] %vm3928, %v3925
          %3959 = vst.msk [vmem:[#allocation3 + $0xf0] sm:$0xff] %vm3928, %v3926
          %3960 = vst.msk [vmem:[#allocation3 + $0xf8] sm:$0xff] %vm3928, %v3927
        $region40: #{tpu_custom_call.1} parent=27 // pred_fallthru
          _
        // Predicated region
        $region41: #{tpu_custom_call.1} parent=27 // pred_check
          %p3961 = pneg %p242
        $region42: #{tpu_custom_call.1} parent=27 // pred_check_branch
          %3963 = sbr.rel (%p3961) target = $region44
        $region43: #{tpu_custom_call.1} parent=27 // pred_region
          %v3964 = vld [vmem:[#allocation3] sm:$0xff]
          %v3965 = vld [vmem:[#allocation3 + $0x8] sm:$0xff]
          %v3966 = vld [vmem:[#allocation3 + $0x10] sm:$0xff]
          %v3967 = vld [vmem:[#allocation3 + $0x18] sm:$0xff]
          %v3968 = vld [vmem:[#allocation3 + $0x20] sm:$0xff]
          %v3969 = vld [vmem:[#allocation3 + $0x28] sm:$0xff]
          %v3970 = vld [vmem:[#allocation3 + $0x30] sm:$0xff]
          %v3971 = vld [vmem:[#allocation3 + $0x38] sm:$0xff]
          %v3972 = vld [vmem:[#allocation3 + $0x40] sm:$0xff]
          %v3973 = vld [vmem:[#allocation3 + $0x48] sm:$0xff]
          %v3974 = vld [vmem:[#allocation3 + $0x50] sm:$0xff]
          %v3975 = vld [vmem:[#allocation3 + $0x58] sm:$0xff]
          %v3976 = vld [vmem:[#allocation3 + $0x60] sm:$0xff]
          %v3977 = vld [vmem:[#allocation3 + $0x68] sm:$0xff]
          %v3978 = vld [vmem:[#allocation3 + $0x70] sm:$0xff]
          %v3979 = vld [vmem:[#allocation3 + $0x78] sm:$0xff]
          %v3980 = vld [vmem:[#allocation3 + $0x80] sm:$0xff]
          %v3981 = vld [vmem:[#allocation3 + $0x88] sm:$0xff]
          %v3982 = vld [vmem:[#allocation3 + $0x90] sm:$0xff]
          %v3983 = vld [vmem:[#allocation3 + $0x98] sm:$0xff]
          %v3984 = vld [vmem:[#allocation3 + $0xa0] sm:$0xff]
          %v3985 = vld [vmem:[#allocation3 + $0xa8] sm:$0xff]
          %v3986 = vld [vmem:[#allocation3 + $0xb0] sm:$0xff]
          %v3987 = vld [vmem:[#allocation3 + $0xb8] sm:$0xff]
          %v3988 = vld [vmem:[#allocation3 + $0xc0] sm:$0xff]
          %v3989 = vld [vmem:[#allocation3 + $0xc8] sm:$0xff]
          %v3990 = vld [vmem:[#allocation3 + $0xd0] sm:$0xff]
          %v3991 = vld [vmem:[#allocation3 + $0xd8] sm:$0xff]
          %v3992 = vld [vmem:[#allocation3 + $0xe0] sm:$0xff]
          %v3993 = vld [vmem:[#allocation3 + $0xe8] sm:$0xff]
          %v3994 = vld [vmem:[#allocation3 + $0xf0] sm:$0xff]
          %v3995 = vld [vmem:[#allocation3 + $0xf8] sm:$0xff]
          %vm3996 = vcmask 64512
          %3997 = vst.msk [vmem:[%s240] sm:$0xff] %vm3996, %v3964
          %3998 = vst.msk [vmem:[%s240 + $0x8] sm:$0xff] %vm3996, %v3965
          %3999 = vst.msk [vmem:[%s240 + $0x10] sm:$0xff] %vm3996, %v3966
          %4000 = vst.msk [vmem:[%s240 + $0x18] sm:$0xff] %vm3996, %v3967
          %4001 = vst.msk [vmem:[%s240 + $0x20] sm:$0xff] %vm3996, %v3968
          %4002 = vst.msk [vmem:[%s240 + $0x28] sm:$0xff] %vm3996, %v3969
          %4003 = vst.msk [vmem:[%s240 + $0x30] sm:$0xff] %vm3996, %v3970
          %4004 = vst.msk [vmem:[%s240 + $0x38] sm:$0xff] %vm3996, %v3971
          %4005 = vst.msk [vmem:[%s240 + $0x40] sm:$0xff] %vm3996, %v3972
          %4006 = vst.msk [vmem:[%s240 + $0x48] sm:$0xff] %vm3996, %v3973
          %4007 = vst.msk [vmem:[%s240 + $0x50] sm:$0xff] %vm3996, %v3974
          %4008 = vst.msk [vmem:[%s240 + $0x58] sm:$0xff] %vm3996, %v3975
          %4009 = vst.msk [vmem:[%s240 + $0x60] sm:$0xff] %vm3996, %v3976
          %4010 = vst.msk [vmem:[%s240 + $0x68] sm:$0xff] %vm3996, %v3977
          %4011 = vst.msk [vmem:[%s240 + $0x70] sm:$0xff] %vm3996, %v3978
          %4012 = vst.msk [vmem:[%s240 + $0x78] sm:$0xff] %vm3996, %v3979
          %4013 = vst.msk [vmem:[%s240 + $0x80] sm:$0xff] %vm3996, %v3980
          %4014 = vst.msk [vmem:[%s240 + $0x88] sm:$0xff] %vm3996, %v3981
          %4015 = vst.msk [vmem:[%s240 + $0x90] sm:$0xff] %vm3996, %v3982
          %4016 = vst.msk [vmem:[%s240 + $0x98] sm:$0xff] %vm3996, %v3983
          %4017 = vst.msk [vmem:[%s240 + $0xa0] sm:$0xff] %vm3996, %v3984
          %4018 = vst.msk [vmem:[%s240 + $0xa8] sm:$0xff] %vm3996, %v3985
          %4019 = vst.msk [vmem:[%s240 + $0xb0] sm:$0xff] %vm3996, %v3986
          %4020 = vst.msk [vmem:[%s240 + $0xb8] sm:$0xff] %vm3996, %v3987
          %4021 = vst.msk [vmem:[%s240 + $0xc0] sm:$0xff] %vm3996, %v3988
          %4022 = vst.msk [vmem:[%s240 + $0xc8] sm:$0xff] %vm3996, %v3989
          %4023 = vst.msk [vmem:[%s240 + $0xd0] sm:$0xff] %vm3996, %v3990
          %4024 = vst.msk [vmem:[%s240 + $0xd8] sm:$0xff] %vm3996, %v3991
          %4025 = vst.msk [vmem:[%s240 + $0xe0] sm:$0xff] %vm3996, %v3992
          %4026 = vst.msk [vmem:[%s240 + $0xe8] sm:$0xff] %vm3996, %v3993
          %4027 = vst.msk [vmem:[%s240 + $0xf0] sm:$0xff] %vm3996, %v3994
          %4028 = vst.msk [vmem:[%s240 + $0xf8] sm:$0xff] %vm3996, %v3995
          %v4029 = vld [vmem:[#allocation4] sm:$0x1]
          %v4030 = vsel %vm3996, %v3964, 0.0
          %v4031 = vsel %vm3996, %v3965, 0.0
          %v4032 = vadd.f32 %v4030, %v4031
          %v4033 = vsel %vm3996, %v3966, 0.0
          %v4034 = vadd.f32 %v4032, %v4033
          %v4035 = vsel %vm3996, %v3967, 0.0
          %v4036 = vadd.f32 %v4034, %v4035
          %v4037 = vsel %vm3996, %v3968, 0.0
          %v4038 = vadd.f32 %v4036, %v4037
          %v4039 = vsel %vm3996, %v3969, 0.0
          %v4040 = vadd.f32 %v4038, %v4039
          %v4041 = vsel %vm3996, %v3970, 0.0
          %v4042 = vadd.f32 %v4040, %v4041
          %v4043 = vsel %vm3996, %v3971, 0.0
          %v4044 = vadd.f32 %v4042, %v4043
          %v4045 = vsel %vm3996, %v3972, 0.0
          %v4046 = vadd.f32 %v4044, %v4045
          %v4047 = vsel %vm3996, %v3973, 0.0
          %v4048 = vadd.f32 %v4046, %v4047
          %v4049 = vsel %vm3996, %v3974, 0.0
          %v4050 = vadd.f32 %v4048, %v4049
          %v4051 = vsel %vm3996, %v3975, 0.0
          %v4052 = vadd.f32 %v4050, %v4051
          %v4053 = vsel %vm3996, %v3976, 0.0
          %v4054 = vadd.f32 %v4052, %v4053
          %v4055 = vsel %vm3996, %v3977, 0.0
          %v4056 = vadd.f32 %v4054, %v4055
          %v4057 = vsel %vm3996, %v3978, 0.0
          %v4058 = vadd.f32 %v4056, %v4057
          %v4059 = vsel %vm3996, %v3979, 0.0
          %v4060 = vadd.f32 %v4058, %v4059
          %v4061 = vsel %vm3996, %v3980, 0.0
          %v4062 = vadd.f32 %v4060, %v4061
          %v4063 = vsel %vm3996, %v3981, 0.0
          %v4064 = vadd.f32 %v4062, %v4063
          %v4065 = vsel %vm3996, %v3982, 0.0
          %v4066 = vadd.f32 %v4064, %v4065
          %v4067 = vsel %vm3996, %v3983, 0.0
          %v4068 = vadd.f32 %v4066, %v4067
          %v4069 = vsel %vm3996, %v3984, 0.0
          %v4070 = vadd.f32 %v4068, %v4069
          %v4071 = vsel %vm3996, %v3985, 0.0
          %v4072 = vadd.f32 %v4070, %v4071
          %v4073 = vsel %vm3996, %v3986, 0.0
          %v4074 = vadd.f32 %v4072, %v4073
          %v4075 = vsel %vm3996, %v3987, 0.0
          %v4076 = vadd.f32 %v4074, %v4075
          %v4077 = vsel %vm3996, %v3988, 0.0
          %v4078 = vadd.f32 %v4076, %v4077
          %v4079 = vsel %vm3996, %v3989, 0.0
          %v4080 = vadd.f32 %v4078, %v4079
          %v4081 = vsel %vm3996, %v3990, 0.0
          %v4082 = vadd.f32 %v4080, %v4081
          %v4083 = vsel %vm3996, %v3991, 0.0
          %v4084 = vadd.f32 %v4082, %v4083
          %v4085 = vsel %vm3996, %v3992, 0.0
          %v4086 = vadd.f32 %v4084, %v4085
          %v4087 = vsel %vm3996, %v3993, 0.0
          %v4088 = vadd.f32 %v4086, %v4087
          %v4089 = vsel %vm3996, %v3994, 0.0
          %v4090 = vadd.f32 %v4088, %v4089
          %v4091 = vsel %vm3996, %v3995, 0.0
          %v4092 = vadd.f32 %v4090, %v4091
          %v4093 = vrot.slane %v4092, 4
          %v4094 = vadd.f32 %v4092, %v4093
          %v4095 = vrot.slane %v4094, 2
          %v4096 = vadd.f32 %v4094, %v4095
          %v4097 = vrot.slane %v4096, 1
          %v4098 = vadd.f32 %v4096, %v4097
          %v4099 = vadd.f32 %v4029, %v4098
          %vm4100 = vcmask 57344
          %4101 = vst.msk [vmem:[#allocation4] sm:$0x1] %vm4100, %v4099
          %v4102 = vld [vmem:[#allocation4 + $0x1] sm:$0x1]
          %v4103 = vmul.f32 %v3964, %v3964
          %v4104 = vmul.f32 %v3965, %v3965
          %v4105 = vmul.f32 %v3966, %v3966
          %v4106 = vmul.f32 %v3967, %v3967
          %v4107 = vmul.f32 %v3968, %v3968
          %v4108 = vmul.f32 %v3969, %v3969
          %v4109 = vmul.f32 %v3970, %v3970
          %v4110 = vmul.f32 %v3971, %v3971
          %v4111 = vmul.f32 %v3972, %v3972
          %v4112 = vmul.f32 %v3973, %v3973
          %v4113 = vmul.f32 %v3974, %v3974
          %v4114 = vmul.f32 %v3975, %v3975
          %v4115 = vmul.f32 %v3976, %v3976
          %v4116 = vmul.f32 %v3977, %v3977
          %v4117 = vmul.f32 %v3978, %v3978
          %v4118 = vmul.f32 %v3979, %v3979
          %v4119 = vmul.f32 %v3980, %v3980
          %v4120 = vmul.f32 %v3981, %v3981
          %v4121 = vmul.f32 %v3982, %v3982
          %v4122 = vmul.f32 %v3983, %v3983
          %v4123 = vmul.f32 %v3984, %v3984
          %v4124 = vmul.f32 %v3985, %v3985
          %v4125 = vmul.f32 %v3986, %v3986
          %v4126 = vmul.f32 %v3987, %v3987
          %v4127 = vmul.f32 %v3988, %v3988
          %v4128 = vmul.f32 %v3989, %v3989
          %v4129 = vmul.f32 %v3990, %v3990
          %v4130 = vmul.f32 %v3991, %v3991
          %v4131 = vmul.f32 %v3992, %v3992
          %v4132 = vmul.f32 %v3993, %v3993
          %v4133 = vmul.f32 %v3994, %v3994
          %v4134 = vmul.f32 %v3995, %v3995
          %v4135 = vsel %vm3996, %v4103, 0.0
          %v4136 = vsel %vm3996, %v4104, 0.0
          %v4137 = vadd.f32 %v4135, %v4136
          %v4138 = vsel %vm3996, %v4105, 0.0
          %v4139 = vadd.f32 %v4137, %v4138
          %v4140 = vsel %vm3996, %v4106, 0.0
          %v4141 = vadd.f32 %v4139, %v4140
          %v4142 = vsel %vm3996, %v4107, 0.0
          %v4143 = vadd.f32 %v4141, %v4142
          %v4144 = vsel %vm3996, %v4108, 0.0
          %v4145 = vadd.f32 %v4143, %v4144
          %v4146 = vsel %vm3996, %v4109, 0.0
          %v4147 = vadd.f32 %v4145, %v4146
          %v4148 = vsel %vm3996, %v4110, 0.0
          %v4149 = vadd.f32 %v4147, %v4148
          %v4150 = vsel %vm3996, %v4111, 0.0
          %v4151 = vadd.f32 %v4149, %v4150
          %v4152 = vsel %vm3996, %v4112, 0.0
          %v4153 = vadd.f32 %v4151, %v4152
          %v4154 = vsel %vm3996, %v4113, 0.0
          %v4155 = vadd.f32 %v4153, %v4154
          %v4156 = vsel %vm3996, %v4114, 0.0
          %v4157 = vadd.f32 %v4155, %v4156
          %v4158 = vsel %vm3996, %v4115, 0.0
          %v4159 = vadd.f32 %v4157, %v4158
          %v4160 = vsel %vm3996, %v4116, 0.0
          %v4161 = vadd.f32 %v4159, %v4160
          %v4162 = vsel %vm3996, %v4117, 0.0
          %v4163 = vadd.f32 %v4161, %v4162
          %v4164 = vsel %vm3996, %v4118, 0.0
          %v4165 = vadd.f32 %v4163, %v4164
          %v4166 = vsel %vm3996, %v4119, 0.0
          %v4167 = vadd.f32 %v4165, %v4166
          %v4168 = vsel %vm3996, %v4120, 0.0
          %v4169 = vadd.f32 %v4167, %v4168
          %v4170 = vsel %vm3996, %v4121, 0.0
          %v4171 = vadd.f32 %v4169, %v4170
          %v4172 = vsel %vm3996, %v4122, 0.0
          %v4173 = vadd.f32 %v4171, %v4172
          %v4174 = vsel %vm3996, %v4123, 0.0
          %v4175 = vadd.f32 %v4173, %v4174
          %v4176 = vsel %vm3996, %v4124, 0.0
          %v4177 = vadd.f32 %v4175, %v4176
          %v4178 = vsel %vm3996, %v4125, 0.0
          %v4179 = vadd.f32 %v4177, %v4178
          %v4180 = vsel %vm3996, %v4126, 0.0
          %v4181 = vadd.f32 %v4179, %v4180
          %v4182 = vsel %vm3996, %v4127, 0.0
          %v4183 = vadd.f32 %v4181, %v4182
          %v4184 = vsel %vm3996, %v4128, 0.0
          %v4185 = vadd.f32 %v4183, %v4184
          %v4186 = vsel %vm3996, %v4129, 0.0
          %v4187 = vadd.f32 %v4185, %v4186
          %v4188 = vsel %vm3996, %v4130, 0.0
          %v4189 = vadd.f32 %v4187, %v4188
          %v4190 = vsel %vm3996, %v4131, 0.0
          %v4191 = vadd.f32 %v4189, %v4190
          %v4192 = vsel %vm3996, %v4132, 0.0
          %v4193 = vadd.f32 %v4191, %v4192
          %v4194 = vsel %vm3996, %v4133, 0.0
          %v4195 = vadd.f32 %v4193, %v4194
          %v4196 = vsel %vm3996, %v4134, 0.0
          %v4197 = vadd.f32 %v4195, %v4196
          %v4198 = vrot.slane %v4197, 4
          %v4199 = vadd.f32 %v4197, %v4198
          %v4200 = vrot.slane %v4199, 2
          %v4201 = vadd.f32 %v4199, %v4200
          %v4202 = vrot.slane %v4201, 1
          %v4203 = vadd.f32 %v4201, %v4202
          %v4204 = vadd.f32 %v4102, %v4203
          %4205 = vst.msk [vmem:[#allocation4 + $0x1] sm:$0x1] %vm4100, %v4204
        $region44: #{tpu_custom_call.1} parent=27 // pred_fallthru
          _
        %p4206 = scmp.lt.s32.totalorder %s22, 1
        %s4207 = scalar_select %p4206, %s22, 1
        %p4208 = scmp.lt.s32.totalorder %s21, 0
        %s4209 = scalar_select %p4208, %s21, 0
        %s4210 = smul.addr %s4207, 32
        %s4211 = sadd.s32 %s4209, %s4210
        %s4212 = smul.addr %s4211, 8
        %s4213 = scalar_lea.vmem %s2, %s4212
        // Predicated region
        $region45: #{tpu_custom_call.1} parent=27 // pred_check
          %p4214 = pneg %p111
        $region46: #{tpu_custom_call.1} parent=27 // pred_check_branch
          %4216 = sbr.rel (%p4214) target = $region48
        $region47: #{tpu_custom_call.1} parent=27 // pred_region
          _
        $region48: #{tpu_custom_call.1} parent=27 // pred_fallthru
          _
        // Predicated region
        $region49: #{tpu_custom_call.1} parent=27 // pred_check
          %p4217 = pneg %p137
        $region50: #{tpu_custom_call.1} parent=27 // pred_check_branch
          %4219 = sbr.rel (%p4217) target = $region52
        $region51: #{tpu_custom_call.1} parent=27 // pred_region
          %s4221 = ssub.s32 32, 32
          %4222 = vsyncadd [#allocation5], %s4221
          %s4223 = smul.addr %s21, 32
          %s4224 = scalar_lea.hbm %s3, %s4223
          %s4226 = sshll.u32 [#allocation4], 4
          %s4227 = int_to_ptr.vmem [resolvable:$true] %s4226
          %4229 = dma.vmem_to_hbm [thread:$0]  %s4227, 32, %s4224, [#allocation5]
        $region52: #{tpu_custom_call.1} parent=27 // pred_fallthru
          _
        // Predicated region
        $region53: #{tpu_custom_call.1} parent=27 // pred_check
          %p4230 = pneg %p137
        $region54: #{tpu_custom_call.1} parent=27 // pred_check_branch
          %4232 = sbr.rel (%p4230) target = $region56
        $region55: #{tpu_custom_call.1} parent=27 // pred_region
          %4233 = dma.done [#allocation5], 32
        $region56: #{tpu_custom_call.1} parent=27 // pred_fallthru
          _
      $region28: #{tpu_custom_call.1} parent=5 // pred_fallthru
        _
      %p4234 = scmp.le.s32.totalorder 2, %s11
      // Predicated region
      $region57: #{tpu_custom_call.1} parent=5 // pred_check
        %p4235 = pneg %p4234
      $region58: #{tpu_custom_call.1} parent=5 // pred_check_branch
        %4237 = sbr.rel (%p4235) target = $region60
      $region59: #{tpu_custom_call.1} parent=5 // pred_region
        %s4238 = ssub.s32 %s11, 2
        // Predicated region
        $region61: #{tpu_custom_call.1} parent=59 // pred_check
          %p4239 = pneg %p117
        $region62: #{tpu_custom_call.1} parent=59 // pred_check_branch
          %4241 = sbr.rel (%p4239) target = $region64
        $region63: #{tpu_custom_call.1} parent=59 // pred_region
          %p4242 = scmp.lt.s32.totalorder %s25, 1
          %s4243 = scalar_select %p4242, %s25, 1
          %p4244 = scmp.lt.s32.totalorder %s24, 0
          %s4245 = scalar_select %p4244, %s24, 0
          %s4246 = smul.addr %s4243, 32
          %s4247 = sadd.s32 %s4245, %s4246
          %s4248 = smul.addr %s4247, 8
          %s4249 = scalar_lea.vmem %s2, %s4248
        $region64: #{tpu_custom_call.1} parent=59 // pred_fallthru
          _
      $region60: #{tpu_custom_call.1} parent=5 // pred_fallthru
        _
    $region6: #{tpu_custom_call.1} parent=1 // loop_footer
      %s15 = sadd.s32 1, %s11
    $region7: #{tpu_custom_call.1} parent=1 // loop_footer_branch
      %10 = sbr.rel target = $region3
    $region8: #{tpu_custom_call.1} parent=1 // loop_exit
      _
    %4250 = vsyncpa [#allocation5], 1
    %s4251 = scalar_lea.sflag [#allocation5], 1
    %4252 = vsyncpa %s4251, 1

</llo_original>
